<compile_context>
chip_gen: v7x
topology: tpu7x:2x2x1
jax: 0.10.0
libtpu: 0.0.40
codegen_flags: <defaults>
</compile_context>

<pallas_src>
import functools

import jax
import jax.numpy as jnp
from jax.experimental import pallas as pl
from jax.experimental.pallas import tpu as pltpu


# ------------------------------ tiling helper ------------------------------

def _pick_tile(dim, target, align):
    """Largest `align`-multiple divisor of `dim` that is <= target.  Falls back
    to the full dim (a full-extent block is always a legal block shape)."""
    if dim <= target:
        return dim
    t = (target // align) * align
    while t >= align:
        if dim % t == 0:
            return t
        t -= align
    return dim


# ----------------------- tiled linear (K-blocked, bf16) ---------------------

def _linear_kernel(*refs, activation, has_residual):
    if has_residual:
        x_ref, w_ref, b_ref, r_ref, o_ref, acc_ref = refs
    else:
        x_ref, w_ref, b_ref, o_ref, acc_ref = refs
        r_ref = None

    @pl.when(pl.program_id(2) == 0)
    def _():
        acc_ref[...] = jnp.zeros_like(acc_ref)

    acc_ref[...] += jnp.dot(
        x_ref[...].astype(jnp.bfloat16),
        w_ref[...].astype(jnp.bfloat16),
        preferred_element_type=jnp.float32,
    )

    @pl.when(pl.program_id(2) == pl.num_programs(2) - 1)
    def _():
        y = acc_ref[...] + b_ref[...]
        if activation == "relu":
            y = jnp.maximum(y, 0.0)
        elif activation == "gelu":
            # TODO(synk): timm's nn.GELU is the exact erf form; tanh approx used here.
            y = jax.nn.gelu(y, approximate=True)
        if r_ref is not None:
            y = y + r_ref[...]          # fused residual add (PyTorch: x + sublayer(x))
        o_ref[...] = y.astype(o_ref.dtype)


def linear(x, w, b, activation=None, residual=None, tm=256, tn=256, tk=512):
    """y = act(x @ w + b) [+ residual].  x:(M,K), w:(K,N) (bf16 storage ok)."""
    M, K = x.shape
    N = w.shape[1]
    tm = _pick_tile(M, tm, 8)
    tn = _pick_tile(N, tn, 128)
    tk = _pick_tile(K, tk, 128)
    grid = (M // tm, N // tn, K // tk)

    in_specs = [
        pl.BlockSpec((tm, tk), lambda i, j, k: (i, k)),
        pl.BlockSpec((tk, tn), lambda i, j, k: (k, j)),
        pl.BlockSpec((1, tn), lambda i, j, k: (0, j)),
    ]
    args = [x, w, b.reshape(1, N)]
    if residual is not None:
        in_specs.append(pl.BlockSpec((tm, tn), lambda i, j, k: (i, j)))
        args.append(residual)

    return pl.pallas_call(
        functools.partial(_linear_kernel, activation=activation,
                          has_residual=residual is not None),
        out_shape=jax.ShapeDtypeStruct((M, N), jnp.float32),
        grid=grid,
        in_specs=in_specs,
        out_specs=pl.BlockSpec((tm, tn), lambda i, j, k: (i, j)),
        scratch_shapes=[pltpu.VMEM((tm, tn), jnp.float32)],
        compiler_params=pltpu.CompilerParams(
            dimension_semantics=("parallel", "parallel", "arbitrary")),
    )(*args)


# --------------------- fused LayerNorm + linear (full K) --------------------

def _ln_linear_kernel(x_ref, g_ref, bln_ref, w_ref, b_ref, o_ref, *, activation, eps):
    x = x_ref[...]                                      # (tm, K) f32
    mu = jnp.mean(x, axis=-1, keepdims=True)
    xc = x - mu
    var = jnp.mean(xc * xc, axis=-1, keepdims=True)
    xn = xc * jax.lax.rsqrt(var + eps) * g_ref[...] + bln_ref[...]
    y = jnp.dot(xn.astype(jnp.bfloat16), w_ref[...].astype(jnp.bfloat16),
                preferred_element_type=jnp.float32) + b_ref[...]
    if activation == "relu":
        y = jnp.maximum(y, 0.0)
    elif activation == "gelu":
        y = jax.nn.gelu(y, approximate=True)
    o_ref[...] = y.astype(o_ref.dtype)


def ln_linear(x, g, bln, w, b, activation=None, eps=1e-6, out_dtype=jnp.float32,
              tm=256, tn=256):
    """act(LayerNorm(x) @ w + b), LN over the full feature dim K (not K-tiled)."""
    M, K = x.shape
    N = w.shape[1]
    tm = _pick_tile(M, tm, 8)
    tn = _pick_tile(N, tn, 128)
    return pl.pallas_call(
        functools.partial(_ln_linear_kernel, activation=activation, eps=eps),
        out_shape=jax.ShapeDtypeStruct((M, N), out_dtype),
        grid=(M // tm, N // tn),
        in_specs=[
            pl.BlockSpec((tm, K), lambda i, j: (i, 0)),
            pl.BlockSpec((1, K), lambda i, j: (0, 0)),
            pl.BlockSpec((1, K), lambda i, j: (0, 0)),
            pl.BlockSpec((K, tn), lambda i, j: (0, j)),
            pl.BlockSpec((1, tn), lambda i, j: (0, j)),
        ],
        out_specs=pl.BlockSpec((tm, tn), lambda i, j: (i, j)),
        compiler_params=pltpu.CompilerParams(
            dimension_semantics=("parallel", "parallel")),
    )(x, g.reshape(1, K), bln.reshape(1, K), w, b.reshape(1, N))


# ----------------------------- attention kernel -----------------------------

def _attention_kernel(q_ref, k_ref, v_ref, o_ref, *, scale, heads):
    # refs are (S, H, hd); all heads of one batch element per grid step.
    for h in range(heads):                               # static unroll over heads
        q = q_ref[:, h, :].astype(jnp.bfloat16)          # (S, hd)
        k = k_ref[:, h, :].astype(jnp.bfloat16)
        v = v_ref[:, h, :].astype(jnp.bfloat16)
        # contract hd of both operands -> q @ k^T without materializing a transpose
        s = jax.lax.dot_general(q, k, (((1,), (1,)), ((), ())),
                                preferred_element_type=jnp.float32) * scale
        m = jnp.max(s, axis=-1, keepdims=True)
        p = jnp.exp(s - m)
        p = p * pl.reciprocal(jnp.sum(p, axis=-1, keepdims=True), approx=True)
        o = jnp.dot(p.astype(jnp.bfloat16), v, preferred_element_type=jnp.float32)
        o_ref[:, h, :] = o.astype(o_ref.dtype)


def attention(qkv, heads, scale):
    """qkv:(B, S, 3, H, hd) -> (B, S, H, hd) (same dtype as qkv, i.e. bf16).
    q/k/v are sliced out of the fused qkv tensor by the BlockSpec index maps,
    so no (3,B,H,S,hd) HBM transpose ever materializes."""
    B, S, _, H, hd = qkv.shape

    def make_spec(which):
        return pl.BlockSpec((None, S, None, H, hd),
                            lambda b, w=which: (b, 0, w, 0, 0))

    return pl.pallas_call(
        functools.partial(_attention_kernel, scale=scale, heads=heads),
        out_shape=jax.ShapeDtypeStruct((B, S, H, hd), qkv.dtype),
        grid=(B,),
        in_specs=[make_spec(0), make_spec(1), make_spec(2)],
        out_specs=pl.BlockSpec((None, S, H, hd), lambda b: (b, 0, 0, 0)),
        compiler_params=pltpu.CompilerParams(dimension_semantics=("parallel",)),
    )(qkv, qkv, qkv)


# ---- fused positioning head: final LN + fc1 + ReLU + seq-mean + fc2 + MSE ----

def _pos_head_kernel(x_ref, g_ref, bln_ref, w1_ref, b1_ref, w2_ref, b2_ref, y_ref,
                     pred_ref, mse_ref, *, eps, inv_s, inv_n):
    b = pl.program_id(0)

    @pl.when(b == 0)
    def _():
        pred_ref[...] = jnp.zeros_like(pred_ref)

    x = x_ref[...]                                       # (S, D) f32, one batch elem
    mu = jnp.mean(x, axis=-1, keepdims=True)
    xc = x - mu
    var = jnp.mean(xc * xc, axis=-1, keepdims=True)
    xn = xc * jax.lax.rsqrt(var + eps) * g_ref[...] + bln_ref[...]
    p1 = jnp.dot(xn.astype(jnp.bfloat16), w1_ref[...].astype(jnp.bfloat16),
                 preferred_element_type=jnp.float32) + b1_ref[...]
    p1 = jnp.maximum(p1, 0.0)                            # ReLU
    # mean_S(p1 @ w2 + b2) == mean_S(p1) @ w2 + b2  -> tiny (1, D) @ (D, 2)
    pm = jnp.sum(p1, axis=0, keepdims=True) * inv_s      # (1, D)
    pred = jnp.dot(pm, w2_ref[...], preferred_element_type=jnp.float32) + b2_ref[...]

    # scatter row b of pred into the resident (B, 2) output block (vector-only)
    onrow = jax.lax.broadcasted_iota(jnp.int32, pred_ref.shape, 0) == b
    pred_ref[...] = jnp.where(onrow, jnp.broadcast_to(pred, pred_ref.shape),
                              pred_ref[...])

    @pl.when(b == pl.num_programs(0) - 1)
    def _():
        d = pred_ref[...] - y_ref[...]
        mse_ref[...] = jnp.sum(d * d, keepdims=True) * inv_n


def pos_head(h, g, bln, w1, b1, w2, b2, y, eps=1e-6):
    """h:(B,S,D) residual stream.  Returns (pred:(B,2), mse:(1,1))."""
    B, S, D = h.shape
    kern = functools.partial(_pos_head_kernel, eps=eps,
                             inv_s=1.0 / S, inv_n=1.0 / (B * 2))
    return pl.pallas_call(
        kern,
        out_shape=(jax.ShapeDtypeStruct((B, 2), jnp.float32),
                   jax.ShapeDtypeStruct((1, 1), jnp.float32)),
        grid=(B,),
        in_specs=[
            pl.BlockSpec((None, S, D), lambda b: (b, 0, 0)),
            pl.BlockSpec((1, D), lambda b: (0, 0)),
            pl.BlockSpec((1, D), lambda b: (0, 0)),
            pl.BlockSpec((D, D), lambda b: (0, 0)),
            pl.BlockSpec((1, D), lambda b: (0, 0)),
            pl.BlockSpec((D, 2), lambda b: (0, 0)),
            pl.BlockSpec((1, 2), lambda b: (0, 0)),
            pl.BlockSpec((B, 2), lambda b: (0, 0)),
        ],
        out_specs=(pl.BlockSpec((B, 2), lambda b: (0, 0)),
                   pl.BlockSpec((1, 1), lambda b: (0, 0))),
        compiler_params=pltpu.CompilerParams(dimension_semantics=("arbitrary",)),
    )(h, g.reshape(1, D), bln.reshape(1, D), w1, b1.reshape(1, D),
      w2, b2.reshape(1, 2), y)


# ------------------------------ model glue ------------------------------

def vit_block(h, p, heads):
    """Pre-norm ViT block: x + proj(attn(ln1(x))); x + fc2(gelu(fc1(ln2(x))))."""
    B, S, D = h.shape
    hd = D // heads
    h2d = h.reshape(B * S, D)

    # attention path: ln1 fused into the qkv projection; qkv stored bf16
    qkv = ln_linear(h2d, p["ln1_g"], p["ln1_b"], p["qkv_w"], p["qkv_b"],
                    out_dtype=jnp.bfloat16)              # (B*S, 3D)
    qkv = qkv.reshape(B, S, 3, heads, hd)
    ao = attention(qkv, heads, scale=hd ** -0.5)         # (B, S, H, hd) bf16
    h2d = linear(ao.reshape(B * S, D), p["proj_w"], p["proj_b"], residual=h2d)

    # MLP path: ln2 fused into fc1(+GELU, bf16 out); fc2 carries the residual add
    m = ln_linear(h2d, p["ln2_g"], p["ln2_b"], p["fc1_w"], p["fc1_b"],
                  activation="gelu", out_dtype=jnp.bfloat16)
    h2d = linear(m, p["fc2_w"], p["fc2_b"], residual=h2d)
    return h2d.reshape(B, S, D)


def encode(params, x, cfg):
    """x already transposed to (B, fmap, input_fdim, input_tdim)."""
    B, C, F, T = x.shape
    fshape, tshape = cfg["fshape"], cfg["tshape"]
    pf, pt = F // fshape, T // tshape
    N = pf * pt
    P = C * fshape * tshape

    # stride==kernel Conv2d == non-overlapping patch extraction + matmul
    patches = x.reshape(B, C, pf, fshape, pt, tshape)
    patches = jnp.transpose(patches, (0, 2, 4, 1, 3, 5)).reshape(B * N, P)
    emb = linear(patches, params["patch_w"], params["patch_b"])
    D = emb.shape[-1]
    emb = emb.reshape(B, N, D)

    cls = jnp.broadcast_to(params["cls_token"], (B, 1, D))
    h = jnp.concatenate([cls, emb], axis=1) + params["pos_embed"]  # pos_drop == identity (eval)

    for blk in params["blocks"]:
        h = vit_block(h, blk, cfg["heads"])
    return h  # final LayerNorm is fused into the positioning head kernel


def single_bs_loc(params, x, y_position, cfg):
    h = encode(params, x, cfg)
    predm, mse = pos_head(h, params["norm_g"], params["norm_b"],
                          params["pos2_w1"], params["pos2_b1"],
                          params["pos2_w2"], params["pos2_b2"], y_position)
    return predm, mse[0, 0]


def ast_forward(params, x, y_position, task, cfg):
    # matches ASTModel.forward: x.transpose(2, 3) then dispatch on task
    x = jnp.swapaxes(x, 2, 3)
    if task in ("woFT_SingleBSLoc", "FT_SingleBSLoc"):
        _, mse = single_bs_loc(params, x, y_position, cfg)
        return mse
    elif task == "inference_SingleBSLoc":
        return single_bs_loc(params, x, y_position, cfg)
    # TODO(synk): 'pretrain_mpg' / 'pretrain_antenna' rely on host-side python RNG
    # (random.sample / randrange) for mask-index generation; not reproduced here.
    return jnp.float32(0.0)


# ---------------------------- parameter init ----------------------------

def init_params(key, *, fmap, fshape, tshape, num_patches, D, heads, depth, mlp_hidden):
    P = fmap * fshape * tshape
    n_keys = 4 + 4 * depth
    keys = iter(jax.random.split(key, n_keys))

    def dense(k, i, o, std=0.02, dtype=jnp.bfloat16):
        # weights stored bf16 (MXU-native dtype; halves HBM traffic); biases stay f32
        return (jax.random.normal(k, (i, o), jnp.float32) * std).astype(dtype)

    params = {
        # Conv2d(in=fmap, out=D, kernel=(fshape,tshape), stride=(fshape,tshape))
        # stored flattened as (fmap*fshape*tshape, D), column ordering (c, kf, kt).
        "patch_w": dense(next(keys), P, D),
        "patch_b": jnp.zeros((D,), jnp.float32),
        "cls_token": jnp.full((1, 1, D), 0.1, jnp.float32),   # ones * 0.1, frozen
        # pos_embed: sinusoid table is overwritten by trunc_normal_(std=0.02) in the
        # original __init__; deterministic normal(std=0.02) init used here.
        "pos_embed": jax.random.normal(next(keys), (1, num_patches + 1, D), jnp.float32) * 0.02,
        "norm_g": jnp.ones((D,), jnp.float32),
        "norm_b": jnp.zeros((D,), jnp.float32),
        "pos2_w1": dense(next(keys), D, D),
        "pos2_b1": jnp.zeros((D,), jnp.float32),
        "pos2_w2": dense(next(keys), D, 2, dtype=jnp.float32),   # tiny head stays f32
        "pos2_b2": jnp.zeros((2,), jnp.float32),
        "blocks": [],
    }
    for _ in range(depth):
        params["blocks"].append({
            "ln1_g": jnp.ones((D,), jnp.float32), "ln1_b": jnp.zeros((D,), jnp.float32),
            "qkv_w": dense(next(keys), D, 3 * D), "qkv_b": jnp.zeros((3 * D,), jnp.float32),
            "proj_w": dense(next(keys), D, D), "proj_b": jnp.zeros((D,), jnp.float32),
            "ln2_g": jnp.ones((D,), jnp.float32), "ln2_b": jnp.zeros((D,), jnp.float32),
            "fc1_w": dense(next(keys), D, mlp_hidden), "fc1_b": jnp.zeros((mlp_hidden,), jnp.float32),
            "fc2_w": dense(next(keys), mlp_hidden, D), "fc2_b": jnp.zeros((D,), jnp.float32),
        })
    return params


# --------------------------------- main ---------------------------------

if __name__ == "__main__":
    # Small config consistent with the module (fstride==fshape, tstride==tshape,
    # patches tile the (input_fdim, input_tdim) plane exactly).
    B = 2
    fmap, input_fdim, input_tdim = 1, 16, 14
    fshape, tshape = 16, 2
    D, heads, depth = 64, 4, 2
    mlp_hidden = 4 * D
    p_f_dim, p_t_dim = input_fdim // fshape, input_tdim // tshape
    num_patches = p_f_dim * p_t_dim            # 7 -> sequence length 8 with cls token

    params = init_params(
        jax.random.PRNGKey(42),
        fmap=fmap, fshape=fshape, tshape=tshape, num_patches=num_patches,
        D=D, heads=heads, depth=depth, mlp_hidden=mlp_hidden,
    )
    cfg = dict(heads=heads, fshape=fshape, tshape=tshape)

    key = jax.random.PRNGKey(0)
    kx, ky = jax.random.split(key)
    # x follows the PyTorch forward() convention: (B, fmap, input_tdim, input_fdim)
    x = jax.random.normal(kx, (B, fmap, input_tdim, input_fdim), jnp.float32)
    y_position = jax.random.normal(ky, (B, 2), jnp.float32)

    ft_fwd = jax.jit(functools.partial(ast_forward, task="FT_SingleBSLoc", cfg=cfg))
    mse = ft_fwd(params, x, y_position)
    jax.block_until_ready(mse)

    inf_fwd = jax.jit(functools.partial(ast_forward, task="inference_SingleBSLoc", cfg=cfg))
    pred, mse2 = inf_fwd(params, x, y_position)
    jax.block_until_ready((pred, mse2))

    print("KERNEL_OK")
</pallas_src>

<mosaic_0001>
module attributes {stable_mosaic.version = 11 : i64} {
  func.func @_linear_kernel(%arg0: i32, %arg1: i32, %arg2: i32, %arg3: memref<14x32xf32, #tpu.memory_space<vmem>>, %arg4: memref<32x64xbf16, #tpu.memory_space<vmem>>, %arg5: memref<1x64xf32, #tpu.memory_space<vmem>>, %arg6: memref<14x64xf32, #tpu.memory_space<vmem>>, %arg7: memref<14x64xf32, #tpu.memory_space<vmem>>) attributes {dimension_semantics = [#tpu.dimension_semantics<parallel>, #tpu.dimension_semantics<parallel>, #tpu.dimension_semantics<arbitrary>], iteration_bounds = array<i64: 1, 1, 1>, scalar_prefetch = 0 : i64, scratch_operands = 1 : i64, tpu.core_type = #tpu.core_type<tc>, window_params = [{transform_indices = @transform_0, window_bounds = array<i64: 14, 32>}, {transform_indices = @transform_1, window_bounds = array<i64: 32, 64>}, {transform_indices = @transform_2, window_bounds = array<i64: 1, 64>}, {transform_indices = @transform_3, window_bounds = array<i64: 14, 64>}]} {
    %c0_i32 = arith.constant 0 : i32
    %0 = arith.cmpi eq, %arg2, %c0_i32 : i32
    %1 = arith.extui %0 : i1 to i32
    %c0_i32_0 = arith.constant 0 : i32
    %2 = arith.cmpi ne, %1, %c0_i32_0 : i32
    scf.if %2 {
      %cst_10 = arith.constant 0.000000e+00 : f32
      %13 = vector.broadcast %cst_10 : f32 to vector<14x64xf32>
      %c0_11 = arith.constant 0 : index
      %c0_12 = arith.constant 0 : index
      %14 = vector.load %arg7[%c0_11, %c0_12] : memref<14x64xf32, #tpu.memory_space<vmem>>, vector<14x64xf32>
      tpu.vector_store %arg7[%c0_11, %c0_12], %13 {strides = array<i32>} : memref<14x64xf32, #tpu.memory_space<vmem>>, vector<14x64xf32>,
    } else {
    }
    %c0 = arith.constant 0 : index
    %c0_1 = arith.constant 0 : index
    %3 = vector.load %arg7[%c0, %c0_1] : memref<14x64xf32, #tpu.memory_space<vmem>>, vector<14x64xf32>
    %c0_2 = arith.constant 0 : index
    %c0_3 = arith.constant 0 : index
    %4 = vector.load %arg3[%c0_2, %c0_3] : memref<14x32xf32, #tpu.memory_space<vmem>>, vector<14x32xf32>
    %5 = arith.truncf %4 : vector<14x32xf32> to vector<14x32xbf16>
    %c0_4 = arith.constant 0 : index
    %c0_5 = arith.constant 0 : index
    %6 = vector.load %arg4[%c0_4, %c0_5] : memref<32x64xbf16, #tpu.memory_space<vmem>>, vector<32x64xbf16>
    %cst = arith.constant dense<0.000000e+00> : vector<14x64xf32>
    %7 = tpu.matmul %5, %6, %cst {dimension_numbers = #tpu.dot_dimension_numbers<[1], [0], [0], [1], [0, 0, 1, 1], [], []>} : vector<14x32xbf16>, vector<32x64xbf16>, vector<14x64xf32> -> vector<14x64xf32>
    %8 = arith.addf %3, %7 : vector<14x64xf32>
    %c0_6 = arith.constant 0 : index
    %c0_7 = arith.constant 0 : index
    %9 = vector.load %arg7[%c0_6, %c0_7] : memref<14x64xf32, #tpu.memory_space<vmem>>, vector<14x64xf32>
    tpu.vector_store %arg7[%c0_6, %c0_7], %8 {strides = array<i32>} : memref<14x64xf32, #tpu.memory_space<vmem>>, vector<14x64xf32>,
    %c0_i32_8 = arith.constant 0 : i32
    %10 = arith.cmpi eq, %arg2, %c0_i32_8 : i32
    %11 = arith.extui %10 : i1 to i32
    %c0_i32_9 = arith.constant 0 : i32
    %12 = arith.cmpi ne, %11, %c0_i32_9 : i32
    scf.if %12 {
      %c0_10 = arith.constant 0 : index
      %c0_11 = arith.constant 0 : index
      %13 = vector.load %arg7[%c0_10, %c0_11] : memref<14x64xf32, #tpu.memory_space<vmem>>, vector<14x64xf32>
      %c0_12 = arith.constant 0 : index
      %c0_13 = arith.constant 0 : index
      %14 = vector.load %arg5[%c0_12, %c0_13] : memref<1x64xf32, #tpu.memory_space<vmem>>, vector<1x64xf32>
      %15 = vector.broadcast %14 : vector<1x64xf32> to vector<14x64xf32>
      %16 = arith.addf %13, %15 : vector<14x64xf32>
      %c0_14 = arith.constant 0 : index
      %c0_15 = arith.constant 0 : index
      %17 = vector.load %arg6[%c0_14, %c0_15] : memref<14x64xf32, #tpu.memory_space<vmem>>, vector<14x64xf32>
      tpu.vector_store %arg6[%c0_14, %c0_15], %16 {strides = array<i32>} : memref<14x64xf32, #tpu.memory_space<vmem>>, vector<14x64xf32>,
    } else {
    }
    return
  }
  func.func @transform_0(%arg0: i32, %arg1: i32, %arg2: i32) -> (i32, i32) {
    %c0_i32 = arith.constant 0 : i32
    return %arg0, %arg2 : i32, i32
  }
  func.func @transform_1(%arg0: i32, %arg1: i32, %arg2: i32) -> (i32, i32) {
    %c0_i32 = arith.constant 0 : i32
    return %arg2, %arg1 : i32, i32
  }
  func.func @transform_2(%arg0: i32, %arg1: i32, %arg2: i32) -> (i32, i32) {
    %c0_i32 = arith.constant 0 : i32
    %c0_i32_0 = arith.constant 0 : i32
    return %c0_i32, %arg1 : i32, i32
  }
  func.func @transform_3(%arg0: i32, %arg1: i32, %arg2: i32) -> (i32, i32) {
    %c0_i32 = arith.constant 0 : i32
    return %arg0, %arg1 : i32, i32
  }
}

module attributes {stable_mosaic.version = 11 : i64} {
  func.func @_ln_linear_kernel(%arg0: i32, %arg1: i32, %arg2: memref<16x64xf32, #tpu.memory_space<vmem>>, %arg3: memref<1x64xf32, #tpu.memory_space<vmem>>, %arg4: memref<1x64xf32, #tpu.memory_space<vmem>>, %arg5: memref<64x192xbf16, #tpu.memory_space<vmem>>, %arg6: memref<1x192xf32, #tpu.memory_space<vmem>>, %arg7: memref<16x192xbf16, #tpu.memory_space<vmem>>) attributes {dimension_semantics = [#tpu.dimension_semantics<parallel>, #tpu.dimension_semantics<parallel>], iteration_bounds = array<i64: 1, 1>, scalar_prefetch = 0 : i64, scratch_operands = 0 : i64, tpu.core_type = #tpu.core_type<tc>, window_params = [{transform_indices = @transform_0, window_bounds = array<i64: 16, 64>}, {pipeline_mode = #tpu.pipeline_mode<synchronous>, transform_indices = @transform_1, window_bounds = array<i64: 1, 64>}, {pipeline_mode = #tpu.pipeline_mode<synchronous>, transform_indices = @transform_2, window_bounds = array<i64: 1, 64>}, {transform_indices = @transform_3, window_bounds = array<i64: 64, 192>}, {transform_indices = @transform_4, window_bounds = array<i64: 1, 192>}, {transform_indices = @transform_5, window_bounds = array<i64: 16, 192>}]} {
    %c0 = arith.constant 0 : index
    %c0_0 = arith.constant 0 : index
    %0 = vector.load %arg2[%c0, %c0_0] : memref<16x64xf32, #tpu.memory_space<vmem>>, vector<16x64xf32>
    %cst = arith.constant dense<0.000000e+00> : vector<16xf32>
    %1 = vector.multi_reduction <add>, %0, %cst [1] : vector<16x64xf32> to vector<16xf32>
    %2 = vector.shape_cast %1 : vector<16xf32> to vector<16x1xf32>
    %cst_1 = arith.constant 6.400000e+01 : f32
    %3 = vector.broadcast %cst_1 : f32 to vector<16x1xf32>
    %4 = arith.divf %2, %3 : vector<16x1xf32>
    %5 = vector.broadcast %4 : vector<16x1xf32> to vector<16x64xf32>
    %6 = arith.subf %0, %5 : vector<16x64xf32>
    %7 = arith.mulf %6, %6 : vector<16x64xf32>
    %cst_2 = arith.constant dense<0.000000e+00> : vector<16xf32>
    %8 = vector.multi_reduction <add>, %7, %cst_2 [1] : vector<16x64xf32> to vector<16xf32>
    %9 = vector.shape_cast %8 : vector<16xf32> to vector<16x1xf32>
    %cst_3 = arith.constant 6.400000e+01 : f32
    %10 = vector.broadcast %cst_3 : f32 to vector<16x1xf32>
    %11 = arith.divf %9, %10 : vector<16x1xf32>
    %cst_4 = arith.constant 9.99999997E-7 : f32
    %12 = vector.broadcast %cst_4 : f32 to vector<16x1xf32>
    %13 = arith.addf %11, %12 : vector<16x1xf32>
    %14 = math.rsqrt %13 : vector<16x1xf32>
    %15 = vector.broadcast %14 : vector<16x1xf32> to vector<16x64xf32>
    %16 = arith.mulf %6, %15 : vector<16x64xf32>
    %c0_5 = arith.constant 0 : index
    %c0_6 = arith.constant 0 : index
    %17 = vector.load %arg3[%c0_5, %c0_6] : memref<1x64xf32, #tpu.memory_space<vmem>>, vector<1x64xf32>
    %18 = vector.broadcast %17 : vector<1x64xf32> to vector<16x64xf32>
    %19 = arith.mulf %16, %18 : vector<16x64xf32>
    %c0_7 = arith.constant 0 : index
    %c0_8 = arith.constant 0 : index
    %20 = vector.load %arg4[%c0_7, %c0_8] : memref<1x64xf32, #tpu.memory_space<vmem>>, vector<1x64xf32>
    %21 = vector.broadcast %20 : vector<1x64xf32> to vector<16x64xf32>
    %22 = arith.addf %19, %21 : vector<16x64xf32>
    %23 = arith.truncf %22 : vector<16x64xf32> to vector<16x64xbf16>
    %c0_9 = arith.constant 0 : index
    %c0_10 = arith.constant 0 : index
    %24 = vector.load %arg5[%c0_9, %c0_10] : memref<64x192xbf16, #tpu.memory_space<vmem>>, vector<64x192xbf16>
    %cst_11 = arith.constant dense<0.000000e+00> : vector<16x192xf32>
    %25 = tpu.matmul %23, %24, %cst_11 {dimension_numbers = #tpu.dot_dimension_numbers<[1], [0], [0], [1], [0, 0, 1, 1], [], []>} : vector<16x64xbf16>, vector<64x192xbf16>, vector<16x192xf32> -> vector<16x192xf32>
    %c0_12 = arith.constant 0 : index
    %c0_13 = arith.constant 0 : index
    %26 = vector.load %arg6[%c0_12, %c0_13] : memref<1x192xf32, #tpu.memory_space<vmem>>, vector<1x192xf32>
    %27 = vector.broadcast %26 : vector<1x192xf32> to vector<16x192xf32>
    %28 = arith.addf %25, %27 : vector<16x192xf32>
    %29 = arith.truncf %28 : vector<16x192xf32> to vector<16x192xbf16>
    %c0_14 = arith.constant 0 : index
    %c0_15 = arith.constant 0 : index
    %30 = vector.load %arg7[%c0_14, %c0_15] : memref<16x192xbf16, #tpu.memory_space<vmem>>, vector<16x192xbf16>
    tpu.vector_store %arg7[%c0_14, %c0_15], %29 {strides = array<i32>} : memref<16x192xbf16, #tpu.memory_space<vmem>>, vector<16x192xbf16>,
    return
  }
  func.func @transform_0(%arg0: i32, %arg1: i32) -> (i32, i32) {
    %c0_i32 = arith.constant 0 : i32
    %c0_i32_0 = arith.constant 0 : i32
    return %arg0, %c0_i32 : i32, i32
  }
  func.func @transform_1(%arg0: i32, %arg1: i32) -> (i32, i32) {
    %c0_i32 = arith.constant 0 : i32
    %c0_i32_0 = arith.constant 0 : i32
    %c0_i32_1 = arith.constant 0 : i32
    return %c0_i32, %c0_i32_0 : i32, i32
  }
  func.func @transform_2(%arg0: i32, %arg1: i32) -> (i32, i32) {
    %c0_i32 = arith.constant 0 : i32
    %c0_i32_0 = arith.constant 0 : i32
    %c0_i32_1 = arith.constant 0 : i32
    return %c0_i32, %c0_i32_0 : i32, i32
  }
  func.func @transform_3(%arg0: i32, %arg1: i32) -> (i32, i32) {
    %c0_i32 = arith.constant 0 : i32
    %c0_i32_0 = arith.constant 0 : i32
    return %c0_i32, %arg1 : i32, i32
  }
  func.func @transform_4(%arg0: i32, %arg1: i32) -> (i32, i32) {
    %c0_i32 = arith.constant 0 : i32
    %c0_i32_0 = arith.constant 0 : i32
    return %c0_i32, %arg1 : i32, i32
  }
  func.func @transform_5(%arg0: i32, %arg1: i32) -> (i32, i32) {
    %c0_i32 = arith.constant 0 : i32
    return %arg0, %arg1 : i32, i32
  }
}

module attributes {stable_mosaic.version = 11 : i64} {
  func.func @_linear_kernel(%arg0: i32, %arg1: i32, %arg2: i32, %arg3: memref<16x64xbf16, #tpu.memory_space<vmem>>, %arg4: memref<64x64xbf16, #tpu.memory_space<vmem>>, %arg5: memref<1x64xf32, #tpu.memory_space<vmem>>, %arg6: memref<16x64xf32, #tpu.memory_space<vmem>>, %arg7: memref<16x64xf32, #tpu.memory_space<vmem>>, %arg8: memref<16x64xf32, #tpu.memory_space<vmem>>) attributes {dimension_semantics = [#tpu.dimension_semantics<parallel>, #tpu.dimension_semantics<parallel>, #tpu.dimension_semantics<arbitrary>], iteration_bounds = array<i64: 1, 1, 1>, scalar_prefetch = 0 : i64, scratch_operands = 1 : i64, tpu.core_type = #tpu.core_type<tc>, window_params = [{transform_indices = @transform_0, window_bounds = array<i64: 16, 64>}, {transform_indices = @transform_1, window_bounds = array<i64: 64, 64>}, {transform_indices = @transform_2, window_bounds = array<i64: 1, 64>}, {transform_indices = @transform_3, window_bounds = array<i64: 16, 64>}, {transform_indices = @transform_4, window_bounds = array<i64: 16, 64>}]} {
    %c0_i32 = arith.constant 0 : i32
    %0 = arith.cmpi eq, %arg2, %c0_i32 : i32
    %1 = arith.extui %0 : i1 to i32
    %c0_i32_0 = arith.constant 0 : i32
    %2 = arith.cmpi ne, %1, %c0_i32_0 : i32
    scf.if %2 {
      %cst_10 = arith.constant 0.000000e+00 : f32
      %12 = vector.broadcast %cst_10 : f32 to vector<16x64xf32>
      %c0_11 = arith.constant 0 : index
      %c0_12 = arith.constant 0 : index
      %13 = vector.load %arg8[%c0_11, %c0_12] : memref<16x64xf32, #tpu.memory_space<vmem>>, vector<16x64xf32>
      tpu.vector_store %arg8[%c0_11, %c0_12], %12 {strides = array<i32>} : memref<16x64xf32, #tpu.memory_space<vmem>>, vector<16x64xf32>,
    } else {
    }
    %c0 = arith.constant 0 : index
    %c0_1 = arith.constant 0 : index
    %3 = vector.load %arg8[%c0, %c0_1] : memref<16x64xf32, #tpu.memory_space<vmem>>, vector<16x64xf32>
    %c0_2 = arith.constant 0 : index
    %c0_3 = arith.constant 0 : index
    %4 = vector.load %arg3[%c0_2, %c0_3] : memref<16x64xbf16, #tpu.memory_space<vmem>>, vector<16x64xbf16>
    %c0_4 = arith.constant 0 : index
    %c0_5 = arith.constant 0 : index
    %5 = vector.load %arg4[%c0_4, %c0_5] : memref<64x64xbf16, #tpu.memory_space<vmem>>, vector<64x64xbf16>
    %cst = arith.constant dense<0.000000e+00> : vector<16x64xf32>
    %6 = tpu.matmul %4, %5, %cst {dimension_numbers = #tpu.dot_dimension_numbers<[1], [0], [0], [1], [0, 0, 1, 1], [], []>} : vector<16x64xbf16>, vector<64x64xbf16>, vector<16x64xf32> -> vector<16x64xf32>
    %7 = arith.addf %3, %6 : vector<16x64xf32>
    %c0_6 = arith.constant 0 : index
    %c0_7 = arith.constant 0 : index
    %8 = vector.load %arg8[%c0_6, %c0_7] : memref<16x64xf32, #tpu.memory_space<vmem>>, vector<16x64xf32>
    tpu.vector_store %arg8[%c0_6, %c0_7], %7 {strides = array<i32>} : memref<16x64xf32, #tpu.memory_space<vmem>>, vector<16x64xf32>,
    %c0_i32_8 = arith.constant 0 : i32
    %9 = arith.cmpi eq, %arg2, %c0_i32_8 : i32
    %10 = arith.extui %9 : i1 to i32
    %c0_i32_9 = arith.constant 0 : i32
    %11 = arith.cmpi ne, %10, %c0_i32_9 : i32
    scf.if %11 {
      %c0_10 = arith.constant 0 : index
      %c0_11 = arith.constant 0 : index
      %12 = vector.load %arg8[%c0_10, %c0_11] : memref<16x64xf32, #tpu.memory_space<vmem>>, vector<16x64xf32>
      %c0_12 = arith.constant 0 : index
      %c0_13 = arith.constant 0 : index
      %13 = vector.load %arg5[%c0_12, %c0_13] : memref<1x64xf32, #tpu.memory_space<vmem>>, vector<1x64xf32>
      %14 = vector.broadcast %13 : vector<1x64xf32> to vector<16x64xf32>
      %15 = arith.addf %12, %14 : vector<16x64xf32>
      %c0_14 = arith.constant 0 : index
      %c0_15 = arith.constant 0 : index
      %16 = vector.load %arg6[%c0_14, %c0_15] : memref<16x64xf32, #tpu.memory_space<vmem>>, vector<16x64xf32>
      %17 = arith.addf %15, %16 : vector<16x64xf32>
      %c0_16 = arith.constant 0 : index
      %c0_17 = arith.constant 0 : index
      %18 = vector.load %arg7[%c0_16, %c0_17] : memref<16x64xf32, #tpu.memory_space<vmem>>, vector<16x64xf32>
      tpu.vector_store %arg7[%c0_16, %c0_17], %17 {strides = array<i32>} : memref<16x64xf32, #tpu.memory_space<vmem>>, vector<16x64xf32>,
    } else {
    }
    return
  }
  func.func @transform_0(%arg0: i32, %arg1: i32, %arg2: i32) -> (i32, i32) {
    %c0_i32 = arith.constant 0 : i32
    return %arg0, %arg2 : i32, i32
  }
  func.func @transform_1(%arg0: i32, %arg1: i32, %arg2: i32) -> (i32, i32) {
    %c0_i32 = arith.constant 0 : i32
    return %arg2, %arg1 : i32, i32
  }
  func.func @transform_2(%arg0: i32, %arg1: i32, %arg2: i32) -> (i32, i32) {
    %c0_i32 = arith.constant 0 : i32
    %c0_i32_0 = arith.constant 0 : i32
    return %c0_i32, %arg1 : i32, i32
  }
  func.func @transform_3(%arg0: i32, %arg1: i32, %arg2: i32) -> (i32, i32) {
    %c0_i32 = arith.constant 0 : i32
    return %arg0, %arg1 : i32, i32
  }
  func.func @transform_4(%arg0: i32, %arg1: i32, %arg2: i32) -> (i32, i32) {
    %c0_i32 = arith.constant 0 : i32
    return %arg0, %arg1 : i32, i32
  }
}

module attributes {stable_mosaic.version = 11 : i64} {
  func.func @_attention_kernel(%arg0: i32, %arg1: memref<1x8x1x4x16xbf16, #tpu.memory_space<vmem>>, %arg2: memref<1x8x1x4x16xbf16, #tpu.memory_space<vmem>>, %arg3: memref<1x8x1x4x16xbf16, #tpu.memory_space<vmem>>, %arg4: memref<1x8x4x16xbf16, #tpu.memory_space<vmem>>) attributes {dimension_semantics = [#tpu.dimension_semantics<parallel>], iteration_bounds = array<i64: 2>, scalar_prefetch = 0 : i64, scratch_operands = 0 : i64, tpu.core_type = #tpu.core_type<tc>, window_params = [{transform_indices = @transform_0, window_bounds = array<i64: 1, 8, 1, 4, 16>}, {transform_indices = @transform_1, window_bounds = array<i64: 1, 8, 1, 4, 16>}, {transform_indices = @transform_2, window_bounds = array<i64: 1, 8, 1, 4, 16>}, {transform_indices = @transform_3, window_bounds = array<i64: 1, 8, 4, 16>}]} {
    %c0 = arith.constant 0 : index
    %c0_0 = arith.constant 0 : index
    %c0_1 = arith.constant 0 : index
    %c0_2 = arith.constant 0 : index
    %c0_3 = arith.constant 0 : index
    %0 = vector.load %arg1[%c0, %c0_0, %c0_1, %c0_2, %c0_3] : memref<1x8x1x4x16xbf16, #tpu.memory_space<vmem>>, vector<1x8x1x1x16xbf16>
    %1 = vector.shape_cast %0 : vector<1x8x1x1x16xbf16> to vector<8x16xbf16>
    %c0_4 = arith.constant 0 : index
    %c0_5 = arith.constant 0 : index
    %c0_6 = arith.constant 0 : index
    %c0_7 = arith.constant 0 : index
    %c0_8 = arith.constant 0 : index
    %2 = vector.load %arg2[%c0_4, %c0_5, %c0_6, %c0_7, %c0_8] : memref<1x8x1x4x16xbf16, #tpu.memory_space<vmem>>, vector<1x8x1x1x16xbf16>
    %3 = vector.shape_cast %2 : vector<1x8x1x1x16xbf16> to vector<8x16xbf16>
    %c0_9 = arith.constant 0 : index
    %c0_10 = arith.constant 0 : index
    %c0_11 = arith.constant 0 : index
    %c0_12 = arith.constant 0 : index
    %c0_13 = arith.constant 0 : index
    %4 = vector.load %arg3[%c0_9, %c0_10, %c0_11, %c0_12, %c0_13] : memref<1x8x1x4x16xbf16, #tpu.memory_space<vmem>>, vector<1x8x1x1x16xbf16>
    %5 = vector.shape_cast %4 : vector<1x8x1x1x16xbf16> to vector<8x16xbf16>
    %cst = arith.constant dense<0.000000e+00> : vector<8x8xf32>
    %6 = tpu.matmul %1, %3, %cst {dimension_numbers = #tpu.dot_dimension_numbers<[1], [1], [0], [0], [0, 0, 1, 0], [], []>} : vector<8x16xbf16>, vector<8x16xbf16>, vector<8x8xf32> -> vector<8x8xf32>
    %cst_14 = arith.constant 2.500000e-01 : f32
    %7 = vector.broadcast %cst_14 : f32 to vector<8x8xf32>
    %8 = arith.mulf %6, %7 : vector<8x8xf32>
    %cst_15 = arith.constant dense<0xFF800000> : vector<8xf32>
    %9 = vector.multi_reduction <maximumf>, %8, %cst_15 [1] : vector<8x8xf32> to vector<8xf32>
    %10 = vector.shape_cast %9 : vector<8xf32> to vector<8x1xf32>
    %11 = vector.broadcast %10 : vector<8x1xf32> to vector<8x8xf32>
    %12 = arith.subf %8, %11 : vector<8x8xf32>
    %13 = math.exp %12 : vector<8x8xf32>
    %cst_16 = arith.constant dense<0.000000e+00> : vector<8xf32>
    %14 = vector.multi_reduction <add>, %13, %cst_16 [1] : vector<8x8xf32> to vector<8xf32>
    %15 = vector.shape_cast %14 : vector<8xf32> to vector<8x1xf32>
    %16 = tpu.reciprocal %15 {approx = true} : vector<8x1xf32> -> vector<8x1xf32>
    %17 = vector.broadcast %16 : vector<8x1xf32> to vector<8x8xf32>
    %18 = arith.mulf %13, %17 : vector<8x8xf32>
    %19 = arith.truncf %18 : vector<8x8xf32> to vector<8x8xbf16>
    %cst_17 = arith.constant dense<0.000000e+00> : vector<8x16xf32>
    %20 = tpu.matmul %19, %5, %cst_17 {dimension_numbers = #tpu.dot_dimension_numbers<[1], [0], [0], [1], [0, 0, 1, 1], [], []>} : vector<8x8xbf16>, vector<8x16xbf16>, vector<8x16xf32> -> vector<8x16xf32>
    %21 = arith.truncf %20 : vector<8x16xf32> to vector<8x16xbf16>
    %c0_18 = arith.constant 0 : index
    %c0_19 = arith.constant 0 : index
    %c0_20 = arith.constant 0 : index
    %c0_21 = arith.constant 0 : index
    %22 = vector.load %arg4[%c0_18, %c0_19, %c0_20, %c0_21] : memref<1x8x4x16xbf16, #tpu.memory_space<vmem>>, vector<1x8x1x16xbf16>
    %23 = vector.shape_cast %22 : vector<1x8x1x16xbf16> to vector<8x16xbf16>
    %24 = vector.shape_cast %21 : vector<8x16xbf16> to vector<1x8x1x16xbf16>
    tpu.vector_store %arg4[%c0_18, %c0_19, %c0_20, %c0_21], %24 {strides = array<i32>} : memref<1x8x4x16xbf16, #tpu.memory_space<vmem>>, vector<1x8x1x16xbf16>,
    %c0_22 = arith.constant 0 : index
    %c0_23 = arith.constant 0 : index
    %c0_24 = arith.constant 0 : index
    %c1 = arith.constant 1 : index
    %c0_25 = arith.constant 0 : index
    %25 = vector.load %arg1[%c0_22, %c0_23, %c0_24, %c1, %c0_25] : memref<1x8x1x4x16xbf16, #tpu.memory_space<vmem>>, vector<1x8x1x1x16xbf16>
    %26 = vector.shape_cast %25 : vector<1x8x1x1x16xbf16> to vector<8x16xbf16>
    %c0_26 = arith.constant 0 : index
    %c0_27 = arith.constant 0 : index
    %c0_28 = arith.constant 0 : index
    %c1_29 = arith.constant 1 : index
    %c0_30 = arith.constant 0 : index
    %27 = vector.load %arg2[%c0_26, %c0_27, %c0_28, %c1_29, %c0_30] : memref<1x8x1x4x16xbf16, #tpu.memory_space<vmem>>, vector<1x8x1x1x16xbf16>
    %28 = vector.shape_cast %27 : vector<1x8x1x1x16xbf16> to vector<8x16xbf16>
    %c0_31 = arith.constant 0 : index
    %c0_32 = arith.constant 0 : index
    %c0_33 = arith.constant 0 : index
    %c1_34 = arith.constant 1 : index
    %c0_35 = arith.constant 0 : index
    %29 = vector.load %arg3[%c0_31, %c0_32, %c0_33, %c1_34, %c0_35] : memref<1x8x1x4x16xbf16, #tpu.memory_space<vmem>>, vector<1x8x1x1x16xbf16>
    %30 = vector.shape_cast %29 : vector<1x8x1x1x16xbf16> to vector<8x16xbf16>
    %cst_36 = arith.constant dense<0.000000e+00> : vector<8x8xf32>
    %31 = tpu.matmul %26, %28, %cst_36 {dimension_numbers = #tpu.dot_dimension_numbers<[1], [1], [0], [0], [0, 0, 1, 0], [], []>} : vector<8x16xbf16>, vector<8x16xbf16>, vector<8x8xf32> -> vector<8x8xf32>
    %cst_37 = arith.constant 2.500000e-01 : f32
    %32 = vector.broadcast %cst_37 : f32 to vector<8x8xf32>
    %33 = arith.mulf %31, %32 : vector<8x8xf32>
    %cst_38 = arith.constant dense<0xFF800000> : vector<8xf32>
    %34 = vector.multi_reduction <maximumf>, %33, %cst_38 [1] : vector<8x8xf32> to vector<8xf32>
    %35 = vector.shape_cast %34 : vector<8xf32> to vector<8x1xf32>
    %36 = vector.broadcast %35 : vector<8x1xf32> to vector<8x8xf32>
    %37 = arith.subf %33, %36 : vector<8x8xf32>
    %38 = math.exp %37 : vector<8x8xf32>
    %cst_39 = arith.constant dense<0.000000e+00> : vector<8xf32>
    %39 = vector.multi_reduction <add>, %38, %cst_39 [1] : vector<8x8xf32> to vector<8xf32>
    %40 = vector.shape_cast %39 : vector<8xf32> to vector<8x1xf32>
    %41 = tpu.reciprocal %40 {approx = true} : vector<8x1xf32> -> vector<8x1xf32>
    %42 = vector.broadcast %41 : vector<8x1xf32> to vector<8x8xf32>
    %43 = arith.mulf %38, %42 : vector<8x8xf32>
    %44 = arith.truncf %43 : vector<8x8xf32> to vector<8x8xbf16>
    %cst_40 = arith.constant dense<0.000000e+00> : vector<8x16xf32>
    %45 = tpu.matmul %44, %30, %cst_40 {dimension_numbers = #tpu.dot_dimension_numbers<[1], [0], [0], [1], [0, 0, 1, 1], [], []>} : vector<8x8xbf16>, vector<8x16xbf16>, vector<8x16xf32> -> vector<8x16xf32>
    %46 = arith.truncf %45 : vector<8x16xf32> to vector<8x16xbf16>
    %c0_41 = arith.constant 0 : index
    %c0_42 = arith.constant 0 : index
    %c1_43 = arith.constant 1 : index
    %c0_44 = arith.constant 0 : index
    %47 = vector.load %arg4[%c0_41, %c0_42, %c1_43, %c0_44] : memref<1x8x4x16xbf16, #tpu.memory_space<vmem>>, vector<1x8x1x16xbf16>
    %48 = vector.shape_cast %47 : vector<1x8x1x16xbf16> to vector<8x16xbf16>
    %49 = vector.shape_cast %46 : vector<8x16xbf16> to vector<1x8x1x16xbf16>
    tpu.vector_store %arg4[%c0_41, %c0_42, %c1_43, %c0_44], %49 {strides = array<i32>} : memref<1x8x4x16xbf16, #tpu.memory_space<vmem>>, vector<1x8x1x16xbf16>,
    %c0_45 = arith.constant 0 : index
    %c0_46 = arith.constant 0 : index
    %c0_47 = arith.constant 0 : index
    %c2 = arith.constant 2 : index
    %c0_48 = arith.constant 0 : index
    %50 = vector.load %arg1[%c0_45, %c0_46, %c0_47, %c2, %c0_48] : memref<1x8x1x4x16xbf16, #tpu.memory_space<vmem>>, vector<1x8x1x1x16xbf16>
    %51 = vector.shape_cast %50 : vector<1x8x1x1x16xbf16> to vector<8x16xbf16>
    %c0_49 = arith.constant 0 : index
    %c0_50 = arith.constant 0 : index
    %c0_51 = arith.constant 0 : index
    %c2_52 = arith.constant 2 : index
    %c0_53 = arith.constant 0 : index
    %52 = vector.load %arg2[%c0_49, %c0_50, %c0_51, %c2_52, %c0_53] : memref<1x8x1x4x16xbf16, #tpu.memory_space<vmem>>, vector<1x8x1x1x16xbf16>
    %53 = vector.shape_cast %52 : vector<1x8x1x1x16xbf16> to vector<8x16xbf16>
    %c0_54 = arith.constant 0 : index
    %c0_55 = arith.constant 0 : index
    %c0_56 = arith.constant 0 : index
    %c2_57 = arith.constant 2 : index
    %c0_58 = arith.constant 0 : index
    %54 = vector.load %arg3[%c0_54, %c0_55, %c0_56, %c2_57, %c0_58] : memref<1x8x1x4x16xbf16, #tpu.memory_space<vmem>>, vector<1x8x1x1x16xbf16>
    %55 = vector.shape_cast %54 : vector<1x8x1x1x16xbf16> to vector<8x16xbf16>
    %cst_59 = arith.constant dense<0.000000e+00> : vector<8x8xf32>
    %56 = tpu.matmul %51, %53, %cst_59 {dimension_numbers = #tpu.dot_dimension_numbers<[1], [1], [0], [0], [0, 0, 1, 0], [], []>} : vector<8x16xbf16>, vector<8x16xbf16>, vector<8x8xf32> -> vector<8x8xf32>
    %cst_60 = arith.constant 2.500000e-01 : f32
    %57 = vector.broadcast %cst_60 : f32 to vector<8x8xf32>
    %58 = arith.mulf %56, %57 : vector<8x8xf32>
    %cst_61 = arith.constant dense<0xFF800000> : vector<8xf32>
    %59 = vector.multi_reduction <maximumf>, %58, %cst_61 [1] : vector<8x8xf32> to vector<8xf32>
    %60 = vector.shape_cast %59 : vector<8xf32> to vector<8x1xf32>
    %61 = vector.broadcast %60 : vector<8x1xf32> to vector<8x8xf32>
    %62 = arith.subf %58, %61 : vector<8x8xf32>
    %63 = math.exp %62 : vector<8x8xf32>
    %cst_62 = arith.constant dense<0.000000e+00> : vector<8xf32>
    %64 = vector.multi_reduction <add>, %63, %cst_62 [1] : vector<8x8xf32> to vector<8xf32>
    %65 = vector.shape_cast %64 : vector<8xf32> to vector<8x1xf32>
    %66 = tpu.reciprocal %65 {approx = true} : vector<8x1xf32> -> vector<8x1xf32>
    %67 = vector.broadcast %66 : vector<8x1xf32> to vector<8x8xf32>
    %68 = arith.mulf %63, %67 : vector<8x8xf32>
    %69 = arith.truncf %68 : vector<8x8xf32> to vector<8x8xbf16>
    %cst_63 = arith.constant dense<0.000000e+00> : vector<8x16xf32>
    %70 = tpu.matmul %69, %55, %cst_63 {dimension_numbers = #tpu.dot_dimension_numbers<[1], [0], [0], [1], [0, 0, 1, 1], [], []>} : vector<8x8xbf16>, vector<8x16xbf16>, vector<8x16xf32> -> vector<8x16xf32>
    %71 = arith.truncf %70 : vector<8x16xf32> to vector<8x16xbf16>
    %c0_64 = arith.constant 0 : index
    %c0_65 = arith.constant 0 : index
    %c2_66 = arith.constant 2 : index
    %c0_67 = arith.constant 0 : index
    %72 = vector.load %arg4[%c0_64, %c0_65, %c2_66, %c0_67] : memref<1x8x4x16xbf16, #tpu.memory_space<vmem>>, vector<1x8x1x16xbf16>
    %73 = vector.shape_cast %72 : vector<1x8x1x16xbf16> to vector<8x16xbf16>
    %74 = vector.shape_cast %71 : vector<8x16xbf16> to vector<1x8x1x16xbf16>
    tpu.vector_store %arg4[%c0_64, %c0_65, %c2_66, %c0_67], %74 {strides = array<i32>} : memref<1x8x4x16xbf16, #tpu.memory_space<vmem>>, vector<1x8x1x16xbf16>,
    %c0_68 = arith.constant 0 : index
    %c0_69 = arith.constant 0 : index
    %c0_70 = arith.constant 0 : index
    %c3 = arith.constant 3 : index
    %c0_71 = arith.constant 0 : index
    %75 = vector.load %arg1[%c0_68, %c0_69, %c0_70, %c3, %c0_71] : memref<1x8x1x4x16xbf16, #tpu.memory_space<vmem>>, vector<1x8x1x1x16xbf16>
    %76 = vector.shape_cast %75 : vector<1x8x1x1x16xbf16> to vector<8x16xbf16>
    %c0_72 = arith.constant 0 : index
    %c0_73 = arith.constant 0 : index
    %c0_74 = arith.constant 0 : index
    %c3_75 = arith.constant 3 : index
    %c0_76 = arith.constant 0 : index
    %77 = vector.load %arg2[%c0_72, %c0_73, %c0_74, %c3_75, %c0_76] : memref<1x8x1x4x16xbf16, #tpu.memory_space<vmem>>, vector<1x8x1x1x16xbf16>
    %78 = vector.shape_cast %77 : vector<1x8x1x1x16xbf16> to vector<8x16xbf16>
    %c0_77 = arith.constant 0 : index
    %c0_78 = arith.constant 0 : index
    %c0_79 = arith.constant 0 : index
    %c3_80 = arith.constant 3 : index
    %c0_81 = arith.constant 0 : index
    %79 = vector.load %arg3[%c0_77, %c0_78, %c0_79, %c3_80, %c0_81] : memref<1x8x1x4x16xbf16, #tpu.memory_space<vmem>>, vector<1x8x1x1x16xbf16>
    %80 = vector.shape_cast %79 : vector<1x8x1x1x16xbf16> to vector<8x16xbf16>
    %cst_82 = arith.constant dense<0.000000e+00> : vector<8x8xf32>
    %81 = tpu.matmul %76, %78, %cst_82 {dimension_numbers = #tpu.dot_dimension_numbers<[1], [1], [0], [0], [0, 0, 1, 0], [], []>} : vector<8x16xbf16>, vector<8x16xbf16>, vector<8x8xf32> -> vector<8x8xf32>
    %cst_83 = arith.constant 2.500000e-01 : f32
    %82 = vector.broadcast %cst_83 : f32 to vector<8x8xf32>
    %83 = arith.mulf %81, %82 : vector<8x8xf32>
    %cst_84 = arith.constant dense<0xFF800000> : vector<8xf32>
    %84 = vector.multi_reduction <maximumf>, %83, %cst_84 [1] : vector<8x8xf32> to vector<8xf32>
    %85 = vector.shape_cast %84 : vector<8xf32> to vector<8x1xf32>
    %86 = vector.broadcast %85 : vector<8x1xf32> to vector<8x8xf32>
    %87 = arith.subf %83, %86 : vector<8x8xf32>
    %88 = math.exp %87 : vector<8x8xf32>
    %cst_85 = arith.constant dense<0.000000e+00> : vector<8xf32>
    %89 = vector.multi_reduction <add>, %88, %cst_85 [1] : vector<8x8xf32> to vector<8xf32>
    %90 = vector.shape_cast %89 : vector<8xf32> to vector<8x1xf32>
    %91 = tpu.reciprocal %90 {approx = true} : vector<8x1xf32> -> vector<8x1xf32>
    %92 = vector.broadcast %91 : vector<8x1xf32> to vector<8x8xf32>
    %93 = arith.mulf %88, %92 : vector<8x8xf32>
    %94 = arith.truncf %93 : vector<8x8xf32> to vector<8x8xbf16>
    %cst_86 = arith.constant dense<0.000000e+00> : vector<8x16xf32>
    %95 = tpu.matmul %94, %80, %cst_86 {dimension_numbers = #tpu.dot_dimension_numbers<[1], [0], [0], [1], [0, 0, 1, 1], [], []>} : vector<8x8xbf16>, vector<8x16xbf16>, vector<8x16xf32> -> vector<8x16xf32>
    %96 = arith.truncf %95 : vector<8x16xf32> to vector<8x16xbf16>
    %c0_87 = arith.constant 0 : index
    %c0_88 = arith.constant 0 : index
    %c3_89 = arith.constant 3 : index
    %c0_90 = arith.constant 0 : index
    %97 = vector.load %arg4[%c0_87, %c0_88, %c3_89, %c0_90] : memref<1x8x4x16xbf16, #tpu.memory_space<vmem>>, vector<1x8x1x16xbf16>
    %98 = vector.shape_cast %97 : vector<1x8x1x16xbf16> to vector<8x16xbf16>
    %99 = vector.shape_cast %96 : vector<8x16xbf16> to vector<1x8x1x16xbf16>
    tpu.vector_store %arg4[%c0_87, %c0_88, %c3_89, %c0_90], %99 {strides = array<i32>} : memref<1x8x4x16xbf16, #tpu.memory_space<vmem>>, vector<1x8x1x16xbf16>,
    return
  }
  func.func @transform_0(%arg0: i32) -> (i32, i32, i32, i32, i32) {
    %c0_i32 = arith.constant 0 : i32
    %c0_i32_0 = arith.constant 0 : i32
    %c0_i32_1 = arith.constant 0 : i32
    %c0_i32_2 = arith.constant 0 : i32
    %c0_i32_3 = arith.constant 0 : i32
    return %arg0, %c0_i32, %c0_i32_0, %c0_i32_1, %c0_i32_2 : i32, i32, i32, i32, i32
  }
  func.func @transform_1(%arg0: i32) -> (i32, i32, i32, i32, i32) {
    %c0_i32 = arith.constant 0 : i32
    %c1_i32 = arith.constant 1 : i32
    %c0_i32_0 = arith.constant 0 : i32
    %c0_i32_1 = arith.constant 0 : i32
    %c0_i32_2 = arith.constant 0 : i32
    return %arg0, %c0_i32, %c1_i32, %c0_i32_0, %c0_i32_1 : i32, i32, i32, i32, i32
  }
  func.func @transform_2(%arg0: i32) -> (i32, i32, i32, i32, i32) {
    %c0_i32 = arith.constant 0 : i32
    %c2_i32 = arith.constant 2 : i32
    %c0_i32_0 = arith.constant 0 : i32
    %c0_i32_1 = arith.constant 0 : i32
    %c0_i32_2 = arith.constant 0 : i32
    return %arg0, %c0_i32, %c2_i32, %c0_i32_0, %c0_i32_1 : i32, i32, i32, i32, i32
  }
  func.func @transform_3(%arg0: i32) -> (i32, i32, i32, i32) {
    %c0_i32 = arith.constant 0 : i32
    %c0_i32_0 = arith.constant 0 : i32
    %c0_i32_1 = arith.constant 0 : i32
    %c0_i32_2 = arith.constant 0 : i32
    return %arg0, %c0_i32, %c0_i32_0, %c0_i32_1 : i32, i32, i32, i32
  }
}

module attributes {stable_mosaic.version = 11 : i64} {
  func.func @_pos_head_kernel(%arg0: i32, %arg1: memref<1x8x64xf32, #tpu.memory_space<vmem>>, %arg2: memref<1x64xf32, #tpu.memory_space<vmem>>, %arg3: memref<1x64xf32, #tpu.memory_space<vmem>>, %arg4: memref<64x64xbf16, #tpu.memory_space<vmem>>, %arg5: memref<1x64xf32, #tpu.memory_space<vmem>>, %arg6: memref<64x2xf32, #tpu.memory_space<vmem>>, %arg7: memref<1x2xf32, #tpu.memory_space<vmem>>, %arg8: memref<2x2xf32, #tpu.memory_space<vmem>>, %arg9: memref<2x2xf32, #tpu.memory_space<vmem>>, %arg10: memref<1x1xf32, #tpu.memory_space<vmem>>) attributes {dimension_semantics = [#tpu.dimension_semantics<arbitrary>], iteration_bounds = array<i64: 2>, scalar_prefetch = 0 : i64, scratch_operands = 0 : i64, tpu.core_type = #tpu.core_type<tc>, window_params = [{transform_indices = @transform_0, window_bounds = array<i64: 1, 8, 64>}, {pipeline_mode = #tpu.pipeline_mode<synchronous>, transform_indices = @transform_1, window_bounds = array<i64: 1, 64>}, {pipeline_mode = #tpu.pipeline_mode<synchronous>, transform_indices = @transform_2, window_bounds = array<i64: 1, 64>}, {pipeline_mode = #tpu.pipeline_mode<synchronous>, transform_indices = @transform_3, window_bounds = array<i64: 64, 64>}, {pipeline_mode = #tpu.pipeline_mode<synchronous>, transform_indices = @transform_4, window_bounds = array<i64: 1, 64>}, {pipeline_mode = #tpu.pipeline_mode<synchronous>, transform_indices = @transform_5, window_bounds = array<i64: 64, 2>}, {pipeline_mode = #tpu.pipeline_mode<synchronous>, transform_indices = @transform_6, window_bounds = array<i64: 1, 2>}, {pipeline_mode = #tpu.pipeline_mode<synchronous>, transform_indices = @transform_7, window_bounds = array<i64: 2, 2>}, {pipeline_mode = #tpu.pipeline_mode<synchronous>, transform_indices = @transform_8, window_bounds = array<i64: 2, 2>}, {pipeline_mode = #tpu.pipeline_mode<synchronous>, transform_indices = @transform_9, window_bounds = array<i64: 1, 1>}]} {
    %c0_i32 = arith.constant 0 : i32
    %0 = arith.cmpi eq, %arg0, %c0_i32 : i32
    %1 = arith.extui %0 : i1 to i32
    %c0_i32_0 = arith.constant 0 : i32
    %2 = arith.cmpi ne, %1, %c0_i32_0 : i32
    scf.if %2 {
      %cst_29 = arith.constant 0.000000e+00 : f32
      %54 = vector.broadcast %cst_29 : f32 to vector<2x2xf32>
      %c0_30 = arith.constant 0 : index
      %c0_31 = arith.constant 0 : index
      %55 = vector.load %arg9[%c0_30, %c0_31] : memref<2x2xf32, #tpu.memory_space<vmem>>, vector<2x2xf32>
      tpu.vector_store %arg9[%c0_30, %c0_31], %54 {strides = array<i32>} : memref<2x2xf32, #tpu.memory_space<vmem>>, vector<2x2xf32>,
    } else {
    }
    %c0 = arith.constant 0 : index
    %c0_1 = arith.constant 0 : index
    %c0_2 = arith.constant 0 : index
    %3 = vector.load %arg1[%c0, %c0_1, %c0_2] : memref<1x8x64xf32, #tpu.memory_space<vmem>>, vector<1x8x64xf32>
    %4 = vector.shape_cast %3 : vector<1x8x64xf32> to vector<8x64xf32>
    %cst = arith.constant dense<0.000000e+00> : vector<8xf32>
    %5 = vector.multi_reduction <add>, %4, %cst [1] : vector<8x64xf32> to vector<8xf32>
    %6 = vector.shape_cast %5 : vector<8xf32> to vector<8x1xf32>
    %cst_3 = arith.constant 6.400000e+01 : f32
    %7 = vector.broadcast %cst_3 : f32 to vector<8x1xf32>
    %8 = arith.divf %6, %7 : vector<8x1xf32>
    %9 = vector.broadcast %8 : vector<8x1xf32> to vector<8x64xf32>
    %10 = arith.subf %4, %9 : vector<8x64xf32>
    %11 = arith.mulf %10, %10 : vector<8x64xf32>
    %cst_4 = arith.constant dense<0.000000e+00> : vector<8xf32>
    %12 = vector.multi_reduction <add>, %11, %cst_4 [1] : vector<8x64xf32> to vector<8xf32>
    %13 = vector.shape_cast %12 : vector<8xf32> to vector<8x1xf32>
    %cst_5 = arith.constant 6.400000e+01 : f32
    %14 = vector.broadcast %cst_5 : f32 to vector<8x1xf32>
    %15 = arith.divf %13, %14 : vector<8x1xf32>
    %cst_6 = arith.constant 9.99999997E-7 : f32
    %16 = vector.broadcast %cst_6 : f32 to vector<8x1xf32>
    %17 = arith.addf %15, %16 : vector<8x1xf32>
    %18 = math.rsqrt %17 : vector<8x1xf32>
    %19 = vector.broadcast %18 : vector<8x1xf32> to vector<8x64xf32>
    %20 = arith.mulf %10, %19 : vector<8x64xf32>
    %c0_7 = arith.constant 0 : index
    %c0_8 = arith.constant 0 : index
    %21 = vector.load %arg2[%c0_7, %c0_8] : memref<1x64xf32, #tpu.memory_space<vmem>>, vector<1x64xf32>
    %22 = vector.broadcast %21 : vector<1x64xf32> to vector<8x64xf32>
    %23 = arith.mulf %20, %22 : vector<8x64xf32>
    %c0_9 = arith.constant 0 : index
    %c0_10 = arith.constant 0 : index
    %24 = vector.load %arg3[%c0_9, %c0_10] : memref<1x64xf32, #tpu.memory_space<vmem>>, vector<1x64xf32>
    %25 = vector.broadcast %24 : vector<1x64xf32> to vector<8x64xf32>
    %26 = arith.addf %23, %25 : vector<8x64xf32>
    %27 = arith.truncf %26 : vector<8x64xf32> to vector<8x64xbf16>
    %c0_11 = arith.constant 0 : index
    %c0_12 = arith.constant 0 : index
    %28 = vector.load %arg4[%c0_11, %c0_12] : memref<64x64xbf16, #tpu.memory_space<vmem>>, vector<64x64xbf16>
    %cst_13 = arith.constant dense<0.000000e+00> : vector<8x64xf32>
    %29 = tpu.matmul %27, %28, %cst_13 {dimension_numbers = #tpu.dot_dimension_numbers<[1], [0], [0], [1], [0, 0, 1, 1], [], []>} : vector<8x64xbf16>, vector<64x64xbf16>, vector<8x64xf32> -> vector<8x64xf32>
    %c0_14 = arith.constant 0 : index
    %c0_15 = arith.constant 0 : index
    %30 = vector.load %arg5[%c0_14, %c0_15] : memref<1x64xf32, #tpu.memory_space<vmem>>, vector<1x64xf32>
    %31 = vector.broadcast %30 : vector<1x64xf32> to vector<8x64xf32>
    %32 = arith.addf %29, %31 : vector<8x64xf32>
    %cst_16 = arith.constant 0.000000e+00 : f32
    %33 = vector.broadcast %cst_16 : f32 to vector<8x64xf32>
    %34 = arith.maximumf %32, %33 : vector<8x64xf32>
    %cst_17 = arith.constant dense<0.000000e+00> : vector<64xf32>
    %35 = vector.multi_reduction <add>, %34, %cst_17 [0] : vector<8x64xf32> to vector<64xf32>
    %36 = vector.shape_cast %35 : vector<64xf32> to vector<1x64xf32>
    %cst_18 = arith.constant 1.250000e-01 : f32
    %37 = vector.broadcast %cst_18 : f32 to vector<1x64xf32>
    %38 = arith.mulf %36, %37 : vector<1x64xf32>
    %c0_19 = arith.constant 0 : index
    %c0_20 = arith.constant 0 : index
    %39 = vector.load %arg6[%c0_19, %c0_20] : memref<64x2xf32, #tpu.memory_space<vmem>>, vector<64x2xf32>
    %cst_21 = arith.constant dense<0.000000e+00> : vector<1x2xf32>
    %40 = tpu.matmul %38, %39, %cst_21 {dimension_numbers = #tpu.dot_dimension_numbers<[1], [0], [0], [1], [0, 0, 1, 1], [], []>} : vector<1x64xf32>, vector<64x2xf32>, vector<1x2xf32> -> vector<1x2xf32>
    %c0_22 = arith.constant 0 : index
    %c0_23 = arith.constant 0 : index
    %41 = vector.load %arg7[%c0_22, %c0_23] : memref<1x2xf32, #tpu.memory_space<vmem>>, vector<1x2xf32>
    %42 = arith.addf %40, %41 : vector<1x2xf32>
    %43 = tpu.iota {dimensions = array<i32: 0>} : vector<2x2xi32>
    %44 = vector.broadcast %arg0 : i32 to vector<2x2xi32>
    %45 = arith.cmpi eq, %43, %44 : vector<2x2xi32>
    %46 = vector.shape_cast %42 : vector<1x2xf32> to vector<1x2xf32>
    %47 = vector.broadcast %46 : vector<1x2xf32> to vector<2x2xf32>
    %c0_24 = arith.constant 0 : index
    %c0_25 = arith.constant 0 : index
    %48 = vector.load %arg9[%c0_24, %c0_25] : memref<2x2xf32, #tpu.memory_space<vmem>>, vector<2x2xf32>
    %49 = arith.select %45, %47, %48 : vector<2x2xi1>, vector<2x2xf32>
    %c0_26 = arith.constant 0 : index
    %c0_27 = arith.constant 0 : index
    %50 = vector.load %arg9[%c0_26, %c0_27] : memref<2x2xf32, #tpu.memory_space<vmem>>, vector<2x2xf32>
    tpu.vector_store %arg9[%c0_26, %c0_27], %49 {strides = array<i32>} : memref<2x2xf32, #tpu.memory_space<vmem>>, vector<2x2xf32>,
    %c1_i32 = arith.constant 1 : i32
    %51 = arith.cmpi eq, %arg0, %c1_i32 : i32
    %52 = arith.extui %51 : i1 to i32
    %c0_i32_28 = arith.constant 0 : i32
    %53 = arith.cmpi ne, %52, %c0_i32_28 : i32
    scf.if %53 {
      %c0_29 = arith.constant 0 : index
      %c0_30 = arith.constant 0 : index
      %54 = vector.load %arg9[%c0_29, %c0_30] : memref<2x2xf32, #tpu.memory_space<vmem>>, vector<2x2xf32>
      %c0_31 = arith.constant 0 : index
      %c0_32 = arith.constant 0 : index
      %55 = vector.load %arg8[%c0_31, %c0_32] : memref<2x2xf32, #tpu.memory_space<vmem>>, vector<2x2xf32>
      %56 = arith.subf %54, %55 : vector<2x2xf32>
      %57 = arith.mulf %56, %56 : vector<2x2xf32>
      %58 = vector.shape_cast %57 : vector<2x2xf32> to vector<1x2x2xf32>
      %cst_33 = arith.constant dense<0.000000e+00> : vector<1xf32>
      %59 = vector.multi_reduction <add>, %58, %cst_33 [1, 2] : vector<1x2x2xf32> to vector<1xf32>
      %60 = vector.shape_cast %59 : vector<1xf32> to vector<1x1x1xf32>
      %61 = vector.extract %60[0, 0, 0] : f32 from vector<1x1x1xf32>
      %62 = vector.broadcast %61 : f32 to vector<1x1xf32>
      %cst_34 = arith.constant 2.500000e-01 : f32
      %63 = vector.broadcast %cst_34 : f32 to vector<1x1xf32>
      %64 = arith.mulf %62, %63 : vector<1x1xf32>
      %c0_35 = arith.constant 0 : index
      %c0_36 = arith.constant 0 : index
      %65 = vector.load %arg10[%c0_35, %c0_36] : memref<1x1xf32, #tpu.memory_space<vmem>>, vector<1x1xf32>
      tpu.vector_store %arg10[%c0_35, %c0_36], %64 {strides = array<i32>} : memref<1x1xf32, #tpu.memory_space<vmem>>, vector<1x1xf32>,
    } else {
    }
    return
  }
  func.func @transform_0(%arg0: i32) -> (i32, i32, i32) {
    %c0_i32 = arith.constant 0 : i32
    %c0_i32_0 = arith.constant 0 : i32
    %c0_i32_1 = arith.constant 0 : i32
    return %arg0, %c0_i32, %c0_i32_0 : i32, i32, i32
  }
  func.func @transform_1(%arg0: i32) -> (i32, i32) {
    %c0_i32 = arith.constant 0 : i32
    %c0_i32_0 = arith.constant 0 : i32
    %c0_i32_1 = arith.constant 0 : i32
    return %c0_i32, %c0_i32_0 : i32, i32
  }
  func.func @transform_2(%arg0: i32) -> (i32, i32) {
    %c0_i32 = arith.constant 0 : i32
    %c0_i32_0 = arith.constant 0 : i32
    %c0_i32_1 = arith.constant 0 : i32
    return %c0_i32, %c0_i32_0 : i32, i32
  }
  func.func @transform_3(%arg0: i32) -> (i32, i32) {
    %c0_i32 = arith.constant 0 : i32
    %c0_i32_0 = arith.constant 0 : i32
    %c0_i32_1 = arith.constant 0 : i32
    return %c0_i32, %c0_i32_0 : i32, i32
  }
  func.func @transform_4(%arg0: i32) -> (i32, i32) {
    %c0_i32 = arith.constant 0 : i32
    %c0_i32_0 = arith.constant 0 : i32
    %c0_i32_1 = arith.constant 0 : i32
    return %c0_i32, %c0_i32_0 : i32, i32
  }
  func.func @transform_5(%arg0: i32) -> (i32, i32) {
    %c0_i32 = arith.constant 0 : i32
    %c0_i32_0 = arith.constant 0 : i32
    %c0_i32_1 = arith.constant 0 : i32
    return %c0_i32, %c0_i32_0 : i32, i32
  }
  func.func @transform_6(%arg0: i32) -> (i32, i32) {
    %c0_i32 = arith.constant 0 : i32
    %c0_i32_0 = arith.constant 0 : i32
    %c0_i32_1 = arith.constant 0 : i32
    return %c0_i32, %c0_i32_0 : i32, i32
  }
  func.func @transform_7(%arg0: i32) -> (i32, i32) {
    %c0_i32 = arith.constant 0 : i32
    %c0_i32_0 = arith.constant 0 : i32
    %c0_i32_1 = arith.constant 0 : i32
    return %c0_i32, %c0_i32_0 : i32, i32
  }
  func.func @transform_8(%arg0: i32) -> (i32, i32) {
    %c0_i32 = arith.constant 0 : i32
    %c0_i32_0 = arith.constant 0 : i32
    %c0_i32_1 = arith.constant 0 : i32
    return %c0_i32, %c0_i32_0 : i32, i32
  }
  func.func @transform_9(%arg0: i32) -> (i32, i32) {
    %c0_i32 = arith.constant 0 : i32
    %c0_i32_0 = arith.constant 0 : i32
    %c0_i32_1 = arith.constant 0 : i32
    return %c0_i32, %c0_i32_0 : i32, i32
  }
}

module attributes {stable_mosaic.version = 11 : i64} {
  func.func @_linear_kernel(%arg0: i32, %arg1: i32, %arg2: i32, %arg3: memref<16x256xbf16, #tpu.memory_space<vmem>>, %arg4: memref<256x64xbf16, #tpu.memory_space<vmem>>, %arg5: memref<1x64xf32, #tpu.memory_space<vmem>>, %arg6: memref<16x64xf32, #tpu.memory_space<vmem>>, %arg7: memref<16x64xf32, #tpu.memory_space<vmem>>, %arg8: memref<16x64xf32, #tpu.memory_space<vmem>>) attributes {dimension_semantics = [#tpu.dimension_semantics<parallel>, #tpu.dimension_semantics<parallel>, #tpu.dimension_semantics<arbitrary>], iteration_bounds = array<i64: 1, 1, 1>, scalar_prefetch = 0 : i64, scratch_operands = 1 : i64, tpu.core_type = #tpu.core_type<tc>, window_params = [{transform_indices = @transform_0, window_bounds = array<i64: 16, 256>}, {transform_indices = @transform_1, window_bounds = array<i64: 256, 64>}, {transform_indices = @transform_2, window_bounds = array<i64: 1, 64>}, {transform_indices = @transform_3, window_bounds = array<i64: 16, 64>}, {transform_indices = @transform_4, window_bounds = array<i64: 16, 64>}]} {
    %c0_i32 = arith.constant 0 : i32
    %0 = arith.cmpi eq, %arg2, %c0_i32 : i32
    %1 = arith.extui %0 : i1 to i32
    %c0_i32_0 = arith.constant 0 : i32
    %2 = arith.cmpi ne, %1, %c0_i32_0 : i32
    scf.if %2 {
      %cst_10 = arith.constant 0.000000e+00 : f32
      %12 = vector.broadcast %cst_10 : f32 to vector<16x64xf32>
      %c0_11 = arith.constant 0 : index
      %c0_12 = arith.constant 0 : index
      %13 = vector.load %arg8[%c0_11, %c0_12] : memref<16x64xf32, #tpu.memory_space<vmem>>, vector<16x64xf32>
      tpu.vector_store %arg8[%c0_11, %c0_12], %12 {strides = array<i32>} : memref<16x64xf32, #tpu.memory_space<vmem>>, vector<16x64xf32>,
    } else {
    }
    %c0 = arith.constant 0 : index
    %c0_1 = arith.constant 0 : index
    %3 = vector.load %arg8[%c0, %c0_1] : memref<16x64xf32, #tpu.memory_space<vmem>>, vector<16x64xf32>
    %c0_2 = arith.constant 0 : index
    %c0_3 = arith.constant 0 : index
    %4 = vector.load %arg3[%c0_2, %c0_3] : memref<16x256xbf16, #tpu.memory_space<vmem>>, vector<16x256xbf16>
    %c0_4 = arith.constant 0 : index
    %c0_5 = arith.constant 0 : index
    %5 = vector.load %arg4[%c0_4, %c0_5] : memref<256x64xbf16, #tpu.memory_space<vmem>>, vector<256x64xbf16>
    %cst = arith.constant dense<0.000000e+00> : vector<16x64xf32>
    %6 = tpu.matmul %4, %5, %cst {dimension_numbers = #tpu.dot_dimension_numbers<[1], [0], [0], [1], [0, 0, 1, 1], [], []>} : vector<16x256xbf16>, vector<256x64xbf16>, vector<16x64xf32> -> vector<16x64xf32>
    %7 = arith.addf %3, %6 : vector<16x64xf32>
    %c0_6 = arith.constant 0 : index
    %c0_7 = arith.constant 0 : index
    %8 = vector.load %arg8[%c0_6, %c0_7] : memref<16x64xf32, #tpu.memory_space<vmem>>, vector<16x64xf32>
    tpu.vector_store %arg8[%c0_6, %c0_7], %7 {strides = array<i32>} : memref<16x64xf32, #tpu.memory_space<vmem>>, vector<16x64xf32>,
    %c0_i32_8 = arith.constant 0 : i32
    %9 = arith.cmpi eq, %arg2, %c0_i32_8 : i32
    %10 = arith.extui %9 : i1 to i32
    %c0_i32_9 = arith.constant 0 : i32
    %11 = arith.cmpi ne, %10, %c0_i32_9 : i32
    scf.if %11 {
      %c0_10 = arith.constant 0 : index
      %c0_11 = arith.constant 0 : index
      %12 = vector.load %arg8[%c0_10, %c0_11] : memref<16x64xf32, #tpu.memory_space<vmem>>, vector<16x64xf32>
      %c0_12 = arith.constant 0 : index
      %c0_13 = arith.constant 0 : index
      %13 = vector.load %arg5[%c0_12, %c0_13] : memref<1x64xf32, #tpu.memory_space<vmem>>, vector<1x64xf32>
      %14 = vector.broadcast %13 : vector<1x64xf32> to vector<16x64xf32>
      %15 = arith.addf %12, %14 : vector<16x64xf32>
      %c0_14 = arith.constant 0 : index
      %c0_15 = arith.constant 0 : index
      %16 = vector.load %arg6[%c0_14, %c0_15] : memref<16x64xf32, #tpu.memory_space<vmem>>, vector<16x64xf32>
      %17 = arith.addf %15, %16 : vector<16x64xf32>
      %c0_16 = arith.constant 0 : index
      %c0_17 = arith.constant 0 : index
      %18 = vector.load %arg7[%c0_16, %c0_17] : memref<16x64xf32, #tpu.memory_space<vmem>>, vector<16x64xf32>
      tpu.vector_store %arg7[%c0_16, %c0_17], %17 {strides = array<i32>} : memref<16x64xf32, #tpu.memory_space<vmem>>, vector<16x64xf32>,
    } else {
    }
    return
  }
  func.func @transform_0(%arg0: i32, %arg1: i32, %arg2: i32) -> (i32, i32) {
    %c0_i32 = arith.constant 0 : i32
    return %arg0, %arg2 : i32, i32
  }
  func.func @transform_1(%arg0: i32, %arg1: i32, %arg2: i32) -> (i32, i32) {
    %c0_i32 = arith.constant 0 : i32
    return %arg2, %arg1 : i32, i32
  }
  func.func @transform_2(%arg0: i32, %arg1: i32, %arg2: i32) -> (i32, i32) {
    %c0_i32 = arith.constant 0 : i32
    %c0_i32_0 = arith.constant 0 : i32
    return %c0_i32, %arg1 : i32, i32
  }
  func.func @transform_3(%arg0: i32, %arg1: i32, %arg2: i32) -> (i32, i32) {
    %c0_i32 = arith.constant 0 : i32
    return %arg0, %arg1 : i32, i32
  }
  func.func @transform_4(%arg0: i32, %arg1: i32, %arg2: i32) -> (i32, i32) {
    %c0_i32 = arith.constant 0 : i32
    return %arg0, %arg1 : i32, i32
  }
}

module attributes {stable_mosaic.version = 11 : i64} {
  func.func @_ln_linear_kernel(%arg0: i32, %arg1: i32, %arg2: memref<16x64xf32, #tpu.memory_space<vmem>>, %arg3: memref<1x64xf32, #tpu.memory_space<vmem>>, %arg4: memref<1x64xf32, #tpu.memory_space<vmem>>, %arg5: memref<64x256xbf16, #tpu.memory_space<vmem>>, %arg6: memref<1x256xf32, #tpu.memory_space<vmem>>, %arg7: memref<16x256xbf16, #tpu.memory_space<vmem>>) attributes {dimension_semantics = [#tpu.dimension_semantics<parallel>, #tpu.dimension_semantics<parallel>], iteration_bounds = array<i64: 1, 1>, scalar_prefetch = 0 : i64, scratch_operands = 0 : i64, tpu.core_type = #tpu.core_type<tc>, window_params = [{transform_indices = @transform_0, window_bounds = array<i64: 16, 64>}, {pipeline_mode = #tpu.pipeline_mode<synchronous>, transform_indices = @transform_1, window_bounds = array<i64: 1, 64>}, {pipeline_mode = #tpu.pipeline_mode<synchronous>, transform_indices = @transform_2, window_bounds = array<i64: 1, 64>}, {transform_indices = @transform_3, window_bounds = array<i64: 64, 256>}, {transform_indices = @transform_4, window_bounds = array<i64: 1, 256>}, {transform_indices = @transform_5, window_bounds = array<i64: 16, 256>}]} {
    %c0 = arith.constant 0 : index
    %c0_0 = arith.constant 0 : index
    %0 = vector.load %arg2[%c0, %c0_0] : memref<16x64xf32, #tpu.memory_space<vmem>>, vector<16x64xf32>
    %cst = arith.constant dense<0.000000e+00> : vector<16xf32>
    %1 = vector.multi_reduction <add>, %0, %cst [1] : vector<16x64xf32> to vector<16xf32>
    %2 = vector.shape_cast %1 : vector<16xf32> to vector<16x1xf32>
    %cst_1 = arith.constant 6.400000e+01 : f32
    %3 = vector.broadcast %cst_1 : f32 to vector<16x1xf32>
    %4 = arith.divf %2, %3 : vector<16x1xf32>
    %5 = vector.broadcast %4 : vector<16x1xf32> to vector<16x64xf32>
    %6 = arith.subf %0, %5 : vector<16x64xf32>
    %7 = arith.mulf %6, %6 : vector<16x64xf32>
    %cst_2 = arith.constant dense<0.000000e+00> : vector<16xf32>
    %8 = vector.multi_reduction <add>, %7, %cst_2 [1] : vector<16x64xf32> to vector<16xf32>
    %9 = vector.shape_cast %8 : vector<16xf32> to vector<16x1xf32>
    %cst_3 = arith.constant 6.400000e+01 : f32
    %10 = vector.broadcast %cst_3 : f32 to vector<16x1xf32>
    %11 = arith.divf %9, %10 : vector<16x1xf32>
    %cst_4 = arith.constant 9.99999997E-7 : f32
    %12 = vector.broadcast %cst_4 : f32 to vector<16x1xf32>
    %13 = arith.addf %11, %12 : vector<16x1xf32>
    %14 = math.rsqrt %13 : vector<16x1xf32>
    %15 = vector.broadcast %14 : vector<16x1xf32> to vector<16x64xf32>
    %16 = arith.mulf %6, %15 : vector<16x64xf32>
    %c0_5 = arith.constant 0 : index
    %c0_6 = arith.constant 0 : index
    %17 = vector.load %arg3[%c0_5, %c0_6] : memref<1x64xf32, #tpu.memory_space<vmem>>, vector<1x64xf32>
    %18 = vector.broadcast %17 : vector<1x64xf32> to vector<16x64xf32>
    %19 = arith.mulf %16, %18 : vector<16x64xf32>
    %c0_7 = arith.constant 0 : index
    %c0_8 = arith.constant 0 : index
    %20 = vector.load %arg4[%c0_7, %c0_8] : memref<1x64xf32, #tpu.memory_space<vmem>>, vector<1x64xf32>
    %21 = vector.broadcast %20 : vector<1x64xf32> to vector<16x64xf32>
    %22 = arith.addf %19, %21 : vector<16x64xf32>
    %23 = arith.truncf %22 : vector<16x64xf32> to vector<16x64xbf16>
    %c0_9 = arith.constant 0 : index
    %c0_10 = arith.constant 0 : index
    %24 = vector.load %arg5[%c0_9, %c0_10] : memref<64x256xbf16, #tpu.memory_space<vmem>>, vector<64x256xbf16>
    %cst_11 = arith.constant dense<0.000000e+00> : vector<16x256xf32>
    %25 = tpu.matmul %23, %24, %cst_11 {dimension_numbers = #tpu.dot_dimension_numbers<[1], [0], [0], [1], [0, 0, 1, 1], [], []>} : vector<16x64xbf16>, vector<64x256xbf16>, vector<16x256xf32> -> vector<16x256xf32>
    %c0_12 = arith.constant 0 : index
    %c0_13 = arith.constant 0 : index
    %26 = vector.load %arg6[%c0_12, %c0_13] : memref<1x256xf32, #tpu.memory_space<vmem>>, vector<1x256xf32>
    %27 = vector.broadcast %26 : vector<1x256xf32> to vector<16x256xf32>
    %28 = arith.addf %25, %27 : vector<16x256xf32>
    %29 = arith.mulf %28, %28 : vector<16x256xf32>
    %30 = arith.mulf %28, %29 : vector<16x256xf32>
    %cst_14 = arith.constant 4.471500e-02 : f32
    %31 = vector.broadcast %cst_14 : f32 to vector<16x256xf32>
    %32 = arith.mulf %31, %30 : vector<16x256xf32>
    %33 = arith.addf %28, %32 : vector<16x256xf32>
    %cst_15 = arith.constant 0.797884583 : f32
    %34 = vector.broadcast %cst_15 : f32 to vector<16x256xf32>
    %35 = arith.mulf %34, %33 : vector<16x256xf32>
    %36 = math.tanh %35 : vector<16x256xf32>
    %cst_16 = arith.constant 1.000000e+00 : f32
    %37 = vector.broadcast %cst_16 : f32 to vector<16x256xf32>
    %38 = arith.addf %37, %36 : vector<16x256xf32>
    %cst_17 = arith.constant 5.000000e-01 : f32
    %39 = vector.broadcast %cst_17 : f32 to vector<16x256xf32>
    %40 = arith.mulf %39, %38 : vector<16x256xf32>
    %41 = arith.mulf %28, %40 : vector<16x256xf32>
    %42 = arith.truncf %41 : vector<16x256xf32> to vector<16x256xbf16>
    %c0_18 = arith.constant 0 : index
    %c0_19 = arith.constant 0 : index
    %43 = vector.load %arg7[%c0_18, %c0_19] : memref<16x256xbf16, #tpu.memory_space<vmem>>, vector<16x256xbf16>
    tpu.vector_store %arg7[%c0_18, %c0_19], %42 {strides = array<i32>} : memref<16x256xbf16, #tpu.memory_space<vmem>>, vector<16x256xbf16>,
    return
  }
  func.func @transform_0(%arg0: i32, %arg1: i32) -> (i32, i32) {
    %c0_i32 = arith.constant 0 : i32
    %c0_i32_0 = arith.constant 0 : i32
    return %arg0, %c0_i32 : i32, i32
  }
  func.func @transform_1(%arg0: i32, %arg1: i32) -> (i32, i32) {
    %c0_i32 = arith.constant 0 : i32
    %c0_i32_0 = arith.constant 0 : i32
    %c0_i32_1 = arith.constant 0 : i32
    return %c0_i32, %c0_i32_0 : i32, i32
  }
  func.func @transform_2(%arg0: i32, %arg1: i32) -> (i32, i32) {
    %c0_i32 = arith.constant 0 : i32
    %c0_i32_0 = arith.constant 0 : i32
    %c0_i32_1 = arith.constant 0 : i32
    return %c0_i32, %c0_i32_0 : i32, i32
  }
  func.func @transform_3(%arg0: i32, %arg1: i32) -> (i32, i32) {
    %c0_i32 = arith.constant 0 : i32
    %c0_i32_0 = arith.constant 0 : i32
    return %c0_i32, %arg1 : i32, i32
  }
  func.func @transform_4(%arg0: i32, %arg1: i32) -> (i32, i32) {
    %c0_i32 = arith.constant 0 : i32
    %c0_i32_0 = arith.constant 0 : i32
    return %c0_i32, %arg1 : i32, i32
  }
  func.func @transform_5(%arg0: i32, %arg1: i32) -> (i32, i32) {
    %c0_i32 = arith.constant 0 : i32
    return %arg0, %arg1 : i32, i32
  }
}

</mosaic_0001>

<llo_original>
// kernel: ast_forward.12
$region0: #{ast_forward.12}
  #allocation0 [shape = 'u32[]', space=smem, size = 0x4, offset = 0x4, fixed_abs, tag = 'smem constant byte address 0x4 - core index']
  #allocation1 [shape = 'u32[144,128]{1,0:T(1,128)}', space=vmem, size = 0x12000, scoped, tag = 'internal scratch']
  #allocation2 [shape = 'f32[14,64]{1,0:T(8,128)}', space=vmem, size = 0x2000, scoped, tag = 'scratch operand']
  %s0 = inlined_call_operand.vmem [shape: f32[14,32], index: 0, kind: input, shape index: {}]
  %s1 = inlined_call_operand.vmem [shape: bf16[32,64], index: 1, kind: input, shape index: {}]
  %s2 = inlined_call_operand.vmem [shape: f32[1,64], index: 2, kind: input, shape index: {}]
  %s3 = inlined_call_operand.vmem [shape: f32[14,64], index: 3, kind: output, shape index: {}]
  %s4 = sld [smem:[#allocation0]]
  $region30: #{ast_forward.12} parent=0
    _
  %s6 = ssub.s32 1, %s4
  %s7 = scalar_select 0, %s6, %s4
  // Predicated region
  $region2: #{ast_forward.12} parent=0 // pred_check
    _
  $region3: #{ast_forward.12} parent=0 // pred_check_branch
    %9 = sbr.rel (0) target = $region5
  $region4: #{ast_forward.12} parent=0 // pred_region
    _
  $region5: #{ast_forward.12} parent=0 // pred_fallthru
    _
  // Predicated region
  $region6: #{ast_forward.12} parent=0 // pred_check
    _
  $region7: #{ast_forward.12} parent=0 // pred_check_branch
    %11 = sbr.rel (0) target = $region9
  $region8: #{ast_forward.12} parent=0 // pred_region
    _
  $region9: #{ast_forward.12} parent=0 // pred_fallthru
    _
  // Predicated region
  $region10: #{ast_forward.12} parent=0 // pred_check
    _
  $region11: #{ast_forward.12} parent=0 // pred_check_branch
    %13 = sbr.rel (0) target = $region13
  $region12: #{ast_forward.12} parent=0 // pred_region
    _
  $region13: #{ast_forward.12} parent=0 // pred_fallthru
    _
  %p15 = scmp.eq.s32.totalorder 0, 0
  // Predicated region
  $region14: #{ast_forward.12} parent=0 // pred_check
    %p16 = pneg %p15
  $region15: #{ast_forward.12} parent=0 // pred_check_branch
    %18 = sbr.rel (%p16) target = $region17
  $region16: #{ast_forward.12} parent=0 // pred_region
    %vm19 = vcmask 523264
    %20 = vst.msk [vmem:[#allocation2] sm:$0xff] %vm19, 0.0
    %vm21 = vcmask 521216
    %22 = vst.msk [vmem:[#allocation2 + $0x8] sm:$0x3f] %vm21, 0.0
  $region17: #{ast_forward.12} parent=0 // pred_fallthru
    _
  %v23 = vld [vmem:[#allocation2] sm:$0xff]
  %v24 = vld [vmem:[#allocation2 + $0x8] sm:$0x3f]
  %v25 = vld [vmem:[%s0] sm:$0xff]
  %v26 = vld [vmem:[%s0 + $0x8] sm:$0x3f]
  %v27 = vpack.c.bf16 %v26, %v25
  %v28 = vld [vmem:[%s1] sm:$0xf]
  %v29 = vld [vmem:[%s1 + $0x4] sm:$0xf]
  %v30 = vld [vmem:[%s1 + $0x8] sm:$0xf]
  %v31 = vld [vmem:[%s1 + $0xc] sm:$0xf]
  %v36 = vunpack.c.l.b16 %v28
  %v37 = vunpack.c.l.b16 %v29
  %v38 = vunpack.c.l.b16 %v30
  %v39 = vunpack.c.l.b16 %v31
  %v40 = vpack.c.b16 %v37, %v36
  %v41 = vpack.c.b16 %v39, %v38
  %vm44 = vcmask 261120
  %v46 = vsel %vm44, %v27, 0
  %48 = vmatprep.subr.bf16.mxu0 0
  %49 = vmatpush1.bf16.msra.mxu0 %v40
  %50 = vmatprep.subr.bf16.mxu0 0
  %51 = vmatpush1.bf16.msra.mxu0 %v41
  %52 = vmatprep.subr.bf16.mxu0 0
  %53 = vmatpush1.bf16.msra.mxu0 0
  %54 = vmatprep.subr.bf16.mxu0 0
  %55 = vmatpush1.bf16.msra.mxu0 0
  %56 = vmatprep.subr.bf16.mxu0 0
  %57 = vmatpush1.bf16.msra.mxu0 0
  %58 = vmatprep.subr.bf16.mxu0 0
  %59 = vmatpush1.bf16.msra.mxu0 0
  %60 = vmatprep.subr.bf16.mxu0 0
  %61 = vmatpush1.bf16.msra.mxu0 0
  %62 = vmatprep.subr.bf16.mxu0 0
  %63 = vmatpush1.bf16.msra.mxu0 0
  %64 = vmatprep.subr.bf16.mxu0 0
  %65 = vmatpush1.bf16.msra.mxu0 0
  %66 = vmatprep.subr.bf16.mxu0 0
  %67 = vmatpush1.bf16.msra.mxu0 0
  %68 = vmatprep.subr.bf16.mxu0 0
  %69 = vmatpush1.bf16.msra.mxu0 0
  %70 = vmatprep.subr.bf16.mxu0 0
  %71 = vmatpush1.bf16.msra.mxu0 0
  %72 = vmatprep.subr.bf16.mxu0 0
  %73 = vmatpush1.bf16.msra.mxu0 0
  %74 = vmatprep.subr.bf16.mxu0 0
  %75 = vmatpush1.bf16.msra.mxu0 0
  %76 = vmatprep.subr.bf16.mxu0 0
  %77 = vmatpush1.bf16.msra.mxu0 0
  %78 = vmatprep.subr.bf16.mxu0 0
  %79 = vmatpush1.bf16.msra.mxu0 0
  %80 = vmatprep.mubr.bf16.mxu0 0
  %81 = vmatmul.mubr.bf16.gmra.mrb[0].mxu0 %v46
  %v82 = vpop.f32.mrb[0].mxu0
  %v83 = vadd.f32 0.0, %v82
  %v84 = vpop.f32.mrb[0].mxu0
  %v85 = vpop.f32.mrb[0].mxu0
  %v86 = vadd.f32 0.0, %v85
  %v87 = vpop.f32.mrb[0].mxu0
  %88 = vdwg.mxu0
  %v89 = vadd.f32 %v23, %v83
  %v90 = vadd.f32 %v24, %v86
  %vm91 = vcmask 523264
  %92 = vst.msk [vmem:[#allocation2] sm:$0xff] %vm91, %v89
  %vm93 = vcmask 521216
  %94 = vst.msk [vmem:[#allocation2 + $0x8] sm:$0x3f] %vm93, %v90
  // Predicated region
  $region18: #{ast_forward.12} parent=0 // pred_check
    %p95 = pneg %p15
  $region19: #{ast_forward.12} parent=0 // pred_check_branch
    %97 = sbr.rel (%p95) target = $region21
  $region20: #{ast_forward.12} parent=0 // pred_region
    %v98 = vld [vmem:[#allocation2] sm:$0xff]
    %v99 = vld [vmem:[#allocation2 + $0x8] sm:$0x3f]
    %v100 = vld [vmem:[%s2] sm:$0x1]
    %v102 = vlaneseq
    %v103 = vshrl.u32 %v102, 7
    %v104 = vsub.s32 0, %v103
    %v105 = vrot.slane %v100, %v104
    %v107 = vadd.f32 %v98, %v105
    %v108 = vadd.f32 %v99, %v105
    %109 = vst.msk [vmem:[%s3] sm:$0xff] %vm91, %v107
    %110 = vst.msk [vmem:[%s3 + $0x8] sm:$0x3f] %vm93, %v108
  $region21: #{ast_forward.12} parent=0 // pred_fallthru
    _
  // Predicated region
  $region22: #{ast_forward.12} parent=0 // pred_check
    _
  $region23: #{ast_forward.12} parent=0 // pred_check_branch
    %112 = sbr.rel (0) target = $region25
  $region24: #{ast_forward.12} parent=0 // pred_region
    _
  $region25: #{ast_forward.12} parent=0 // pred_fallthru
    _
  // Predicated region
  $region26: #{ast_forward.12} parent=0 // pred_check
    _
  $region27: #{ast_forward.12} parent=0 // pred_check_branch
    %114 = sbr.rel (0) target = $region29
  $region28: #{ast_forward.12} parent=0 // pred_region
    _
  $region29: #{ast_forward.12} parent=0 // pred_fallthru
    _

// kernel: ast_forward.15
$region0: #{ast_forward.15}
  #allocation0 [shape = 'u32[]', space=smem, size = 0x4, offset = 0x4, fixed_abs, tag = 'smem constant byte address 0x4 - core index']
  #allocation1 [shape = 'u32[144,128]{1,0:T(1,128)}', space=vmem, size = 0x12000, scoped, tag = 'internal scratch']
  #allocation2 [shape = 'f32[16,64]{1,0:T(8,128)}', space=vmem, size = 0x2000, scoped, tag = 'scratch operand']
  %s0 = inlined_call_operand.vmem [shape: bf16[16,64], index: 0, kind: input, shape index: {}]
  %s1 = inlined_call_operand.vmem [shape: bf16[64,64], index: 1, kind: input, shape index: {}]
  %s2 = inlined_call_operand.vmem [shape: f32[1,64], index: 2, kind: input, shape index: {}]
  %s3 = inlined_call_operand.vmem [shape: f32[16,64], index: 3, kind: input, shape index: {}]
  %s4 = inlined_call_operand.vmem [shape: f32[16,64], index: 4, kind: output, shape index: {}]
  %s5 = sld [smem:[#allocation0]]
  $region34: #{ast_forward.15} parent=0
    _
  %s7 = ssub.s32 1, %s5
  %s8 = scalar_select 0, %s7, %s5
  // Predicated region
  $region2: #{ast_forward.15} parent=0 // pred_check
    _
  $region3: #{ast_forward.15} parent=0 // pred_check_branch
    %10 = sbr.rel (0) target = $region5
  $region4: #{ast_forward.15} parent=0 // pred_region
    _
  $region5: #{ast_forward.15} parent=0 // pred_fallthru
    _
  // Predicated region
  $region6: #{ast_forward.15} parent=0 // pred_check
    _
  $region7: #{ast_forward.15} parent=0 // pred_check_branch
    %12 = sbr.rel (0) target = $region9
  $region8: #{ast_forward.15} parent=0 // pred_region
    _
  $region9: #{ast_forward.15} parent=0 // pred_fallthru
    _
  // Predicated region
  $region10: #{ast_forward.15} parent=0 // pred_check
    _
  $region11: #{ast_forward.15} parent=0 // pred_check_branch
    %14 = sbr.rel (0) target = $region13
  $region12: #{ast_forward.15} parent=0 // pred_region
    _
  $region13: #{ast_forward.15} parent=0 // pred_fallthru
    _
  // Predicated region
  $region14: #{ast_forward.15} parent=0 // pred_check
    _
  $region15: #{ast_forward.15} parent=0 // pred_check_branch
    %16 = sbr.rel (0) target = $region17
  $region16: #{ast_forward.15} parent=0 // pred_region
    _
  $region17: #{ast_forward.15} parent=0 // pred_fallthru
    _
  %p18 = scmp.eq.s32.totalorder 0, 0
  // Predicated region
  $region18: #{ast_forward.15} parent=0 // pred_check
    %p19 = pneg %p18
  $region19: #{ast_forward.15} parent=0 // pred_check_branch
    %21 = sbr.rel (%p19) target = $region21
  $region20: #{ast_forward.15} parent=0 // pred_region
    %vm22 = vcmask 523264
    %23 = vst.msk [vmem:[#allocation2] sm:$0xff] %vm22, 0.0
    %24 = vst.msk [vmem:[#allocation2 + $0x8] sm:$0xff] %vm22, 0.0
  $region21: #{ast_forward.15} parent=0 // pred_fallthru
    _
  %v25 = vld [vmem:[#allocation2] sm:$0xff]
  %v26 = vld [vmem:[#allocation2 + $0x8] sm:$0xff]
  %v27 = vld [vmem:[%s0] sm:$0xf]
  %v28 = vld [vmem:[%s0 + $0x4] sm:$0xf]
  %v29 = vld [vmem:[%s1] sm:$0xf]
  %v30 = vld [vmem:[%s1 + $0x4] sm:$0xf]
  %v31 = vld [vmem:[%s1 + $0x8] sm:$0xf]
  %v32 = vld [vmem:[%s1 + $0xc] sm:$0xf]
  %v33 = vld [vmem:[%s1 + $0x10] sm:$0xf]
  %v34 = vld [vmem:[%s1 + $0x14] sm:$0xf]
  %v35 = vld [vmem:[%s1 + $0x18] sm:$0xf]
  %v36 = vld [vmem:[%s1 + $0x1c] sm:$0xf]
  %v39 = vunpack.c.l.b16 %v27
  %v40 = vunpack.c.l.b16 %v28
  %v41 = vpack.c.b16 %v40, %v39
  %v50 = vunpack.c.l.b16 %v29
  %v51 = vunpack.c.l.b16 %v30
  %v52 = vunpack.c.l.b16 %v31
  %v53 = vunpack.c.l.b16 %v32
  %v54 = vunpack.c.l.b16 %v33
  %v55 = vunpack.c.l.b16 %v34
  %v56 = vunpack.c.l.b16 %v35
  %v57 = vunpack.c.l.b16 %v36
  %v58 = vpack.c.b16 %v51, %v50
  %v59 = vpack.c.b16 %v53, %v52
  %v60 = vpack.c.b16 %v55, %v54
  %v61 = vpack.c.b16 %v57, %v56
  %vm66 = vcmask 523264
  %v68 = vsel %vm66, %v41, 0
  %70 = vmatprep.subr.bf16.mxu0 0
  %71 = vmatpush1.bf16.msra.mxu0 %v58
  %72 = vmatprep.subr.bf16.mxu0 0
  %73 = vmatpush1.bf16.msra.mxu0 %v59
  %74 = vmatprep.subr.bf16.mxu0 0
  %75 = vmatpush1.bf16.msra.mxu0 %v60
  %76 = vmatprep.subr.bf16.mxu0 0
  %77 = vmatpush1.bf16.msra.mxu0 %v61
  %78 = vmatprep.subr.bf16.mxu0 0
  %79 = vmatpush1.bf16.msra.mxu0 0
  %80 = vmatprep.subr.bf16.mxu0 0
  %81 = vmatpush1.bf16.msra.mxu0 0
  %82 = vmatprep.subr.bf16.mxu0 0
  %83 = vmatpush1.bf16.msra.mxu0 0
  %84 = vmatprep.subr.bf16.mxu0 0
  %85 = vmatpush1.bf16.msra.mxu0 0
  %86 = vmatprep.subr.bf16.mxu0 0
  %87 = vmatpush1.bf16.msra.mxu0 0
  %88 = vmatprep.subr.bf16.mxu0 0
  %89 = vmatpush1.bf16.msra.mxu0 0
  %90 = vmatprep.subr.bf16.mxu0 0
  %91 = vmatpush1.bf16.msra.mxu0 0
  %92 = vmatprep.subr.bf16.mxu0 0
  %93 = vmatpush1.bf16.msra.mxu0 0
  %94 = vmatprep.subr.bf16.mxu0 0
  %95 = vmatpush1.bf16.msra.mxu0 0
  %96 = vmatprep.subr.bf16.mxu0 0
  %97 = vmatpush1.bf16.msra.mxu0 0
  %98 = vmatprep.subr.bf16.mxu0 0
  %99 = vmatpush1.bf16.msra.mxu0 0
  %100 = vmatprep.subr.bf16.mxu0 0
  %101 = vmatpush1.bf16.msra.mxu0 0
  %102 = vmatprep.mubr.bf16.mxu0 0
  %103 = vmatmul.mubr.bf16.gmra.mrb[0].mxu0 %v68
  %v104 = vpop.f32.mrb[0].mxu0
  %v105 = vadd.f32 0.0, %v104
  %v106 = vpop.f32.mrb[0].mxu0
  %v107 = vpop.f32.mrb[0].mxu0
  %v108 = vadd.f32 0.0, %v107
  %v109 = vpop.f32.mrb[0].mxu0
  %110 = vdwg.mxu0
  %v111 = vadd.f32 %v25, %v105
  %v112 = vadd.f32 %v26, %v108
  %113 = vst.msk [vmem:[#allocation2] sm:$0xff] %vm66, %v111
  %114 = vst.msk [vmem:[#allocation2 + $0x8] sm:$0xff] %vm66, %v112
  // Predicated region
  $region22: #{ast_forward.15} parent=0 // pred_check
    %p115 = pneg %p18
  $region23: #{ast_forward.15} parent=0 // pred_check_branch
    %117 = sbr.rel (%p115) target = $region25
  $region24: #{ast_forward.15} parent=0 // pred_region
    %v118 = vld [vmem:[#allocation2] sm:$0xff]
    %v119 = vld [vmem:[#allocation2 + $0x8] sm:$0xff]
    %v120 = vld [vmem:[%s2] sm:$0x1]
    %v122 = vlaneseq
    %v123 = vshrl.u32 %v122, 7
    %v124 = vsub.s32 0, %v123
    %v125 = vrot.slane %v120, %v124
    %v127 = vadd.f32 %v118, %v125
    %v128 = vadd.f32 %v119, %v125
    %v129 = vld [vmem:[%s3] sm:$0xff]
    %v130 = vld [vmem:[%s3 + $0x8] sm:$0xff]
    %v131 = vadd.f32 %v127, %v129
    %v132 = vadd.f32 %v128, %v130
    %133 = vst.msk [vmem:[%s4] sm:$0xff] %vm66, %v131
    %134 = vst.msk [vmem:[%s4 + $0x8] sm:$0xff] %vm66, %v132
  $region25: #{ast_forward.15} parent=0 // pred_fallthru
    _
  // Predicated region
  $region26: #{ast_forward.15} parent=0 // pred_check
    _
  $region27: #{ast_forward.15} parent=0 // pred_check_branch
    %136 = sbr.rel (0) target = $region29
  $region28: #{ast_forward.15} parent=0 // pred_region
    _
  $region29: #{ast_forward.15} parent=0 // pred_fallthru
    _
  // Predicated region
  $region30: #{ast_forward.15} parent=0 // pred_check
    _
  $region31: #{ast_forward.15} parent=0 // pred_check_branch
    %138 = sbr.rel (0) target = $region33
  $region32: #{ast_forward.15} parent=0 // pred_region
    _
  $region33: #{ast_forward.15} parent=0 // pred_fallthru
    _

// kernel: ast_forward.13
$region0: #{ast_forward.13}
  #allocation0 [shape = 'u32[]', space=smem, size = 0x4, offset = 0x4, fixed_abs, tag = 'smem constant byte address 0x4 - core index']
  #allocation1 [shape = 'u32[144,128]{1,0:T(1,128)}', space=vmem, size = 0x12000, scoped, tag = 'internal scratch']
  %s0 = inlined_call_operand.vmem [shape: f32[16,64], index: 0, kind: input, shape index: {}]
  %s1 = inlined_call_operand.vmem [shape: f32[1,64], index: 1, kind: input, shape index: {}]
  %s2 = inlined_call_operand.vmem [shape: f32[1,64], index: 2, kind: input, shape index: {}]
  %s3 = inlined_call_operand.vmem [shape: bf16[64,192], index: 3, kind: input, shape index: {}]
  %s4 = inlined_call_operand.vmem [shape: f32[1,192], index: 4, kind: input, shape index: {}]
  %s5 = inlined_call_operand.vmem [shape: bf16[16,192], index: 5, kind: output, shape index: {}]
  %s6 = sld [smem:[#allocation0]]
  $region30: #{ast_forward.13} parent=0
    _
  %s8 = ssub.s32 1, %s6
  %s9 = scalar_select 0, %s8, %s6
  // Predicated region
  $region2: #{ast_forward.13} parent=0 // pred_check
    _
  $region3: #{ast_forward.13} parent=0 // pred_check_branch
    %11 = sbr.rel (0) target = $region5
  $region4: #{ast_forward.13} parent=0 // pred_region
    _
  $region5: #{ast_forward.13} parent=0 // pred_fallthru
    _
  // Predicated region
  $region6: #{ast_forward.13} parent=0 // pred_check
    _
  $region7: #{ast_forward.13} parent=0 // pred_check_branch
    %13 = sbr.rel (0) target = $region9
  $region8: #{ast_forward.13} parent=0 // pred_region
    _
  $region9: #{ast_forward.13} parent=0 // pred_fallthru
    _
  // Predicated region
  $region10: #{ast_forward.13} parent=0 // pred_check
    _
  $region11: #{ast_forward.13} parent=0 // pred_check_branch
    %15 = sbr.rel (0) target = $region13
  $region12: #{ast_forward.13} parent=0 // pred_region
    _
  $region13: #{ast_forward.13} parent=0 // pred_fallthru
    _
  // Predicated region
  $region14: #{ast_forward.13} parent=0 // pred_check
    _
  $region15: #{ast_forward.13} parent=0 // pred_check_branch
    %17 = sbr.rel (0) target = $region17
  $region16: #{ast_forward.13} parent=0 // pred_region
    _
  $region17: #{ast_forward.13} parent=0 // pred_fallthru
    _
  // Predicated region
  $region18: #{ast_forward.13} parent=0 // pred_check
    _
  $region19: #{ast_forward.13} parent=0 // pred_check_branch
    %19 = sbr.rel (0) target = $region21
  $region20: #{ast_forward.13} parent=0 // pred_region
    _
  $region21: #{ast_forward.13} parent=0 // pred_fallthru
    _
  %v21 = vld [vmem:[%s0] sm:$0xff]
  %v22 = vld [vmem:[%s0 + $0x8] sm:$0xff]
  %vm23 = vcmask 523264
  %v24 = vsel %vm23, %v21, 0.0
  %25 = vadd.xlane.f32.xlu0 %v24
  %v26 = vpop.xlane.xlu0 %25
  %v27 = vsel %vm23, %v22, 0.0
  %28 = vadd.xlane.f32.xlu0 %v27
  %v29 = vpop.xlane.xlu0 %28
  %v30 = vrcp.pop 64.0
  %v31 = vmul.f32 %v26, %v30
  %v32 = vmul.f32 %v29, %v30
  %v33 = vsub.f32 %v21, %v31
  %v34 = vsub.f32 %v22, %v32
  %v35 = vmul.f32 %v33, %v33
  %v36 = vmul.f32 %v34, %v34
  %v37 = vsel %vm23, %v35, 0.0
  %38 = vadd.xlane.f32.xlu0 %v37
  %v39 = vpop.xlane.xlu0 %38
  %v40 = vsel %vm23, %v36, 0.0
  %41 = vadd.xlane.f32.xlu0 %v40
  %v42 = vpop.xlane.xlu0 %41
  %v43 = vmul.f32 %v39, %v30
  %v44 = vmul.f32 %v42, %v30
  %v45 = vadd.f32 %v43, 1e-06
  %v46 = vadd.f32 %v44, 1e-06
  %v47 = vrsqrt.pop %v45
  %v48 = vrsqrt.pop %v46
  %v49 = vmul.f32 %v33, %v47
  %v50 = vmul.f32 %v34, %v48
  %v51 = vld [vmem:[%s1] sm:$0x1]
  %v53 = vlaneseq
  %v54 = vshrl.u32 %v53, 7
  %v55 = vsub.s32 0, %v54
  %v56 = vrot.slane %v51, %v55
  %v58 = vmul.f32 %v49, %v56
  %v59 = vmul.f32 %v50, %v56
  %v60 = vld [vmem:[%s2] sm:$0x1]
  %v62 = vlaneseq
  %v63 = vshrl.u32 %v62, 7
  %v64 = vsub.s32 0, %v63
  %v65 = vrot.slane %v60, %v64
  %v67 = vadd.f32 %v58, %v65
  %v68 = vadd.f32 %v59, %v65
  %v69 = vpack.c.bf16 %v68, %v67
  %v70 = vld [vmem:[%s3] sm:$0xff]
  %v71 = vld [vmem:[%s3 + $0x8] sm:$0xff]
  %v72 = vld [vmem:[%s3 + $0x10] sm:$0xff]
  %v73 = vld [vmem:[%s3 + $0x18] sm:$0xff]
  %v74 = vld [vmem:[%s3 + $0x20] sm:$0xff]
  %v75 = vld [vmem:[%s3 + $0x28] sm:$0xff]
  %v76 = vld [vmem:[%s3 + $0x30] sm:$0xff]
  %v77 = vld [vmem:[%s3 + $0x38] sm:$0xff]
  %v78 = vld [vmem:[%s4] sm:$0x3]
  %v80 = vlaneseq
  %v81 = vshrl.u32 %v80, 7
  %v82 = vsub.s32 0, %v81
  %v83 = vrot.slane %v78, %v82
  %v84 = vlaneseq
  %v85 = vshrl.u32 %v84, 7
  %v86 = vsub.s32 1, %v85
  %v87 = vrot.slane %v78, %v86
  %v98 = vunpack.c.l.b16 %v70
  %v99 = vunpack.c.h.b16 %v70
  %v100 = vunpack.c.l.b16 %v71
  %v101 = vunpack.c.h.b16 %v71
  %v102 = vunpack.c.l.b16 %v72
  %v103 = vunpack.c.h.b16 %v72
  %v104 = vunpack.c.l.b16 %v73
  %v105 = vunpack.c.h.b16 %v73
  %v106 = vunpack.c.l.b16 %v74
  %v107 = vunpack.c.h.b16 %v74
  %v108 = vunpack.c.l.b16 %v75
  %v109 = vunpack.c.h.b16 %v75
  %v110 = vunpack.c.l.b16 %v76
  %v111 = vunpack.c.h.b16 %v76
  %v112 = vunpack.c.l.b16 %v77
  %v113 = vunpack.c.h.b16 %v77
  %v114 = vpack.c.b16 %v100, %v98
  %v115 = vpack.c.b16 %v101, %v99
  %v116 = vpack.c.b16 %v104, %v102
  %v117 = vpack.c.b16 %v105, %v103
  %v118 = vpack.c.b16 %v108, %v106
  %v119 = vpack.c.b16 %v109, %v107
  %v120 = vpack.c.b16 %v112, %v110
  %v121 = vpack.c.b16 %v113, %v111
  %v131 = vsel %vm23, %v69, 0
  %133 = vmatprep.subr.bf16.mxu0 %v115
  %134 = vmatpush1.bf16.msra.mxu0 %v114
  %135 = vmatprep.subr.bf16.mxu0 %v117
  %136 = vmatpush1.bf16.msra.mxu0 %v116
  %137 = vmatprep.subr.bf16.mxu0 %v119
  %138 = vmatpush1.bf16.msra.mxu0 %v118
  %139 = vmatprep.subr.bf16.mxu0 %v121
  %140 = vmatpush1.bf16.msra.mxu0 %v120
  %141 = vmatprep.subr.bf16.mxu0 0
  %142 = vmatpush1.bf16.msra.mxu0 0
  %143 = vmatprep.subr.bf16.mxu0 0
  %144 = vmatpush1.bf16.msra.mxu0 0
  %145 = vmatprep.subr.bf16.mxu0 0
  %146 = vmatpush1.bf16.msra.mxu0 0
  %147 = vmatprep.subr.bf16.mxu0 0
  %148 = vmatpush1.bf16.msra.mxu0 0
  %149 = vmatprep.subr.bf16.mxu0 0
  %150 = vmatpush1.bf16.msra.mxu0 0
  %151 = vmatprep.subr.bf16.mxu0 0
  %152 = vmatpush1.bf16.msra.mxu0 0
  %153 = vmatprep.subr.bf16.mxu0 0
  %154 = vmatpush1.bf16.msra.mxu0 0
  %155 = vmatprep.subr.bf16.mxu0 0
  %156 = vmatpush1.bf16.msra.mxu0 0
  %157 = vmatprep.subr.bf16.mxu0 0
  %158 = vmatpush1.bf16.msra.mxu0 0
  %159 = vmatprep.subr.bf16.mxu0 0
  %160 = vmatpush1.bf16.msra.mxu0 0
  %161 = vmatprep.subr.bf16.mxu0 0
  %162 = vmatpush1.bf16.msra.mxu0 0
  %163 = vmatprep.subr.bf16.mxu0 0
  %164 = vmatpush1.bf16.msra.mxu0 0
  %165 = vmatprep.mubr.bf16.mxu0 0
  %166 = vmatmul.mubr.bf16.gmra.mrb[0].mxu0 %v131
  %v167 = vpop.f32.mrb[0].mxu0
  %v168 = vadd.f32 %v83, %v167
  %v169 = vpop.f32.mrb[0].mxu0
  %v170 = vadd.f32 %v87, %v169
  %v171 = vpop.f32.mrb[0].mxu0
  %v172 = vadd.f32 %v83, %v171
  %v173 = vpop.f32.mrb[0].mxu0
  %v174 = vadd.f32 %v87, %v173
  %175 = vdwg.mxu0
  %v176 = vpack.c.bf16 %v172, %v168
  %v177 = vpack.c.bf16 %v174, %v170
  %v180 = vunpack.c.l.b16 %v176
  %v181 = vunpack.c.l.b16 %v177
  %v182 = vunpack.c.h.b16 %v176
  %v183 = vunpack.c.h.b16 %v177
  %v184 = vpack.c.b16 %v181, %v180
  %v185 = vpack.c.b16 %v183, %v182
  %vm188 = vcmask 1043456
  %vm189 = vcmask 523268
  %vm190 = vmor %vm189, %vm188
  %191 = vst.msk [vmem:[%s5] sm:$0xff] %vm190, %v184
  %192 = vst.msk [vmem:[%s5 + $0x8] sm:$0xff] %vm190, %v185
  // Predicated region
  $region22: #{ast_forward.13} parent=0 // pred_check
    _
  $region23: #{ast_forward.13} parent=0 // pred_check_branch
    %194 = sbr.rel (0) target = $region25
  $region24: #{ast_forward.13} parent=0 // pred_region
    _
  $region25: #{ast_forward.13} parent=0 // pred_fallthru
    _
  // Predicated region
  $region26: #{ast_forward.13} parent=0 // pred_check
    _
  $region27: #{ast_forward.13} parent=0 // pred_check_branch
    %196 = sbr.rel (0) target = $region29
  $region28: #{ast_forward.13} parent=0 // pred_region
    _
  $region29: #{ast_forward.13} parent=0 // pred_fallthru
    _

// kernel: ast_forward.23
$region0: #{ast_forward.23}
  #allocation0 [shape = 'u32[]', space=smem, size = 0x4, offset = 0x4, fixed_abs, tag = 'smem constant byte address 0x4 - core index']
  #allocation1 [shape = 'u32[144,128]{1,0:T(1,128)}', space=vmem, size = 0x12000, scoped, tag = 'internal scratch']
  %s0 = inlined_call_operand.vmem [shape: f32[2,8,64], index: 0, kind: input, shape index: {}]
  %s1 = inlined_call_operand.vmem [shape: f32[1,64], index: 1, kind: input, shape index: {}]
  %s2 = inlined_call_operand.vmem [shape: f32[1,64], index: 2, kind: input, shape index: {}]
  %s3 = inlined_call_operand.vmem [shape: bf16[64,64], index: 3, kind: input, shape index: {}]
  %s4 = inlined_call_operand.vmem [shape: f32[1,64], index: 4, kind: input, shape index: {}]
  %s5 = inlined_call_operand.vmem [shape: f32[64,2], index: 5, kind: input, shape index: {}]
  %s6 = inlined_call_operand.vmem [shape: f32[1,2], index: 6, kind: input, shape index: {}]
  %s7 = inlined_call_operand.vmem [shape: f32[2,2], index: 7, kind: input, shape index: {}]
  %s8 = inlined_call_operand.hbm [shape: f32[2,2], index: 8, kind: output, shape index: {0}]
  %s9 = inlined_call_operand.hbm [shape: f32[1,1], index: 9, kind: output, shape index: {1}]
  %10 = xla_tuple %s8, %s9
  %s11 = sld [smem:[#allocation0]]
  $region81: #{ast_forward.23} parent=0
    _
  %s13 = ssub.s32 1, %s11
  %s14 = scalar_select 0, %s13, %s11
  $region1: #{ast_forward.23} parent=0
    #allocation2 [shape = 'u8[1024]{0}', space=vmem, size = 0x400, scoped, tag = 'output window, operand 0, single buffered']
    #allocation3 [shape = 's32[2]{0}', space=sflag, size = 0x8, scoped, tag = 'scoped memory for ast_forward.23']
    #allocation4 [shape = 'u8[512]{0}', space=vmem, size = 0x400, scoped, tag = 'output window, operand 1, single buffered']
    #allocation5 [shape = 's32[1]{0}', space=sflag, size = 0x4, scoped, tag = 'scoped memory for ast_forward.23']
    %15 = vsyncpa [#allocation3], 0
    %16 = vsyncpa [#allocation5], 0
    loop: start=0, step=1, limit=4
    $region2: #{ast_forward.23} parent=1 // loop_pre_header
      _
    $region3: #{ast_forward.23} parent=1 // loop_header
      %s18 = sphi 0, %s22
      %p19 = scmp.ge.s32.totalorder %s18, 4
      %s28 = sphi 0, %s30
      %s31 = sphi 0, %s28
      %s32 = sphi 0, %s31
      %s48 = sphi 0, %s32
      %s52 = sphi 0, %s52
      %s54 = sphi 0, %s52
      %s55 = sphi 0, %s54
      %s69 = sphi 0, %s55
      %s73 = sphi 0, %s73
      %s75 = sphi 0, %s73
      %s76 = sphi 0, %s75
      %s90 = sphi 0, %s76
      %s94 = sphi 0, %s94
      %s96 = sphi 0, %s94
      %s97 = sphi 0, %s96
      %s111 = sphi 0, %s97
      %s115 = sphi 0, %s115
      %s117 = sphi 0, %s115
      %s118 = sphi 0, %s117
      %s132 = sphi 0, %s118
      %s136 = sphi 0, %s136
      %s138 = sphi 0, %s136
      %s139 = sphi 0, %s138
      %s153 = sphi 0, %s139
      %s157 = sphi 0, %s157
      %s159 = sphi 0, %s157
      %s160 = sphi 0, %s159
      %s174 = sphi 0, %s160
      %s178 = sphi 0, %s178
      %s180 = sphi 0, %s178
      %s181 = sphi 0, %s180
      %s195 = sphi 0, %s181
      %s199 = sphi 0, %s199
      %s201 = sphi 0, %s199
      %s202 = sphi 0, %s201
      %s216 = sphi 0, %s202
      %s220 = sphi 0, %s220
      %s222 = sphi 0, %s220
      %s223 = sphi 0, %s222
      %s237 = sphi 0, %s223
    $region4: #{ast_forward.23} parent=1 // loop_header_branch
      %21 = sbr.rel (%p19) target = $region8
    $region5: #{ast_forward.23} parent=1 // loop_body
      %s23 = ssub.s32 %s18, 1
      %s24 = ssub.s32 %s18, 2
      %s25 = sadd.s32 %s18, 1
      %s26 = ssub.s32 %s18, %s25
      %p27 = scmp.eq.s32.totalorder %s26, 0
      %s29 = sadd.s32 %s28, 1
      %s30 = scalar_select %p27, %s28, %s29
      %p33 = pneg %p27
      %p34 = scmp.eq.s32.totalorder %s18, 1
      %p35 = por %p33, %p34
      %p36 = scmp.ne.s32.totalorder %s28, %s31
      %p37 = scmp.eq.s32.totalorder %s18, 0
      %p38 = por %p36, %p37
      %p39 = scmp.ne.s32.totalorder %s28, %s31
      %p40 = scmp.eq.s32.totalorder %s23, 1
      %p41 = por %p39, %p40
      %p42 = scmp.ne.s32.totalorder %s31, %s32
      %p43 = scmp.eq.s32.totalorder %s23, 0
      %p44 = por %p42, %p43
      %p45 = scmp.ne.s32.totalorder %s31, %s32
      %p46 = scmp.eq.s32.totalorder %s24, 1
      %p47 = por %p45, %p46
      %p49 = scmp.ne.s32.totalorder %s32, %s48
      %p50 = scmp.eq.s32.totalorder %s24, 0
      %p51 = por %p49, %p50
      %s53 = sadd.s32 %s52, 1
      %p56 = scmp.eq.s32.totalorder %s18, 1
      %p57 = scmp.ne.s32.totalorder %s52, %s54
      %p58 = scmp.eq.s32.totalorder %s18, 0
      %p59 = por %p57, %p58
      %p60 = scmp.ne.s32.totalorder %s52, %s54
      %p61 = scmp.eq.s32.totalorder %s23, 1
      %p62 = por %p60, %p61
      %p63 = scmp.ne.s32.totalorder %s54, %s55
      %p64 = scmp.eq.s32.totalorder %s23, 0
      %p65 = por %p63, %p64
      %p66 = scmp.ne.s32.totalorder %s54, %s55
      %p67 = scmp.eq.s32.totalorder %s24, 1
      %p68 = por %p66, %p67
      %p70 = scmp.ne.s32.totalorder %s55, %s69
      %p71 = scmp.eq.s32.totalorder %s24, 0
      %p72 = por %p70, %p71
      %s74 = sadd.s32 %s73, 1
      %p77 = scmp.eq.s32.totalorder %s18, 1
      %p78 = scmp.ne.s32.totalorder %s73, %s75
      %p79 = scmp.eq.s32.totalorder %s18, 0
      %p80 = por %p78, %p79
      %p81 = scmp.ne.s32.totalorder %s73, %s75
      %p82 = scmp.eq.s32.totalorder %s23, 1
      %p83 = por %p81, %p82
      %p84 = scmp.ne.s32.totalorder %s75, %s76
      %p85 = scmp.eq.s32.totalorder %s23, 0
      %p86 = por %p84, %p85
      %p87 = scmp.ne.s32.totalorder %s75, %s76
      %p88 = scmp.eq.s32.totalorder %s24, 1
      %p89 = por %p87, %p88
      %p91 = scmp.ne.s32.totalorder %s76, %s90
      %p92 = scmp.eq.s32.totalorder %s24, 0
      %p93 = por %p91, %p92
      %s95 = sadd.s32 %s94, 1
      %p98 = scmp.eq.s32.totalorder %s18, 1
      %p99 = scmp.ne.s32.totalorder %s94, %s96
      %p100 = scmp.eq.s32.totalorder %s18, 0
      %p101 = por %p99, %p100
      %p102 = scmp.ne.s32.totalorder %s94, %s96
      %p103 = scmp.eq.s32.totalorder %s23, 1
      %p104 = por %p102, %p103
      %p105 = scmp.ne.s32.totalorder %s96, %s97
      %p106 = scmp.eq.s32.totalorder %s23, 0
      %p107 = por %p105, %p106
      %p108 = scmp.ne.s32.totalorder %s96, %s97
      %p109 = scmp.eq.s32.totalorder %s24, 1
      %p110 = por %p108, %p109
      %p112 = scmp.ne.s32.totalorder %s97, %s111
      %p113 = scmp.eq.s32.totalorder %s24, 0
      %p114 = por %p112, %p113
      %s116 = sadd.s32 %s115, 1
      %p119 = scmp.eq.s32.totalorder %s18, 1
      %p120 = scmp.ne.s32.totalorder %s115, %s117
      %p121 = scmp.eq.s32.totalorder %s18, 0
      %p122 = por %p120, %p121
      %p123 = scmp.ne.s32.totalorder %s115, %s117
      %p124 = scmp.eq.s32.totalorder %s23, 1
      %p125 = por %p123, %p124
      %p126 = scmp.ne.s32.totalorder %s117, %s118
      %p127 = scmp.eq.s32.totalorder %s23, 0
      %p128 = por %p126, %p127
      %p129 = scmp.ne.s32.totalorder %s117, %s118
      %p130 = scmp.eq.s32.totalorder %s24, 1
      %p131 = por %p129, %p130
      %p133 = scmp.ne.s32.totalorder %s118, %s132
      %p134 = scmp.eq.s32.totalorder %s24, 0
      %p135 = por %p133, %p134
      %s137 = sadd.s32 %s136, 1
      %p140 = scmp.eq.s32.totalorder %s18, 1
      %p141 = scmp.ne.s32.totalorder %s136, %s138
      %p142 = scmp.eq.s32.totalorder %s18, 0
      %p143 = por %p141, %p142
      %p144 = scmp.ne.s32.totalorder %s136, %s138
      %p145 = scmp.eq.s32.totalorder %s23, 1
      %p146 = por %p144, %p145
      %p147 = scmp.ne.s32.totalorder %s138, %s139
      %p148 = scmp.eq.s32.totalorder %s23, 0
      %p149 = por %p147, %p148
      %p150 = scmp.ne.s32.totalorder %s138, %s139
      %p151 = scmp.eq.s32.totalorder %s24, 1
      %p152 = por %p150, %p151
      %p154 = scmp.ne.s32.totalorder %s139, %s153
      %p155 = scmp.eq.s32.totalorder %s24, 0
      %p156 = por %p154, %p155
      %s158 = sadd.s32 %s157, 1
      %p161 = scmp.eq.s32.totalorder %s18, 1
      %p162 = scmp.ne.s32.totalorder %s157, %s159
      %p163 = scmp.eq.s32.totalorder %s18, 0
      %p164 = por %p162, %p163
      %p165 = scmp.ne.s32.totalorder %s157, %s159
      %p166 = scmp.eq.s32.totalorder %s23, 1
      %p167 = por %p165, %p166
      %p168 = scmp.ne.s32.totalorder %s159, %s160
      %p169 = scmp.eq.s32.totalorder %s23, 0
      %p170 = por %p168, %p169
      %p171 = scmp.ne.s32.totalorder %s159, %s160
      %p172 = scmp.eq.s32.totalorder %s24, 1
      %p173 = por %p171, %p172
      %p175 = scmp.ne.s32.totalorder %s160, %s174
      %p176 = scmp.eq.s32.totalorder %s24, 0
      %p177 = por %p175, %p176
      %s179 = sadd.s32 %s178, 1
      %p182 = scmp.eq.s32.totalorder %s18, 1
      %p183 = scmp.ne.s32.totalorder %s178, %s180
      %p184 = scmp.eq.s32.totalorder %s18, 0
      %p185 = por %p183, %p184
      %p186 = scmp.ne.s32.totalorder %s178, %s180
      %p187 = scmp.eq.s32.totalorder %s23, 1
      %p188 = por %p186, %p187
      %p189 = scmp.ne.s32.totalorder %s180, %s181
      %p190 = scmp.eq.s32.totalorder %s23, 0
      %p191 = por %p189, %p190
      %p192 = scmp.ne.s32.totalorder %s180, %s181
      %p193 = scmp.eq.s32.totalorder %s24, 1
      %p194 = por %p192, %p193
      %p196 = scmp.ne.s32.totalorder %s181, %s195
      %p197 = scmp.eq.s32.totalorder %s24, 0
      %p198 = por %p196, %p197
      %s200 = sadd.s32 %s199, 1
      %p203 = scmp.eq.s32.totalorder %s18, 1
      %p204 = scmp.ne.s32.totalorder %s199, %s201
      %p205 = scmp.eq.s32.totalorder %s18, 0
      %p206 = por %p204, %p205
      %p207 = scmp.ne.s32.totalorder %s199, %s201
      %p208 = scmp.eq.s32.totalorder %s23, 1
      %p209 = por %p207, %p208
      %p210 = scmp.ne.s32.totalorder %s201, %s202
      %p211 = scmp.eq.s32.totalorder %s23, 0
      %p212 = por %p210, %p211
      %p213 = scmp.ne.s32.totalorder %s201, %s202
      %p214 = scmp.eq.s32.totalorder %s24, 1
      %p215 = por %p213, %p214
      %p217 = scmp.ne.s32.totalorder %s202, %s216
      %p218 = scmp.eq.s32.totalorder %s24, 0
      %p219 = por %p217, %p218
      %s221 = sadd.s32 %s220, 1
      %p224 = scmp.eq.s32.totalorder %s18, 1
      %p225 = scmp.ne.s32.totalorder %s220, %s222
      %p226 = scmp.eq.s32.totalorder %s18, 0
      %p227 = por %p225, %p226
      %p228 = scmp.ne.s32.totalorder %s220, %s222
      %p229 = scmp.eq.s32.totalorder %s23, 1
      %p230 = por %p228, %p229
      %p231 = scmp.ne.s32.totalorder %s222, %s223
      %p232 = scmp.eq.s32.totalorder %s23, 0
      %p233 = por %p231, %p232
      %p234 = scmp.ne.s32.totalorder %s222, %s223
      %p235 = scmp.eq.s32.totalorder %s24, 1
      %p236 = por %p234, %p235
      %p238 = scmp.ne.s32.totalorder %s223, %s237
      %p239 = scmp.eq.s32.totalorder %s24, 0
      %p240 = por %p238, %p239
      %p241 = scmp.le.s32.totalorder 1, %s18
      %p242 = scmp.lt.s32.totalorder %s18, 3
      %p243 = pnand %p241, %p242
      %p244 = pneg %p243
      // Predicated region
      $region9: #{ast_forward.23} parent=5 // pred_check
        _
      $region10: #{ast_forward.23} parent=5 // pred_check_branch
        %246 = sbr.rel (%p243) target = $region12
      $region11: #{ast_forward.23} parent=5 // pred_region
        %s247 = ssub.s32 %s18, 1
        // Predicated region
        $region13: #{ast_forward.23} parent=11 // pred_check
          %p248 = pneg %p65
        $region14: #{ast_forward.23} parent=11 // pred_check_branch
          %250 = sbr.rel (%p248) target = $region16
        $region15: #{ast_forward.23} parent=11 // pred_region
          _
        $region16: #{ast_forward.23} parent=11 // pred_fallthru
          _
        // Predicated region
        $region17: #{ast_forward.23} parent=11 // pred_check
          %p251 = pneg %p86
        $region18: #{ast_forward.23} parent=11 // pred_check_branch
          %253 = sbr.rel (%p251) target = $region20
        $region19: #{ast_forward.23} parent=11 // pred_region
          _
        $region20: #{ast_forward.23} parent=11 // pred_fallthru
          _
        // Predicated region
        $region21: #{ast_forward.23} parent=11 // pred_check
          %p254 = pneg %p107
        $region22: #{ast_forward.23} parent=11 // pred_check_branch
          %256 = sbr.rel (%p254) target = $region24
        $region23: #{ast_forward.23} parent=11 // pred_region
          _
        $region24: #{ast_forward.23} parent=11 // pred_fallthru
          _
        // Predicated region
        $region25: #{ast_forward.23} parent=11 // pred_check
          %p257 = pneg %p128
        $region26: #{ast_forward.23} parent=11 // pred_check_branch
          %259 = sbr.rel (%p257) target = $region28
        $region27: #{ast_forward.23} parent=11 // pred_region
          _
        $region28: #{ast_forward.23} parent=11 // pred_fallthru
          _
        // Predicated region
        $region29: #{ast_forward.23} parent=11 // pred_check
          %p260 = pneg %p149
        $region30: #{ast_forward.23} parent=11 // pred_check_branch
          %262 = sbr.rel (%p260) target = $region32
        $region31: #{ast_forward.23} parent=11 // pred_region
          _
        $region32: #{ast_forward.23} parent=11 // pred_fallthru
          _
        // Predicated region
        $region33: #{ast_forward.23} parent=11 // pred_check
          %p263 = pneg %p170
        $region34: #{ast_forward.23} parent=11 // pred_check_branch
          %265 = sbr.rel (%p263) target = $region36
        $region35: #{ast_forward.23} parent=11 // pred_region
          _
        $region36: #{ast_forward.23} parent=11 // pred_fallthru
          _
        // Predicated region
        $region37: #{ast_forward.23} parent=11 // pred_check
          %p266 = pneg %p191
        $region38: #{ast_forward.23} parent=11 // pred_check_branch
          %268 = sbr.rel (%p266) target = $region40
        $region39: #{ast_forward.23} parent=11 // pred_region
          _
        $region40: #{ast_forward.23} parent=11 // pred_fallthru
          _
      $region12: #{ast_forward.23} parent=5 // pred_fallthru
        _
      %p269 = scmp.lt.s32.totalorder %s18, 2
      // Predicated region
      $region41: #{ast_forward.23} parent=5 // pred_check
        %p270 = pneg %p269
      $region42: #{ast_forward.23} parent=5 // pred_check_branch
        %272 = sbr.rel (%p270) target = $region44
      $region43: #{ast_forward.23} parent=5 // pred_region
        // Predicated region
        $region45: #{ast_forward.23} parent=43 // pred_check
          %p273 = pneg %p38
        $region46: #{ast_forward.23} parent=43 // pred_check_branch
          %275 = sbr.rel (%p273) target = $region48
        $region47: #{ast_forward.23} parent=43 // pred_region
          %p276 = scmp.lt.s32.totalorder %s18, 1
          %s277 = scalar_select %p276, %s18, 1
          %s278 = smul.addr %s277, 8
          %s279 = scalar_lea.vmem %s0, %s278
        $region48: #{ast_forward.23} parent=43 // pred_fallthru
          _
      $region44: #{ast_forward.23} parent=5 // pred_fallthru
        _
      %p280 = scmp.le.s32.totalorder 1, %s18
      %p281 = scmp.lt.s32.totalorder %s18, 3
      %p282 = pnand %p280, %p281
      %p283 = pneg %p282
      // Predicated region
      $region49: #{ast_forward.23} parent=5 // pred_check
        _
      $region50: #{ast_forward.23} parent=5 // pred_check_branch
        %285 = sbr.rel (%p282) target = $region52
      $region51: #{ast_forward.23} parent=5 // pred_region
        %s286 = ssub.s32 %s18, 1
        %p287 = scmp.lt.s32.totalorder %s23, 1
        %s288 = scalar_select %p287, %s23, 1
        %s289 = smul.addr %s288, 8
        %s290 = scalar_lea.vmem %s0, %s289
        %p291 = pneg %p44
        %p292 = pneg %p41
        %p293 = pneg %p65
        %p294 = pneg %p62
        %p295 = pneg %p86
        %p296 = pneg %p83
        %p297 = pneg %p107
        %p298 = pneg %p104
        %p299 = pneg %p128
        %p300 = pneg %p125
        %p301 = pneg %p149
        %p302 = pneg %p146
        %p303 = pneg %p170
        %p304 = pneg %p167
        %p305 = pneg %p191
        %p306 = pneg %p188
        %p307 = pneg %p212
        %p308 = pneg %p209
        %p309 = pneg %p233
        %p310 = pneg %p230
        %p311 = scmp.lt.s32.totalorder %s23, 1
        %s312 = scalar_select %p311, %s23, 1
        %s313 = smul.addr %s312, 8
        %s314 = scalar_lea.vmem %s0, %s313
        %p316 = scmp.eq.s32.totalorder %s23, 0
        // Predicated region
        $region53: #{ast_forward.23} parent=51 // pred_check
          %p317 = pneg %p316
        $region54: #{ast_forward.23} parent=51 // pred_check_branch
          %319 = sbr.rel (%p317) target = $region56
        $region55: #{ast_forward.23} parent=51 // pred_region
          %vm320 = vcmask 9216
          %321 = vst.msk [vmem:[#allocation2] sm:$0x3] %vm320, 0.0
        $region56: #{ast_forward.23} parent=51 // pred_fallthru
          _
        %v322 = vld [vmem:[%s314] sm:$0xff]
        %vm323 = vcmask 523264
        %v324 = vsel %vm323, %v322, 0.0
        %325 = vadd.xlane.f32.xlu0 %v324
        %v326 = vpop.xlane.xlu0 %325
        %v327 = vrcp.pop 64.0
        %v328 = vmul.f32 %v326, %v327
        %v329 = vsub.f32 %v322, %v328
        %v330 = vmul.f32 %v329, %v329
        %v331 = vsel %vm323, %v330, 0.0
        %332 = vadd.xlane.f32.xlu0 %v331
        %v333 = vpop.xlane.xlu0 %332
        %v334 = vmul.f32 %v333, %v327
        %v335 = vadd.f32 %v334, 1e-06
        %v336 = vrsqrt.pop %v335
        %v337 = vmul.f32 %v329, %v336
        %v338 = vld [vmem:[%s1] sm:$0x1]
        %v340 = vlaneseq
        %v341 = vshrl.u32 %v340, 7
        %v342 = vsub.s32 0, %v341
        %v343 = vrot.slane %v338, %v342
        %v345 = vmul.f32 %v337, %v343
        %v346 = vld [vmem:[%s2] sm:$0x1]
        %v348 = vlaneseq
        %v349 = vshrl.u32 %v348, 7
        %v350 = vsub.s32 0, %v349
        %v351 = vrot.slane %v346, %v350
        %v353 = vadd.f32 %v345, %v351
        %v354 = vpack.c.bf16 %v353, %v353
        %v355 = vld [vmem:[%s3] sm:$0xf]
        %v356 = vld [vmem:[%s3 + $0x4] sm:$0xf]
        %v357 = vld [vmem:[%s3 + $0x8] sm:$0xf]
        %v358 = vld [vmem:[%s3 + $0xc] sm:$0xf]
        %v359 = vld [vmem:[%s3 + $0x10] sm:$0xf]
        %v360 = vld [vmem:[%s3 + $0x14] sm:$0xf]
        %v361 = vld [vmem:[%s3 + $0x18] sm:$0xf]
        %v362 = vld [vmem:[%s3 + $0x1c] sm:$0xf]
        %v363 = vld [vmem:[%s4] sm:$0x1]
        %v365 = vlaneseq
        %v366 = vshrl.u32 %v365, 7
        %v367 = vsub.s32 0, %v366
        %v368 = vrot.slane %v363, %v367
        %v378 = vunpack.c.l.b16 %v355
        %v379 = vunpack.c.l.b16 %v356
        %v380 = vunpack.c.l.b16 %v357
        %v381 = vunpack.c.l.b16 %v358
        %v382 = vunpack.c.l.b16 %v359
        %v383 = vunpack.c.l.b16 %v360
        %v384 = vunpack.c.l.b16 %v361
        %v385 = vunpack.c.l.b16 %v362
        %v386 = vpack.c.b16 %v379, %v378
        %v387 = vpack.c.b16 %v381, %v380
        %v388 = vpack.c.b16 %v383, %v382
        %v389 = vpack.c.b16 %v385, %v384
        %v395 = vsel %vm323, %v354, 0
        %397 = vmatprep.subr.bf16.mxu0 0
        %398 = vmatpush1.bf16.msra.mxu0 %v386
        %399 = vmatprep.subr.bf16.mxu0 0
        %400 = vmatpush1.bf16.msra.mxu0 %v387
        %401 = vmatprep.subr.bf16.mxu0 0
        %402 = vmatpush1.bf16.msra.mxu0 %v388
        %403 = vmatprep.subr.bf16.mxu0 0
        %404 = vmatpush1.bf16.msra.mxu0 %v389
        %405 = vmatprep.subr.bf16.mxu0 0
        %406 = vmatpush1.bf16.msra.mxu0 0
        %407 = vmatprep.subr.bf16.mxu0 0
        %408 = vmatpush1.bf16.msra.mxu0 0
        %409 = vmatprep.subr.bf16.mxu0 0
        %410 = vmatpush1.bf16.msra.mxu0 0
        %411 = vmatprep.subr.bf16.mxu0 0
        %412 = vmatpush1.bf16.msra.mxu0 0
        %413 = vmatprep.subr.bf16.mxu0 0
        %414 = vmatpush1.bf16.msra.mxu0 0
        %415 = vmatprep.subr.bf16.mxu0 0
        %416 = vmatpush1.bf16.msra.mxu0 0
        %417 = vmatprep.subr.bf16.mxu0 0
        %418 = vmatpush1.bf16.msra.mxu0 0
        %419 = vmatprep.subr.bf16.mxu0 0
        %420 = vmatpush1.bf16.msra.mxu0 0
        %421 = vmatprep.subr.bf16.mxu0 0
        %422 = vmatpush1.bf16.msra.mxu0 0
        %423 = vmatprep.subr.bf16.mxu0 0
        %424 = vmatpush1.bf16.msra.mxu0 0
        %425 = vmatprep.subr.bf16.mxu0 0
        %426 = vmatpush1.bf16.msra.mxu0 0
        %427 = vmatprep.subr.bf16.mxu0 0
        %428 = vmatpush1.bf16.msra.mxu0 0
        %429 = vmatprep.mubr.bf16.mxu0 0
        %430 = vmatmul.mubr.bf16.gmra.mrb[0].mxu0 %v395
        %v431 = vpop.f32.mrb[0].mxu0
        %v432 = vadd.f32 %v368, %v431
        %v433 = vpop.f32.mrb[0].mxu0
        %v434 = vpop.f32.mrb[0].mxu0
        %v435 = vpop.f32.mrb[0].mxu0
        %436 = vdwg.mxu0
        %v437 = vmax.f32 %v432, 0.0
        %v438 = vsel %vm323, %v437, 0.0
        %v439 = vrot.slane %v438, 4
        %v440 = vadd.f32 %v438, %v439
        %v441 = vrot.slane %v440, 2
        %v442 = vadd.f32 %v440, %v441
        %v443 = vrot.slane %v442, 1
        %v444 = vadd.f32 %v442, %v443
        %v445 = vmul.f32 %v444, 0.125
        %v446 = vld [vmem:[%s5] sm:$0xff]
        %v447 = vld [vmem:[%s5 + $0x8] sm:$0xff]
        %v448 = vld [vmem:[%s5 + $0x10] sm:$0xff]
        %v449 = vld [vmem:[%s5 + $0x18] sm:$0xff]
        %v450 = vld [vmem:[%s5 + $0x20] sm:$0xff]
        %v451 = vld [vmem:[%s5 + $0x28] sm:$0xff]
        %v452 = vld [vmem:[%s5 + $0x30] sm:$0xff]
        %v453 = vld [vmem:[%s5 + $0x38] sm:$0xff]
        %v454 = vld [vmem:[%s6] sm:$0x1]
        %v456 = vsel %vm323, %v445, 0
        %458 = vmatprep.subr.mxu0 0.0
        %459 = vmatpush1.msra.mxu0 %v446
        %460 = vmatprep.subr.mxu0 0.0
        %461 = vmatpush1.msra.mxu0 %v447
        %462 = vmatprep.subr.mxu0 0.0
        %463 = vmatpush1.msra.mxu0 %v448
        %464 = vmatprep.subr.mxu0 0.0
        %465 = vmatpush1.msra.mxu0 %v449
        %466 = vmatprep.subr.mxu0 0.0
        %467 = vmatpush1.msra.mxu0 %v450
        %468 = vmatprep.subr.mxu0 0.0
        %469 = vmatpush1.msra.mxu0 %v451
        %470 = vmatprep.subr.mxu0 0.0
        %471 = vmatpush1.msra.mxu0 %v452
        %472 = vmatprep.subr.mxu0 0.0
        %473 = vmatpush1.msra.mxu0 %v453
        %474 = vmatprep.subr.mxu0 0.0
        %475 = vmatpush1.msra.mxu0 0.0
        %476 = vmatprep.subr.mxu0 0.0
        %477 = vmatpush1.msra.mxu0 0.0
        %478 = vmatprep.subr.mxu0 0.0
        %479 = vmatpush1.msra.mxu0 0.0
        %480 = vmatprep.subr.mxu0 0.0
        %481 = vmatpush1.msra.mxu0 0.0
        %482 = vmatprep.subr.mxu0 0.0
        %483 = vmatpush1.msra.mxu0 0.0
        %484 = vmatprep.subr.mxu0 0.0
        %485 = vmatpush1.msra.mxu0 0.0
        %486 = vmatprep.subr.mxu0 0.0
        %487 = vmatpush1.msra.mxu0 0.0
        %488 = vmatprep.subr.mxu0 0.0
        %489 = vmatpush1.msra.mxu0 0.0
        %490 = vmatprep.subr.mxu0 0.0
        %491 = vmatpush1.msra.mxu0 0.0
        %492 = vmatprep.subr.mxu0 0.0
        %493 = vmatpush1.msra.mxu0 0.0
        %494 = vmatprep.subr.mxu0 0.0
        %495 = vmatpush1.msra.mxu0 0.0
        %496 = vmatprep.subr.mxu0 0.0
        %497 = vmatpush1.msra.mxu0 0.0
        %498 = vmatprep.subr.mxu0 0.0
        %499 = vmatpush1.msra.mxu0 0.0
        %500 = vmatprep.subr.mxu0 0.0
        %501 = vmatpush1.msra.mxu0 0.0
        %502 = vmatprep.subr.mxu0 0.0
        %503 = vmatpush1.msra.mxu0 0.0
        %504 = vmatprep.subr.mxu0 0.0
        %505 = vmatpush1.msra.mxu0 0.0
        %506 = vmatprep.subr.mxu0 0.0
        %507 = vmatpush1.msra.mxu0 0.0
        %508 = vmatprep.subr.mxu0 0.0
        %509 = vmatpush1.msra.mxu0 0.0
        %510 = vmatprep.subr.mxu0 0.0
        %511 = vmatpush1.msra.mxu0 0.0
        %512 = vmatprep.subr.mxu0 0.0
        %513 = vmatpush1.msra.mxu0 0.0
        %514 = vmatprep.subr.mxu0 0.0
        %515 = vmatpush1.msra.mxu0 0.0
        %516 = vmatprep.subr.mxu0 0.0
        %517 = vmatpush1.msra.mxu0 0.0
        %518 = vmatprep.subr.mxu0 0.0
        %519 = vmatpush1.msra.mxu0 0.0
        %520 = vmatprep.subr.mxu0 0.0
        %521 = vmatpush1.msra.mxu0 0.0
        %522 = vmatprep.mubr.f32.mxu0 0.0
        %523 = vmatmul.mubr.f32.gmra.mrb[0].mxu0 %v456
        %v524 = vpop.f32.mrb[0].mxu0
        %v525 = vadd.f32 %v454, %v524
        %v526 = vpop.f32.mrb[0].mxu0
        %527 = vdwg.mxu0
        %v528 = vlaneseq
        %v529 = vshrl.u32 %v528, 7
        %v530 = vstv %s23
        %vm531 = vcmp.eq.s32.totalorder %v529, %v530
        %v532 = vlaneseq
        %v533 = vshrl.u32 %v532, 7
        %v534 = vsub.s32 0, %v533
        %v535 = vrot.slane %v525, %v534
        %v536 = vld [vmem:[#allocation2] sm:$0x3]
        %v537 = vsel %vm531, %v535, %v536
        %vm538 = vcmask 9216
        %539 = vst.msk [vmem:[#allocation2] sm:$0x3] %vm538, %v537
        %p540 = scmp.eq.s32.totalorder %s23, 1
        // Predicated region
        $region57: #{ast_forward.23} parent=51 // pred_check
          %p541 = pneg %p540
        $region58: #{ast_forward.23} parent=51 // pred_check_branch
          %543 = sbr.rel (%p541) target = $region60
        $region59: #{ast_forward.23} parent=51 // pred_region
          %v544 = vld [vmem:[#allocation2] sm:$0x3]
          %v545 = vld [vmem:[%s7] sm:$0x3]
          %v546 = vsub.f32 %v544, %v545
          %v547 = vmul.f32 %v546, %v546
          %v548 = vsel %vm538, %v547, 0.0
          %549 = vadd.xlane.f32.xlu0 %v548
          %v550 = vpop.xlane.xlu0 %549
          %v551 = vrot.slane %v550, 4
          %v552 = vadd.f32 %v550, %v551
          %v553 = vrot.slane %v552, 2
          %v554 = vadd.f32 %v552, %v553
          %v555 = vrot.slane %v554, 1
          %v556 = vadd.f32 %v554, %v555
          %s557 = vtos %v556
          %v558 = vstv %s557
          %v559 = vmul.f32 %v558, 0.25
          %vm560 = vcmask 0
          %561 = vst.msk [vmem:[#allocation4] sm:$0x1] %vm560, %v559
        $region60: #{ast_forward.23} parent=51 // pred_fallthru
          _
        // Predicated region
        $region61: #{ast_forward.23} parent=51 // pred_check
          %p562 = pneg %p209
        $region62: #{ast_forward.23} parent=51 // pred_check_branch
          %564 = sbr.rel (%p562) target = $region64
        $region63: #{ast_forward.23} parent=51 // pred_region
          %s566 = ssub.s32 32, 32
          %567 = vsyncadd [#allocation3], %s566
          %s569 = sshll.u32 [#allocation2], 4
          %s570 = int_to_ptr.vmem [resolvable:$true] %s569
          %572 = dma.vmem_to_hbm [thread:$0]  %s570, 32, %s8, [#allocation3]
        $region64: #{ast_forward.23} parent=51 // pred_fallthru
          _
        // Predicated region
        $region65: #{ast_forward.23} parent=51 // pred_check
          %p573 = pneg %p230
        $region66: #{ast_forward.23} parent=51 // pred_check_branch
          %575 = sbr.rel (%p573) target = $region68
        $region67: #{ast_forward.23} parent=51 // pred_region
          %s577 = ssub.s32 16, 16
          %578 = vsyncadd [#allocation5], %s577
          %s580 = sshll.u32 [#allocation4], 4
          %s581 = int_to_ptr.vmem [resolvable:$true] %s580
          %583 = dma.vmem_to_hbm [thread:$0]  %s581, 16, %s9, [#allocation5]
        $region68: #{ast_forward.23} parent=51 // pred_fallthru
          _
        // Predicated region
        $region69: #{ast_forward.23} parent=51 // pred_check
          %p584 = pneg %p209
        $region70: #{ast_forward.23} parent=51 // pred_check_branch
          %586 = sbr.rel (%p584) target = $region72
        $region71: #{ast_forward.23} parent=51 // pred_region
          %587 = dma.done [#allocation3], 32
        $region72: #{ast_forward.23} parent=51 // pred_fallthru
          _
        // Predicated region
        $region73: #{ast_forward.23} parent=51 // pred_check
          %p588 = pneg %p230
        $region74: #{ast_forward.23} parent=51 // pred_check_branch
          %590 = sbr.rel (%p588) target = $region76
        $region75: #{ast_forward.23} parent=51 // pred_region
          %591 = dma.done [#allocation5], 16
        $region76: #{ast_forward.23} parent=51 // pred_fallthru
          _
      $region52: #{ast_forward.23} parent=5 // pred_fallthru
        _
      %p592 = scmp.le.s32.totalorder 2, %s18
      // Predicated region
      $region77: #{ast_forward.23} parent=5 // pred_check
        %p593 = pneg %p592
      $region78: #{ast_forward.23} parent=5 // pred_check_branch
        %595 = sbr.rel (%p593) target = $region80
      $region79: #{ast_forward.23} parent=5 // pred_region
        %s596 = ssub.s32 %s18, 2
      $region80: #{ast_forward.23} parent=5 // pred_fallthru
        _
    $region6: #{ast_forward.23} parent=1 // loop_footer
      %s22 = sadd.s32 1, %s18
    $region7: #{ast_forward.23} parent=1 // loop_footer_branch
      %17 = sbr.rel target = $region3
    $region8: #{ast_forward.23} parent=1 // loop_exit
      _
    %597 = vsyncpa [#allocation3], 1
    %s598 = scalar_lea.sflag [#allocation3], 1
    %599 = vsyncpa %s598, 1
    %600 = vsyncpa [#allocation5], 1

// kernel: ast_forward.17
$region0: #{ast_forward.17}
  #allocation0 [shape = 'u32[]', space=smem, size = 0x4, offset = 0x4, fixed_abs, tag = 'smem constant byte address 0x4 - core index']
  #allocation1 [shape = 'u32[144,128]{1,0:T(1,128)}', space=vmem, size = 0x12000, scoped, tag = 'internal scratch']
  #allocation2 [shape = 'f32[16,64]{1,0:T(8,128)}', space=vmem, size = 0x2000, scoped, tag = 'scratch operand']
  %s0 = inlined_call_operand.vmem [shape: bf16[16,256], index: 0, kind: input, shape index: {}]
  %s1 = inlined_call_operand.vmem [shape: bf16[256,64], index: 1, kind: input, shape index: {}]
  %s2 = inlined_call_operand.vmem [shape: f32[1,64], index: 2, kind: input, shape index: {}]
  %s3 = inlined_call_operand.vmem [shape: f32[16,64], index: 3, kind: input, shape index: {}]
  %s4 = inlined_call_operand.vmem [shape: f32[16,64], index: 4, kind: output, shape index: {}]
  %s5 = sld [smem:[#allocation0]]
  $region34: #{ast_forward.17} parent=0
    _
  %s7 = ssub.s32 1, %s5
  %s8 = scalar_select 0, %s7, %s5
  // Predicated region
  $region2: #{ast_forward.17} parent=0 // pred_check
    _
  $region3: #{ast_forward.17} parent=0 // pred_check_branch
    %10 = sbr.rel (0) target = $region5
  $region4: #{ast_forward.17} parent=0 // pred_region
    _
  $region5: #{ast_forward.17} parent=0 // pred_fallthru
    _
  // Predicated region
  $region6: #{ast_forward.17} parent=0 // pred_check
    _
  $region7: #{ast_forward.17} parent=0 // pred_check_branch
    %12 = sbr.rel (0) target = $region9
  $region8: #{ast_forward.17} parent=0 // pred_region
    _
  $region9: #{ast_forward.17} parent=0 // pred_fallthru
    _
  // Predicated region
  $region10: #{ast_forward.17} parent=0 // pred_check
    _
  $region11: #{ast_forward.17} parent=0 // pred_check_branch
    %14 = sbr.rel (0) target = $region13
  $region12: #{ast_forward.17} parent=0 // pred_region
    _
  $region13: #{ast_forward.17} parent=0 // pred_fallthru
    _
  // Predicated region
  $region14: #{ast_forward.17} parent=0 // pred_check
    _
  $region15: #{ast_forward.17} parent=0 // pred_check_branch
    %16 = sbr.rel (0) target = $region17
  $region16: #{ast_forward.17} parent=0 // pred_region
    _
  $region17: #{ast_forward.17} parent=0 // pred_fallthru
    _
  %p18 = scmp.eq.s32.totalorder 0, 0
  // Predicated region
  $region18: #{ast_forward.17} parent=0 // pred_check
    %p19 = pneg %p18
  $region19: #{ast_forward.17} parent=0 // pred_check_branch
    %21 = sbr.rel (%p19) target = $region21
  $region20: #{ast_forward.17} parent=0 // pred_region
    %vm22 = vcmask 523264
    %23 = vst.msk [vmem:[#allocation2] sm:$0xff] %vm22, 0.0
    %24 = vst.msk [vmem:[#allocation2 + $0x8] sm:$0xff] %vm22, 0.0
  $region21: #{ast_forward.17} parent=0 // pred_fallthru
    _
  %v25 = vld [vmem:[#allocation2] sm:$0xff]
  %v26 = vld [vmem:[#allocation2 + $0x8] sm:$0xff]
  %v27 = vld [vmem:[%s0] sm:$0xff]
  %v28 = vld [vmem:[%s0 + $0x8] sm:$0xff]
  %v29 = vld [vmem:[%s1] sm:$0xf]
  %v30 = vld [vmem:[%s1 + $0x4] sm:$0xf]
  %v31 = vld [vmem:[%s1 + $0x8] sm:$0xf]
  %v32 = vld [vmem:[%s1 + $0xc] sm:$0xf]
  %v33 = vld [vmem:[%s1 + $0x10] sm:$0xf]
  %v34 = vld [vmem:[%s1 + $0x14] sm:$0xf]
  %v35 = vld [vmem:[%s1 + $0x18] sm:$0xf]
  %v36 = vld [vmem:[%s1 + $0x1c] sm:$0xf]
  %v37 = vld [vmem:[%s1 + $0x20] sm:$0xf]
  %v38 = vld [vmem:[%s1 + $0x24] sm:$0xf]
  %v39 = vld [vmem:[%s1 + $0x28] sm:$0xf]
  %v40 = vld [vmem:[%s1 + $0x2c] sm:$0xf]
  %v41 = vld [vmem:[%s1 + $0x30] sm:$0xf]
  %v42 = vld [vmem:[%s1 + $0x34] sm:$0xf]
  %v43 = vld [vmem:[%s1 + $0x38] sm:$0xf]
  %v44 = vld [vmem:[%s1 + $0x3c] sm:$0xf]
  %v45 = vld [vmem:[%s1 + $0x40] sm:$0xf]
  %v46 = vld [vmem:[%s1 + $0x44] sm:$0xf]
  %v47 = vld [vmem:[%s1 + $0x48] sm:$0xf]
  %v48 = vld [vmem:[%s1 + $0x4c] sm:$0xf]
  %v49 = vld [vmem:[%s1 + $0x50] sm:$0xf]
  %v50 = vld [vmem:[%s1 + $0x54] sm:$0xf]
  %v51 = vld [vmem:[%s1 + $0x58] sm:$0xf]
  %v52 = vld [vmem:[%s1 + $0x5c] sm:$0xf]
  %v53 = vld [vmem:[%s1 + $0x60] sm:$0xf]
  %v54 = vld [vmem:[%s1 + $0x64] sm:$0xf]
  %v55 = vld [vmem:[%s1 + $0x68] sm:$0xf]
  %v56 = vld [vmem:[%s1 + $0x6c] sm:$0xf]
  %v57 = vld [vmem:[%s1 + $0x70] sm:$0xf]
  %v58 = vld [vmem:[%s1 + $0x74] sm:$0xf]
  %v59 = vld [vmem:[%s1 + $0x78] sm:$0xf]
  %v60 = vld [vmem:[%s1 + $0x7c] sm:$0xf]
  %v63 = vunpack.c.l.b16 %v27
  %v64 = vunpack.c.h.b16 %v27
  %v65 = vunpack.c.l.b16 %v28
  %v66 = vunpack.c.h.b16 %v28
  %v67 = vpack.c.b16 %v65, %v63
  %v68 = vpack.c.b16 %v66, %v64
  %v103 = vunpack.c.l.b16 %v29
  %v104 = vunpack.c.l.b16 %v30
  %v105 = vunpack.c.l.b16 %v31
  %v106 = vunpack.c.l.b16 %v32
  %v107 = vunpack.c.l.b16 %v33
  %v108 = vunpack.c.l.b16 %v34
  %v109 = vunpack.c.l.b16 %v35
  %v110 = vunpack.c.l.b16 %v36
  %v111 = vunpack.c.l.b16 %v37
  %v112 = vunpack.c.l.b16 %v38
  %v113 = vunpack.c.l.b16 %v39
  %v114 = vunpack.c.l.b16 %v40
  %v115 = vunpack.c.l.b16 %v41
  %v116 = vunpack.c.l.b16 %v42
  %v117 = vunpack.c.l.b16 %v43
  %v118 = vunpack.c.l.b16 %v44
  %v119 = vunpack.c.l.b16 %v45
  %v120 = vunpack.c.l.b16 %v46
  %v121 = vunpack.c.l.b16 %v47
  %v122 = vunpack.c.l.b16 %v48
  %v123 = vunpack.c.l.b16 %v49
  %v124 = vunpack.c.l.b16 %v50
  %v125 = vunpack.c.l.b16 %v51
  %v126 = vunpack.c.l.b16 %v52
  %v127 = vunpack.c.l.b16 %v53
  %v128 = vunpack.c.l.b16 %v54
  %v129 = vunpack.c.l.b16 %v55
  %v130 = vunpack.c.l.b16 %v56
  %v131 = vunpack.c.l.b16 %v57
  %v132 = vunpack.c.l.b16 %v58
  %v133 = vunpack.c.l.b16 %v59
  %v134 = vunpack.c.l.b16 %v60
  %v135 = vpack.c.b16 %v104, %v103
  %v136 = vpack.c.b16 %v106, %v105
  %v137 = vpack.c.b16 %v108, %v107
  %v138 = vpack.c.b16 %v110, %v109
  %v139 = vpack.c.b16 %v112, %v111
  %v140 = vpack.c.b16 %v114, %v113
  %v141 = vpack.c.b16 %v116, %v115
  %v142 = vpack.c.b16 %v118, %v117
  %v143 = vpack.c.b16 %v120, %v119
  %v144 = vpack.c.b16 %v122, %v121
  %v145 = vpack.c.b16 %v124, %v123
  %v146 = vpack.c.b16 %v126, %v125
  %v147 = vpack.c.b16 %v128, %v127
  %v148 = vpack.c.b16 %v130, %v129
  %v149 = vpack.c.b16 %v132, %v131
  %v150 = vpack.c.b16 %v134, %v133
  %167 = vmatprep.subr.bf16.mxu0 0
  %168 = vmatpush1.bf16.msra.mxu0 %v135
  %169 = vmatprep.subr.bf16.mxu0 0
  %170 = vmatpush1.bf16.msra.mxu0 %v136
  %171 = vmatprep.subr.bf16.mxu0 0
  %172 = vmatpush1.bf16.msra.mxu0 %v137
  %173 = vmatprep.subr.bf16.mxu0 0
  %174 = vmatpush1.bf16.msra.mxu0 %v138
  %175 = vmatprep.subr.bf16.mxu0 0
  %176 = vmatpush1.bf16.msra.mxu0 %v139
  %177 = vmatprep.subr.bf16.mxu0 0
  %178 = vmatpush1.bf16.msra.mxu0 %v140
  %179 = vmatprep.subr.bf16.mxu0 0
  %180 = vmatpush1.bf16.msra.mxu0 %v141
  %181 = vmatprep.subr.bf16.mxu0 0
  %182 = vmatpush1.bf16.msra.mxu0 %v142
  %183 = vmatprep.subr.bf16.mxu0 0
  %184 = vmatpush1.bf16.msra.mxu0 %v143
  %185 = vmatprep.subr.bf16.mxu0 0
  %186 = vmatpush1.bf16.msra.mxu0 %v144
  %187 = vmatprep.subr.bf16.mxu0 0
  %188 = vmatpush1.bf16.msra.mxu0 %v145
  %189 = vmatprep.subr.bf16.mxu0 0
  %190 = vmatpush1.bf16.msra.mxu0 %v146
  %191 = vmatprep.subr.bf16.mxu0 0
  %192 = vmatpush1.bf16.msra.mxu0 %v147
  %193 = vmatprep.subr.bf16.mxu0 0
  %194 = vmatpush1.bf16.msra.mxu0 %v148
  %195 = vmatprep.subr.bf16.mxu0 0
  %196 = vmatpush1.bf16.msra.mxu0 %v149
  %197 = vmatprep.subr.bf16.mxu0 0
  %198 = vmatpush1.bf16.msra.mxu0 %v150
  %199 = vmatprep.mubr.bf16.mxu0 %v68
  %200 = vmatmul.mubr.bf16.gmra.mrb[0].mxu0 %v67
  %v201 = vpop.f32.mrb[0].mxu0
  %v202 = vadd.f32 0.0, %v201
  %v203 = vpop.f32.mrb[0].mxu0
  %v204 = vpop.f32.mrb[0].mxu0
  %v205 = vadd.f32 0.0, %v204
  %v206 = vpop.f32.mrb[0].mxu0
  %207 = vdwg.mxu0
  %v208 = vadd.f32 %v25, %v202
  %v209 = vadd.f32 %v26, %v205
  %vm210 = vcmask 523264
  %211 = vst.msk [vmem:[#allocation2] sm:$0xff] %vm210, %v208
  %212 = vst.msk [vmem:[#allocation2 + $0x8] sm:$0xff] %vm210, %v209
  // Predicated region
  $region22: #{ast_forward.17} parent=0 // pred_check
    %p213 = pneg %p18
  $region23: #{ast_forward.17} parent=0 // pred_check_branch
    %215 = sbr.rel (%p213) target = $region25
  $region24: #{ast_forward.17} parent=0 // pred_region
    %v216 = vld [vmem:[#allocation2] sm:$0xff]
    %v217 = vld [vmem:[#allocation2 + $0x8] sm:$0xff]
    %v218 = vld [vmem:[%s2] sm:$0x1]
    %v220 = vlaneseq
    %v221 = vshrl.u32 %v220, 7
    %v222 = vsub.s32 0, %v221
    %v223 = vrot.slane %v218, %v222
    %v225 = vadd.f32 %v216, %v223
    %v226 = vadd.f32 %v217, %v223
    %v227 = vld [vmem:[%s3] sm:$0xff]
    %v228 = vld [vmem:[%s3 + $0x8] sm:$0xff]
    %v229 = vadd.f32 %v225, %v227
    %v230 = vadd.f32 %v226, %v228
    %231 = vst.msk [vmem:[%s4] sm:$0xff] %vm210, %v229
    %232 = vst.msk [vmem:[%s4 + $0x8] sm:$0xff] %vm210, %v230
  $region25: #{ast_forward.17} parent=0 // pred_fallthru
    _
  // Predicated region
  $region26: #{ast_forward.17} parent=0 // pred_check
    _
  $region27: #{ast_forward.17} parent=0 // pred_check_branch
    %234 = sbr.rel (0) target = $region29
  $region28: #{ast_forward.17} parent=0 // pred_region
    _
  $region29: #{ast_forward.17} parent=0 // pred_fallthru
    _
  // Predicated region
  $region30: #{ast_forward.17} parent=0 // pred_check
    _
  $region31: #{ast_forward.17} parent=0 // pred_check_branch
    %236 = sbr.rel (0) target = $region33
  $region32: #{ast_forward.17} parent=0 // pred_region
    _
  $region33: #{ast_forward.17} parent=0 // pred_fallthru
    _

// kernel: ast_forward.14
$region0: #{ast_forward.14}
  #allocation0 [shape = 'u32[]', space=smem, size = 0x4, offset = 0x4, fixed_abs, tag = 'smem constant byte address 0x4 - core index']
  #allocation1 [shape = 'u32[144,128]{1,0:T(1,128)}', space=vmem, size = 0x12000, scoped, tag = 'internal scratch']
  %s0 = inlined_call_operand.vmem [shape: bf16[2,8,3,4,16], index: 0, kind: input, shape index: {}, may-alias: {0,1,2}]
  %s1 = inlined_call_operand.vmem [shape: bf16[2,8,3,4,16], index: 1, kind: input, shape index: {}, may-alias: {0,1,2}]
  %s2 = inlined_call_operand.vmem [shape: bf16[2,8,3,4,16], index: 2, kind: input, shape index: {}, may-alias: {0,1,2}]
  %s3 = inlined_call_operand.vmem [shape: bf16[2,8,4,16], index: 3, kind: output, shape index: {}]
  %s4 = sld [smem:[#allocation0]]
  $region168: #{ast_forward.14} parent=0
    _
  %s6 = ssub.s32 1, %s4
  %s7 = scalar_select 0, %s6, %s4
  $region1: #{ast_forward.14} parent=0
    #allocation2 [shape = 'u8[16384]{0}', space=vmem, size = 0x4000, scoped, tag = 'input window, operand 0']
    #allocation3 [shape = 'u8[16384]{0}', space=vmem, size = 0x4000, scoped, tag = 'input window, operand 1']
    #allocation4 [shape = 'u8[16384]{0}', space=vmem, size = 0x4000, scoped, tag = 'input window, operand 2']
    loop: start=0, step=1, limit=4
    $region2: #{ast_forward.14} parent=1 // loop_pre_header
      _
    $region3: #{ast_forward.14} parent=1 // loop_header
      %s9 = sphi 0, %s13
      %p10 = scmp.ge.s32.totalorder %s9, 4
      %s19 = sphi 0, %s21
      %s22 = sphi 0, %s19
      %s23 = sphi 0, %s22
      %s39 = sphi 0, %s23
      %s45 = sphi 0, %s47
      %s48 = sphi 0, %s45
      %s49 = sphi 0, %s48
      %s65 = sphi 0, %s49
      %s71 = sphi 0, %s73
      %s74 = sphi 0, %s71
      %s75 = sphi 0, %s74
      %s91 = sphi 0, %s75
      %s97 = sphi 0, %s99
      %s100 = sphi 0, %s97
      %s101 = sphi 0, %s100
      %s117 = sphi 0, %s101
    $region4: #{ast_forward.14} parent=1 // loop_header_branch
      %12 = sbr.rel (%p10) target = $region8
    $region5: #{ast_forward.14} parent=1 // loop_body
      %s14 = ssub.s32 %s9, 1
      %s15 = ssub.s32 %s9, 2
      %s16 = sadd.s32 %s9, 1
      %s17 = ssub.s32 %s9, %s16
      %p18 = scmp.eq.s32.totalorder %s17, 0
      %s20 = sadd.s32 %s19, 1
      %s21 = scalar_select %p18, %s19, %s20
      %p24 = pneg %p18
      %p25 = scmp.eq.s32.totalorder %s9, 1
      %p26 = por %p24, %p25
      %p27 = scmp.ne.s32.totalorder %s19, %s22
      %p28 = scmp.eq.s32.totalorder %s9, 0
      %p29 = por %p27, %p28
      %p30 = scmp.ne.s32.totalorder %s19, %s22
      %p31 = scmp.eq.s32.totalorder %s14, 1
      %p32 = por %p30, %p31
      %p33 = scmp.ne.s32.totalorder %s22, %s23
      %p34 = scmp.eq.s32.totalorder %s14, 0
      %p35 = por %p33, %p34
      %p36 = scmp.ne.s32.totalorder %s22, %s23
      %p37 = scmp.eq.s32.totalorder %s15, 1
      %p38 = por %p36, %p37
      %p40 = scmp.ne.s32.totalorder %s23, %s39
      %p41 = scmp.eq.s32.totalorder %s15, 0
      %p42 = por %p40, %p41
      %s43 = ssub.s32 %s9, %s16
      %p44 = scmp.eq.s32.totalorder %s43, 0
      %s46 = sadd.s32 %s45, 1
      %s47 = scalar_select %p44, %s45, %s46
      %p50 = pneg %p44
      %p51 = scmp.eq.s32.totalorder %s9, 1
      %p52 = por %p50, %p51
      %p53 = scmp.ne.s32.totalorder %s45, %s48
      %p54 = scmp.eq.s32.totalorder %s9, 0
      %p55 = por %p53, %p54
      %p56 = scmp.ne.s32.totalorder %s45, %s48
      %p57 = scmp.eq.s32.totalorder %s14, 1
      %p58 = por %p56, %p57
      %p59 = scmp.ne.s32.totalorder %s48, %s49
      %p60 = scmp.eq.s32.totalorder %s14, 0
      %p61 = por %p59, %p60
      %p62 = scmp.ne.s32.totalorder %s48, %s49
      %p63 = scmp.eq.s32.totalorder %s15, 1
      %p64 = por %p62, %p63
      %p66 = scmp.ne.s32.totalorder %s49, %s65
      %p67 = scmp.eq.s32.totalorder %s15, 0
      %p68 = por %p66, %p67
      %s69 = ssub.s32 %s9, %s16
      %p70 = scmp.eq.s32.totalorder %s69, 0
      %s72 = sadd.s32 %s71, 1
      %s73 = scalar_select %p70, %s71, %s72
      %p76 = pneg %p70
      %p77 = scmp.eq.s32.totalorder %s9, 1
      %p78 = por %p76, %p77
      %p79 = scmp.ne.s32.totalorder %s71, %s74
      %p80 = scmp.eq.s32.totalorder %s9, 0
      %p81 = por %p79, %p80
      %p82 = scmp.ne.s32.totalorder %s71, %s74
      %p83 = scmp.eq.s32.totalorder %s14, 1
      %p84 = por %p82, %p83
      %p85 = scmp.ne.s32.totalorder %s74, %s75
      %p86 = scmp.eq.s32.totalorder %s14, 0
      %p87 = por %p85, %p86
      %p88 = scmp.ne.s32.totalorder %s74, %s75
      %p89 = scmp.eq.s32.totalorder %s15, 1
      %p90 = por %p88, %p89
      %p92 = scmp.ne.s32.totalorder %s75, %s91
      %p93 = scmp.eq.s32.totalorder %s15, 0
      %p94 = por %p92, %p93
      %s95 = ssub.s32 %s9, %s16
      %p96 = scmp.eq.s32.totalorder %s95, 0
      %s98 = sadd.s32 %s97, 1
      %s99 = scalar_select %p96, %s97, %s98
      %p102 = pneg %p96
      %p103 = scmp.eq.s32.totalorder %s9, 1
      %p104 = por %p102, %p103
      %p105 = scmp.ne.s32.totalorder %s97, %s100
      %p106 = scmp.eq.s32.totalorder %s9, 0
      %p107 = por %p105, %p106
      %p108 = scmp.ne.s32.totalorder %s97, %s100
      %p109 = scmp.eq.s32.totalorder %s14, 1
      %p110 = por %p108, %p109
      %p111 = scmp.ne.s32.totalorder %s100, %s101
      %p112 = scmp.eq.s32.totalorder %s14, 0
      %p113 = por %p111, %p112
      %p114 = scmp.ne.s32.totalorder %s100, %s101
      %p115 = scmp.eq.s32.totalorder %s15, 1
      %p116 = por %p114, %p115
      %p118 = scmp.ne.s32.totalorder %s101, %s117
      %p119 = scmp.eq.s32.totalorder %s15, 0
      %p120 = por %p118, %p119
      %p121 = scmp.le.s32.totalorder 1, %s9
      %p122 = scmp.lt.s32.totalorder %s9, 3
      %p123 = pnand %p121, %p122
      %p124 = pneg %p123
      // Predicated region
      $region9: #{ast_forward.14} parent=5 // pred_check
        _
      $region10: #{ast_forward.14} parent=5 // pred_check_branch
        %126 = sbr.rel (%p123) target = $region12
      $region11: #{ast_forward.14} parent=5 // pred_region
        %s127 = ssub.s32 %s9, 1
      $region12: #{ast_forward.14} parent=5 // pred_fallthru
        _
      %p128 = scmp.lt.s32.totalorder %s9, 2
      // Predicated region
      $region13: #{ast_forward.14} parent=5 // pred_check
        %p129 = pneg %p128
      $region14: #{ast_forward.14} parent=5 // pred_check_branch
        %131 = sbr.rel (%p129) target = $region16
      $region15: #{ast_forward.14} parent=5 // pred_region
        // Predicated region
        $region17: #{ast_forward.14} parent=15 // pred_check
          %p132 = pneg %p29
        $region18: #{ast_forward.14} parent=15 // pred_check_branch
          %134 = sbr.rel (%p132) target = $region20
        $region19: #{ast_forward.14} parent=15 // pred_region
          %s135 = sand.u32 %s19, 1
          %s136 = sand.u32 %s19, 1
          %s137 = smul.addr %s136, 16
          %s138 = scalar_lea.vmem [#allocation2], %s137
          %s139 = smul.addr %s9, 24
          %s140 = smul.addr %s139, 2
          %s141 = scalar_lea.vmem %s0, %s140
          // Predicated region
          $region21: #{ast_forward.14} parent=19 // pred_check
            _
          $region22: #{ast_forward.14} parent=19 // pred_check_branch
            %143 = sbr.rel (0) target = $region24
          $region23: #{ast_forward.14} parent=19 // pred_region
            // Predicated region
            $region25: #{ast_forward.14} parent=23 // pred_check
              _
            $region26: #{ast_forward.14} parent=23 // pred_check_branch
              %145 = sbr.rel target = $region28
            $region27: #{ast_forward.14} parent=23 // pred_region
              // Predicated region
              $region40: #{ast_forward.14} parent=27 // pred_check
                _
              $region41: #{ast_forward.14} parent=27 // pred_check_branch
                %174 = sbr.rel (0) target = $region43
              $region42: #{ast_forward.14} parent=27 // pred_region
                loop: start=0, step=1, limit=1
                $region44: #{ast_forward.14} parent=42 // loop_pre_header
                  _
                $region45: #{ast_forward.14} parent=42 // loop_header
                  %s176 = sphi 0, %s180
                  %p177 = scmp.ge.s32.totalorder %s176, 1
                  %s181 = sphi %s141, %s141
                  %s182 = sphi %s138, %s138
                $region46: #{ast_forward.14} parent=42 // loop_header_branch
                  %179 = sbr.rel (%p177) target = $region50
                $region47: #{ast_forward.14} parent=42 // loop_body
                  _
                $region48: #{ast_forward.14} parent=42 // loop_footer
                  %s180 = sadd.s32 1, %s176
                $region49: #{ast_forward.14} parent=42 // loop_footer_branch
                  %175 = sbr.rel target = $region45
                $region50: #{ast_forward.14} parent=42 // loop_exit
                  _
                loop: start=0, step=1, limit=1
                $region51: #{ast_forward.14} parent=42 // loop_pre_header
                  _
                $region52: #{ast_forward.14} parent=42 // loop_header
                  %s185 = sphi 0, %s189
                  %p186 = scmp.ge.s32.totalorder %s185, 1
                  %s190 = sphi %s141, %s141
                  %s191 = sphi %s138, %s138
                $region53: #{ast_forward.14} parent=42 // loop_header_branch
                  %188 = sbr.rel (%p186) target = $region57
                $region54: #{ast_forward.14} parent=42 // loop_body
                  %v192 = vld [vmem:[%s190] sm:$0x3]
                  %193 = vst [vmem:[%s191] sm:$0x3] %v192
                  %v194 = vld [vmem:[%s190 + $0x6] sm:$0x3]
                  %195 = vst [vmem:[%s191 + $0x2] sm:$0x3] %v194
                  %v196 = vld [vmem:[%s190 + $0xc] sm:$0x3]
                  %197 = vst [vmem:[%s191 + $0x4] sm:$0x3] %v196
                  %v198 = vld [vmem:[%s190 + $0x12] sm:$0x3]
                  %199 = vst [vmem:[%s191 + $0x6] sm:$0x3] %v198
                  %v200 = vld [vmem:[%s190 + $0x18] sm:$0x3]
                  %201 = vst [vmem:[%s191 + $0x8] sm:$0x3] %v200
                  %v202 = vld [vmem:[%s190 + $0x1e] sm:$0x3]
                  %203 = vst [vmem:[%s191 + $0xa] sm:$0x3] %v202
                  %v204 = vld [vmem:[%s190 + $0x24] sm:$0x3]
                  %205 = vst [vmem:[%s191 + $0xc] sm:$0x3] %v204
                  %v206 = vld [vmem:[%s190 + $0x2a] sm:$0x3]
                  %207 = vst [vmem:[%s191 + $0xe] sm:$0x3] %v206
                $region55: #{ast_forward.14} parent=42 // loop_footer
                  %s189 = sadd.s32 1, %s185
                $region56: #{ast_forward.14} parent=42 // loop_footer_branch
                  %184 = sbr.rel target = $region52
                $region57: #{ast_forward.14} parent=42 // loop_exit
                  _
              $region43: #{ast_forward.14} parent=27 // pred_fallthru
                _
            $region28: #{ast_forward.14} parent=23 // pred_fallthru
              _
            // Predicated region
            $region29: #{ast_forward.14} parent=23 // pred_check
              _
            $region30: #{ast_forward.14} parent=23 // pred_check_branch
              %147 = sbr.rel (0) target = $region32
            $region31: #{ast_forward.14} parent=23 // pred_region
              loop: start=0, step=1, limit=1
              $region33: #{ast_forward.14} parent=31 // loop_pre_header
                _
              $region34: #{ast_forward.14} parent=31 // loop_header
                %s150 = sphi 0, %s154
                %p151 = scmp.ge.s32.totalorder %s150, 1
                %s155 = sphi %s141, %s141
                %s156 = sphi %s138, %s138
              $region35: #{ast_forward.14} parent=31 // loop_header_branch
                %153 = sbr.rel (%p151) target = $region39
              $region36: #{ast_forward.14} parent=31 // loop_body
                %v157 = vld [vmem:[%s155] sm:$0x3]
                %158 = vst [vmem:[%s156] sm:$0x3] %v157
                %v159 = vld [vmem:[%s155 + $0x6] sm:$0x3]
                %160 = vst [vmem:[%s156 + $0x2] sm:$0x3] %v159
                %v161 = vld [vmem:[%s155 + $0xc] sm:$0x3]
                %162 = vst [vmem:[%s156 + $0x4] sm:$0x3] %v161
                %v163 = vld [vmem:[%s155 + $0x12] sm:$0x3]
                %164 = vst [vmem:[%s156 + $0x6] sm:$0x3] %v163
                %v165 = vld [vmem:[%s155 + $0x18] sm:$0x3]
                %166 = vst [vmem:[%s156 + $0x8] sm:$0x3] %v165
                %v167 = vld [vmem:[%s155 + $0x1e] sm:$0x3]
                %168 = vst [vmem:[%s156 + $0xa] sm:$0x3] %v167
                %v169 = vld [vmem:[%s155 + $0x24] sm:$0x3]
                %170 = vst [vmem:[%s156 + $0xc] sm:$0x3] %v169
                %v171 = vld [vmem:[%s155 + $0x2a] sm:$0x3]
                %172 = vst [vmem:[%s156 + $0xe] sm:$0x3] %v171
              $region37: #{ast_forward.14} parent=31 // loop_footer
                %s154 = sadd.s32 1, %s150
              $region38: #{ast_forward.14} parent=31 // loop_footer_branch
                %149 = sbr.rel target = $region34
              $region39: #{ast_forward.14} parent=31 // loop_exit
                _
            $region32: #{ast_forward.14} parent=23 // pred_fallthru
              _
          $region24: #{ast_forward.14} parent=19 // pred_fallthru
            _
          %208 = vnop
        $region20: #{ast_forward.14} parent=15 // pred_fallthru
          _
        // Predicated region
        $region58: #{ast_forward.14} parent=15 // pred_check
          %p209 = pneg %p55
        $region59: #{ast_forward.14} parent=15 // pred_check_branch
          %211 = sbr.rel (%p209) target = $region61
        $region60: #{ast_forward.14} parent=15 // pred_region
          %s212 = sand.u32 %s45, 1
          %s213 = sand.u32 %s45, 1
          %s214 = smul.addr %s213, 16
          %s215 = scalar_lea.vmem [#allocation3], %s214
          %s216 = smul.addr %s9, 24
          %s217 = sadd.s32 1, %s216
          %s218 = smul.addr %s217, 2
          %s219 = scalar_lea.vmem %s1, %s218
          // Predicated region
          $region62: #{ast_forward.14} parent=60 // pred_check
            _
          $region63: #{ast_forward.14} parent=60 // pred_check_branch
            %221 = sbr.rel (0) target = $region65
          $region64: #{ast_forward.14} parent=60 // pred_region
            // Predicated region
            $region66: #{ast_forward.14} parent=64 // pred_check
              _
            $region67: #{ast_forward.14} parent=64 // pred_check_branch
              %223 = sbr.rel target = $region69
            $region68: #{ast_forward.14} parent=64 // pred_region
              // Predicated region
              $region81: #{ast_forward.14} parent=68 // pred_check
                _
              $region82: #{ast_forward.14} parent=68 // pred_check_branch
                %252 = sbr.rel (0) target = $region84
              $region83: #{ast_forward.14} parent=68 // pred_region
                loop: start=0, step=1, limit=1
                $region85: #{ast_forward.14} parent=83 // loop_pre_header
                  _
                $region86: #{ast_forward.14} parent=83 // loop_header
                  %s254 = sphi 0, %s258
                  %p255 = scmp.ge.s32.totalorder %s254, 1
                  %s259 = sphi %s219, %s219
                  %s260 = sphi %s215, %s215
                $region87: #{ast_forward.14} parent=83 // loop_header_branch
                  %257 = sbr.rel (%p255) target = $region91
                $region88: #{ast_forward.14} parent=83 // loop_body
                  _
                $region89: #{ast_forward.14} parent=83 // loop_footer
                  %s258 = sadd.s32 1, %s254
                $region90: #{ast_forward.14} parent=83 // loop_footer_branch
                  %253 = sbr.rel target = $region86
                $region91: #{ast_forward.14} parent=83 // loop_exit
                  _
                loop: start=0, step=1, limit=1
                $region92: #{ast_forward.14} parent=83 // loop_pre_header
                  _
                $region93: #{ast_forward.14} parent=83 // loop_header
                  %s263 = sphi 0, %s267
                  %p264 = scmp.ge.s32.totalorder %s263, 1
                  %s268 = sphi %s219, %s219
                  %s269 = sphi %s215, %s215
                $region94: #{ast_forward.14} parent=83 // loop_header_branch
                  %266 = sbr.rel (%p264) target = $region98
                $region95: #{ast_forward.14} parent=83 // loop_body
                  %v270 = vld [vmem:[%s268] sm:$0x3]
                  %271 = vst [vmem:[%s269] sm:$0x3] %v270
                  %v272 = vld [vmem:[%s268 + $0x6] sm:$0x3]
                  %273 = vst [vmem:[%s269 + $0x2] sm:$0x3] %v272
                  %v274 = vld [vmem:[%s268 + $0xc] sm:$0x3]
                  %275 = vst [vmem:[%s269 + $0x4] sm:$0x3] %v274
                  %v276 = vld [vmem:[%s268 + $0x12] sm:$0x3]
                  %277 = vst [vmem:[%s269 + $0x6] sm:$0x3] %v276
                  %v278 = vld [vmem:[%s268 + $0x18] sm:$0x3]
                  %279 = vst [vmem:[%s269 + $0x8] sm:$0x3] %v278
                  %v280 = vld [vmem:[%s268 + $0x1e] sm:$0x3]
                  %281 = vst [vmem:[%s269 + $0xa] sm:$0x3] %v280
                  %v282 = vld [vmem:[%s268 + $0x24] sm:$0x3]
                  %283 = vst [vmem:[%s269 + $0xc] sm:$0x3] %v282
                  %v284 = vld [vmem:[%s268 + $0x2a] sm:$0x3]
                  %285 = vst [vmem:[%s269 + $0xe] sm:$0x3] %v284
                $region96: #{ast_forward.14} parent=83 // loop_footer
                  %s267 = sadd.s32 1, %s263
                $region97: #{ast_forward.14} parent=83 // loop_footer_branch
                  %262 = sbr.rel target = $region93
                $region98: #{ast_forward.14} parent=83 // loop_exit
                  _
              $region84: #{ast_forward.14} parent=68 // pred_fallthru
                _
            $region69: #{ast_forward.14} parent=64 // pred_fallthru
              _
            // Predicated region
            $region70: #{ast_forward.14} parent=64 // pred_check
              _
            $region71: #{ast_forward.14} parent=64 // pred_check_branch
              %225 = sbr.rel (0) target = $region73
            $region72: #{ast_forward.14} parent=64 // pred_region
              loop: start=0, step=1, limit=1
              $region74: #{ast_forward.14} parent=72 // loop_pre_header
                _
              $region75: #{ast_forward.14} parent=72 // loop_header
                %s228 = sphi 0, %s232
                %p229 = scmp.ge.s32.totalorder %s228, 1
                %s233 = sphi %s219, %s219
                %s234 = sphi %s215, %s215
              $region76: #{ast_forward.14} parent=72 // loop_header_branch
                %231 = sbr.rel (%p229) target = $region80
              $region77: #{ast_forward.14} parent=72 // loop_body
                %v235 = vld [vmem:[%s233] sm:$0x3]
                %236 = vst [vmem:[%s234] sm:$0x3] %v235
                %v237 = vld [vmem:[%s233 + $0x6] sm:$0x3]
                %238 = vst [vmem:[%s234 + $0x2] sm:$0x3] %v237
                %v239 = vld [vmem:[%s233 + $0xc] sm:$0x3]
                %240 = vst [vmem:[%s234 + $0x4] sm:$0x3] %v239
                %v241 = vld [vmem:[%s233 + $0x12] sm:$0x3]
                %242 = vst [vmem:[%s234 + $0x6] sm:$0x3] %v241
                %v243 = vld [vmem:[%s233 + $0x18] sm:$0x3]
                %244 = vst [vmem:[%s234 + $0x8] sm:$0x3] %v243
                %v245 = vld [vmem:[%s233 + $0x1e] sm:$0x3]
                %246 = vst [vmem:[%s234 + $0xa] sm:$0x3] %v245
                %v247 = vld [vmem:[%s233 + $0x24] sm:$0x3]
                %248 = vst [vmem:[%s234 + $0xc] sm:$0x3] %v247
                %v249 = vld [vmem:[%s233 + $0x2a] sm:$0x3]
                %250 = vst [vmem:[%s234 + $0xe] sm:$0x3] %v249
              $region78: #{ast_forward.14} parent=72 // loop_footer
                %s232 = sadd.s32 1, %s228
              $region79: #{ast_forward.14} parent=72 // loop_footer_branch
                %227 = sbr.rel target = $region75
              $region80: #{ast_forward.14} parent=72 // loop_exit
                _
            $region73: #{ast_forward.14} parent=64 // pred_fallthru
              _
          $region65: #{ast_forward.14} parent=60 // pred_fallthru
            _
          %286 = vnop
        $region61: #{ast_forward.14} parent=15 // pred_fallthru
          _
        // Predicated region
        $region99: #{ast_forward.14} parent=15 // pred_check
          %p287 = pneg %p81
        $region100: #{ast_forward.14} parent=15 // pred_check_branch
          %289 = sbr.rel (%p287) target = $region102
        $region101: #{ast_forward.14} parent=15 // pred_region
          %s290 = sand.u32 %s71, 1
          %s291 = sand.u32 %s71, 1
          %s292 = smul.addr %s291, 16
          %s293 = scalar_lea.vmem [#allocation4], %s292
          %s294 = smul.addr %s9, 24
          %s295 = sadd.s32 2, %s294
          %s296 = smul.addr %s295, 2
          %s297 = scalar_lea.vmem %s2, %s296
          // Predicated region
          $region103: #{ast_forward.14} parent=101 // pred_check
            _
          $region104: #{ast_forward.14} parent=101 // pred_check_branch
            %299 = sbr.rel (0) target = $region106
          $region105: #{ast_forward.14} parent=101 // pred_region
            // Predicated region
            $region107: #{ast_forward.14} parent=105 // pred_check
              _
            $region108: #{ast_forward.14} parent=105 // pred_check_branch
              %301 = sbr.rel target = $region110
            $region109: #{ast_forward.14} parent=105 // pred_region
              // Predicated region
              $region122: #{ast_forward.14} parent=109 // pred_check
                _
              $region123: #{ast_forward.14} parent=109 // pred_check_branch
                %330 = sbr.rel (0) target = $region125
              $region124: #{ast_forward.14} parent=109 // pred_region
                loop: start=0, step=1, limit=1
                $region126: #{ast_forward.14} parent=124 // loop_pre_header
                  _
                $region127: #{ast_forward.14} parent=124 // loop_header
                  %s332 = sphi 0, %s336
                  %p333 = scmp.ge.s32.totalorder %s332, 1
                  %s337 = sphi %s297, %s297
                  %s338 = sphi %s293, %s293
                $region128: #{ast_forward.14} parent=124 // loop_header_branch
                  %335 = sbr.rel (%p333) target = $region132
                $region129: #{ast_forward.14} parent=124 // loop_body
                  _
                $region130: #{ast_forward.14} parent=124 // loop_footer
                  %s336 = sadd.s32 1, %s332
                $region131: #{ast_forward.14} parent=124 // loop_footer_branch
                  %331 = sbr.rel target = $region127
                $region132: #{ast_forward.14} parent=124 // loop_exit
                  _
                loop: start=0, step=1, limit=1
                $region133: #{ast_forward.14} parent=124 // loop_pre_header
                  _
                $region134: #{ast_forward.14} parent=124 // loop_header
                  %s341 = sphi 0, %s345
                  %p342 = scmp.ge.s32.totalorder %s341, 1
                  %s346 = sphi %s297, %s297
                  %s347 = sphi %s293, %s293
                $region135: #{ast_forward.14} parent=124 // loop_header_branch
                  %344 = sbr.rel (%p342) target = $region139
                $region136: #{ast_forward.14} parent=124 // loop_body
                  %v348 = vld [vmem:[%s346] sm:$0x3]
                  %349 = vst [vmem:[%s347] sm:$0x3] %v348
                  %v350 = vld [vmem:[%s346 + $0x6] sm:$0x3]
                  %351 = vst [vmem:[%s347 + $0x2] sm:$0x3] %v350
                  %v352 = vld [vmem:[%s346 + $0xc] sm:$0x3]
                  %353 = vst [vmem:[%s347 + $0x4] sm:$0x3] %v352
                  %v354 = vld [vmem:[%s346 + $0x12] sm:$0x3]
                  %355 = vst [vmem:[%s347 + $0x6] sm:$0x3] %v354
                  %v356 = vld [vmem:[%s346 + $0x18] sm:$0x3]
                  %357 = vst [vmem:[%s347 + $0x8] sm:$0x3] %v356
                  %v358 = vld [vmem:[%s346 + $0x1e] sm:$0x3]
                  %359 = vst [vmem:[%s347 + $0xa] sm:$0x3] %v358
                  %v360 = vld [vmem:[%s346 + $0x24] sm:$0x3]
                  %361 = vst [vmem:[%s347 + $0xc] sm:$0x3] %v360
                  %v362 = vld [vmem:[%s346 + $0x2a] sm:$0x3]
                  %363 = vst [vmem:[%s347 + $0xe] sm:$0x3] %v362
                $region137: #{ast_forward.14} parent=124 // loop_footer
                  %s345 = sadd.s32 1, %s341
                $region138: #{ast_forward.14} parent=124 // loop_footer_branch
                  %340 = sbr.rel target = $region134
                $region139: #{ast_forward.14} parent=124 // loop_exit
                  _
              $region125: #{ast_forward.14} parent=109 // pred_fallthru
                _
            $region110: #{ast_forward.14} parent=105 // pred_fallthru
              _
            // Predicated region
            $region111: #{ast_forward.14} parent=105 // pred_check
              _
            $region112: #{ast_forward.14} parent=105 // pred_check_branch
              %303 = sbr.rel (0) target = $region114
            $region113: #{ast_forward.14} parent=105 // pred_region
              loop: start=0, step=1, limit=1
              $region115: #{ast_forward.14} parent=113 // loop_pre_header
                _
              $region116: #{ast_forward.14} parent=113 // loop_header
                %s306 = sphi 0, %s310
                %p307 = scmp.ge.s32.totalorder %s306, 1
                %s311 = sphi %s297, %s297
                %s312 = sphi %s293, %s293
              $region117: #{ast_forward.14} parent=113 // loop_header_branch
                %309 = sbr.rel (%p307) target = $region121
              $region118: #{ast_forward.14} parent=113 // loop_body
                %v313 = vld [vmem:[%s311] sm:$0x3]
                %314 = vst [vmem:[%s312] sm:$0x3] %v313
                %v315 = vld [vmem:[%s311 + $0x6] sm:$0x3]
                %316 = vst [vmem:[%s312 + $0x2] sm:$0x3] %v315
                %v317 = vld [vmem:[%s311 + $0xc] sm:$0x3]
                %318 = vst [vmem:[%s312 + $0x4] sm:$0x3] %v317
                %v319 = vld [vmem:[%s311 + $0x12] sm:$0x3]
                %320 = vst [vmem:[%s312 + $0x6] sm:$0x3] %v319
                %v321 = vld [vmem:[%s311 + $0x18] sm:$0x3]
                %322 = vst [vmem:[%s312 + $0x8] sm:$0x3] %v321
                %v323 = vld [vmem:[%s311 + $0x1e] sm:$0x3]
                %324 = vst [vmem:[%s312 + $0xa] sm:$0x3] %v323
                %v325 = vld [vmem:[%s311 + $0x24] sm:$0x3]
                %326 = vst [vmem:[%s312 + $0xc] sm:$0x3] %v325
                %v327 = vld [vmem:[%s311 + $0x2a] sm:$0x3]
                %328 = vst [vmem:[%s312 + $0xe] sm:$0x3] %v327
              $region119: #{ast_forward.14} parent=113 // loop_footer
                %s310 = sadd.s32 1, %s306
              $region120: #{ast_forward.14} parent=113 // loop_footer_branch
                %305 = sbr.rel target = $region116
              $region121: #{ast_forward.14} parent=113 // loop_exit
                _
            $region114: #{ast_forward.14} parent=105 // pred_fallthru
              _
          $region106: #{ast_forward.14} parent=101 // pred_fallthru
            _
          %364 = vnop
        $region102: #{ast_forward.14} parent=15 // pred_fallthru
          _
      $region16: #{ast_forward.14} parent=5 // pred_fallthru
        _
      %p365 = scmp.le.s32.totalorder 1, %s9
      %p366 = scmp.lt.s32.totalorder %s9, 3
      %p367 = pnand %p365, %p366
      %p368 = pneg %p367
      // Predicated region
      $region140: #{ast_forward.14} parent=5 // pred_check
        _
      $region141: #{ast_forward.14} parent=5 // pred_check_branch
        %370 = sbr.rel (%p367) target = $region143
      $region142: #{ast_forward.14} parent=5 // pred_region
        %s371 = ssub.s32 %s9, 1
        %s372 = sand.u32 %s22, 1
        %s373 = sand.u32 %s22, 1
        %s374 = smul.addr %s373, 16
        %s375 = scalar_lea.vmem [#allocation2], %s374
        // Predicated region
        $region144: #{ast_forward.14} parent=142 // pred_check
          %p376 = pneg %p35
        $region145: #{ast_forward.14} parent=142 // pred_check_branch
          %378 = sbr.rel (%p376) target = $region147
        $region146: #{ast_forward.14} parent=142 // pred_region
          _
        $region147: #{ast_forward.14} parent=142 // pred_fallthru
          _
        %s379 = sand.u32 %s48, 1
        %s380 = sand.u32 %s48, 1
        %s381 = smul.addr %s380, 16
        %s382 = scalar_lea.vmem [#allocation3], %s381
        // Predicated region
        $region148: #{ast_forward.14} parent=142 // pred_check
          %p383 = pneg %p61
        $region149: #{ast_forward.14} parent=142 // pred_check_branch
          %385 = sbr.rel (%p383) target = $region151
        $region150: #{ast_forward.14} parent=142 // pred_region
          _
        $region151: #{ast_forward.14} parent=142 // pred_fallthru
          _
        %s386 = sand.u32 %s74, 1
        %s387 = sand.u32 %s74, 1
        %s388 = smul.addr %s387, 16
        %s389 = scalar_lea.vmem [#allocation4], %s388
        // Predicated region
        $region152: #{ast_forward.14} parent=142 // pred_check
          %p390 = pneg %p87
        $region153: #{ast_forward.14} parent=142 // pred_check_branch
          %392 = sbr.rel (%p390) target = $region155
        $region154: #{ast_forward.14} parent=142 // pred_region
          _
        $region155: #{ast_forward.14} parent=142 // pred_fallthru
          _
        %s393 = sand.u32 %s22, 1
        %s394 = sand.u32 %s22, 1
        %s395 = smul.addr %s394, 16
        %s396 = scalar_lea.vmem [#allocation2], %s395
        %p397 = pneg %p35
        %p398 = pneg %p32
        %s399 = sand.u32 %s48, 1
        %s400 = sand.u32 %s48, 1
        %s401 = smul.addr %s400, 16
        %s402 = scalar_lea.vmem [#allocation3], %s401
        %p403 = pneg %p61
        %p404 = pneg %p58
        %s405 = sand.u32 %s74, 1
        %s406 = sand.u32 %s74, 1
        %s407 = smul.addr %s406, 16
        %s408 = scalar_lea.vmem [#allocation4], %s407
        %p409 = pneg %p87
        %p410 = pneg %p84
        %p411 = pneg %p113
        %p412 = pneg %p110
        %p413 = scmp.lt.s32.totalorder %s14, 1
        %s414 = scalar_select %p413, %s14, 1
        %s415 = smul.addr %s414, 8
        %s416 = smul.addr %s415, 2
        %s417 = scalar_lea.vmem %s3, %s416
        %p418 = scmp.lt.s32.totalorder %s14, 1
        %s419 = scalar_select %p418, %s14, 1
        %s420 = smul.addr %s419, 8
        %s421 = smul.addr %s420, 2
        %s422 = scalar_lea.vmem %s3, %s421
        %v424 = vld [vmem:[%s375] sm:$0x1]
        %v425 = vld [vmem:[%s375 + $0x2] sm:$0x1]
        %v426 = vld [vmem:[%s375 + $0x4] sm:$0x1]
        %v427 = vld [vmem:[%s375 + $0x6] sm:$0x1]
        %v428 = vld [vmem:[%s375 + $0x8] sm:$0x1]
        %v429 = vld [vmem:[%s375 + $0xa] sm:$0x1]
        %v430 = vld [vmem:[%s375 + $0xc] sm:$0x1]
        %v431 = vld [vmem:[%s375 + $0xe] sm:$0x1]
        %v432 = vld [vmem:[%s382] sm:$0x1]
        %v433 = vld [vmem:[%s382 + $0x2] sm:$0x1]
        %v434 = vld [vmem:[%s382 + $0x4] sm:$0x1]
        %v435 = vld [vmem:[%s382 + $0x6] sm:$0x1]
        %v436 = vld [vmem:[%s382 + $0x8] sm:$0x1]
        %v437 = vld [vmem:[%s382 + $0xa] sm:$0x1]
        %v438 = vld [vmem:[%s382 + $0xc] sm:$0x1]
        %v439 = vld [vmem:[%s382 + $0xe] sm:$0x1]
        %v440 = vld [vmem:[%s389] sm:$0x1]
        %v441 = vld [vmem:[%s389 + $0x2] sm:$0x1]
        %v442 = vld [vmem:[%s389 + $0x4] sm:$0x1]
        %v443 = vld [vmem:[%s389 + $0x6] sm:$0x1]
        %v444 = vld [vmem:[%s389 + $0x8] sm:$0x1]
        %v445 = vld [vmem:[%s389 + $0xa] sm:$0x1]
        %v446 = vld [vmem:[%s389 + $0xc] sm:$0x1]
        %v447 = vld [vmem:[%s389 + $0xe] sm:$0x1]
        %v457 = vunpack.c.l.s4 1983009808
        %v458 = vunpack.c.0.s8 %v457
        %v459 = vlaneseq
        %v460 = vshrl.u32 %v459, 7
        %v461 = vsub.s32 %v458, %v460
        %v462 = vrot.slane %v424, %v461
        %v464 = vunpack.c.l.s4 1983009808
        %v465 = vunpack.c.0.s8 %v464
        %v466 = vlaneseq
        %v467 = vshrl.u32 %v466, 7
        %v468 = vsub.s32 %v465, %v467
        %v469 = vrot.slane %v425, %v468
        %v471 = vunpack.c.l.s4 1983009808
        %v472 = vunpack.c.0.s8 %v471
        %v473 = vlaneseq
        %v474 = vshrl.u32 %v473, 7
        %v475 = vsub.s32 %v472, %v474
        %v476 = vrot.slane %v426, %v475
        %v478 = vunpack.c.l.s4 1983009808
        %v479 = vunpack.c.0.s8 %v478
        %v480 = vlaneseq
        %v481 = vshrl.u32 %v480, 7
        %v482 = vsub.s32 %v479, %v481
        %v483 = vrot.slane %v427, %v482
        %v485 = vunpack.c.l.s4 1983009808
        %v486 = vunpack.c.0.s8 %v485
        %v487 = vlaneseq
        %v488 = vshrl.u32 %v487, 7
        %v489 = vsub.s32 %v486, %v488
        %v490 = vrot.slane %v428, %v489
        %v492 = vunpack.c.l.s4 1983009808
        %v493 = vunpack.c.0.s8 %v492
        %v494 = vlaneseq
        %v495 = vshrl.u32 %v494, 7
        %v496 = vsub.s32 %v493, %v495
        %v497 = vrot.slane %v429, %v496
        %v499 = vunpack.c.l.s4 1983009808
        %v500 = vunpack.c.0.s8 %v499
        %v501 = vlaneseq
        %v502 = vshrl.u32 %v501, 7
        %v503 = vsub.s32 %v500, %v502
        %v504 = vrot.slane %v430, %v503
        %v506 = vunpack.c.l.s4 1983009808
        %v507 = vunpack.c.0.s8 %v506
        %v508 = vlaneseq
        %v509 = vshrl.u32 %v508, 7
        %v510 = vsub.s32 %v507, %v509
        %v511 = vrot.slane %v431, %v510
        %v512 = vunpack.c.l.b16 %v462
        %v513 = vunpack.c.l.b16 %v469
        %v514 = vunpack.c.l.b16 %v476
        %v515 = vunpack.c.l.b16 %v483
        %v516 = vunpack.c.l.b16 %v490
        %v517 = vunpack.c.l.b16 %v497
        %v518 = vunpack.c.l.b16 %v504
        %v519 = vunpack.c.l.b16 %v511
        %v520 = vrot.slane %v513, 7
        %vm521 = vcmask 1041409
        %v522 = vsel %vm521, %v520, %v512
        %v523 = vrot.slane %v514, 6
        %vm524 = vcmask 1042434
        %v525 = vsel %vm524, %v523, %v522
        %v526 = vrot.slane %v515, 5
        %vm527 = vcmask 1043459
        %v528 = vsel %vm527, %v526, %v525
        %v529 = vrot.slane %v516, 4
        %vm530 = vcmask 1044484
        %v531 = vsel %vm530, %v529, %v528
        %v532 = vrot.slane %v517, 3
        %vm533 = vcmask 1045509
        %v534 = vsel %vm533, %v532, %v531
        %v535 = vrot.slane %v518, 2
        %vm536 = vcmask 1046534
        %v537 = vsel %vm536, %v535, %v534
        %v538 = vrot.slane %v519, 1
        %vm539 = vcmask 1047559
        %v540 = vsel %vm539, %v538, %v537
        %v541 = vpack.c.b16 %v540, %v540
        %v551 = vunpack.c.l.s4 1983009808
        %v552 = vunpack.c.0.s8 %v551
        %v553 = vlaneseq
        %v554 = vshrl.u32 %v553, 7
        %v555 = vsub.s32 %v552, %v554
        %v556 = vrot.slane %v432, %v555
        %v558 = vunpack.c.l.s4 1983009808
        %v559 = vunpack.c.0.s8 %v558
        %v560 = vlaneseq
        %v561 = vshrl.u32 %v560, 7
        %v562 = vsub.s32 %v559, %v561
        %v563 = vrot.slane %v433, %v562
        %v565 = vunpack.c.l.s4 1983009808
        %v566 = vunpack.c.0.s8 %v565
        %v567 = vlaneseq
        %v568 = vshrl.u32 %v567, 7
        %v569 = vsub.s32 %v566, %v568
        %v570 = vrot.slane %v434, %v569
        %v572 = vunpack.c.l.s4 1983009808
        %v573 = vunpack.c.0.s8 %v572
        %v574 = vlaneseq
        %v575 = vshrl.u32 %v574, 7
        %v576 = vsub.s32 %v573, %v575
        %v577 = vrot.slane %v435, %v576
        %v579 = vunpack.c.l.s4 1983009808
        %v580 = vunpack.c.0.s8 %v579
        %v581 = vlaneseq
        %v582 = vshrl.u32 %v581, 7
        %v583 = vsub.s32 %v580, %v582
        %v584 = vrot.slane %v436, %v583
        %v586 = vunpack.c.l.s4 1983009808
        %v587 = vunpack.c.0.s8 %v586
        %v588 = vlaneseq
        %v589 = vshrl.u32 %v588, 7
        %v590 = vsub.s32 %v587, %v589
        %v591 = vrot.slane %v437, %v590
        %v593 = vunpack.c.l.s4 1983009808
        %v594 = vunpack.c.0.s8 %v593
        %v595 = vlaneseq
        %v596 = vshrl.u32 %v595, 7
        %v597 = vsub.s32 %v594, %v596
        %v598 = vrot.slane %v438, %v597
        %v600 = vunpack.c.l.s4 1983009808
        %v601 = vunpack.c.0.s8 %v600
        %v602 = vlaneseq
        %v603 = vshrl.u32 %v602, 7
        %v604 = vsub.s32 %v601, %v603
        %v605 = vrot.slane %v439, %v604
        %v606 = vunpack.c.l.b16 %v556
        %v607 = vunpack.c.l.b16 %v563
        %v608 = vunpack.c.l.b16 %v570
        %v609 = vunpack.c.l.b16 %v577
        %v610 = vunpack.c.l.b16 %v584
        %v611 = vunpack.c.l.b16 %v591
        %v612 = vunpack.c.l.b16 %v598
        %v613 = vunpack.c.l.b16 %v605
        %v614 = vrot.slane %v607, 7
        %v615 = vsel %vm521, %v614, %v606
        %v616 = vrot.slane %v608, 6
        %v617 = vsel %vm524, %v616, %v615
        %v618 = vrot.slane %v609, 5
        %v619 = vsel %vm527, %v618, %v617
        %v620 = vrot.slane %v610, 4
        %v621 = vsel %vm530, %v620, %v619
        %v622 = vrot.slane %v611, 3
        %v623 = vsel %vm533, %v622, %v621
        %v624 = vrot.slane %v612, 2
        %v625 = vsel %vm536, %v624, %v623
        %v626 = vrot.slane %v613, 1
        %v627 = vsel %vm539, %v626, %v625
        %v628 = vpack.c.b16 %v627, %v627
        %vm629 = vcmask 130048
        %v631 = vsel %vm629, %v541, 0
        %v634 = vsel %vm629, %v628, 0
        %636 = vmatprep.subr.bf16.mxu0 0
        %637 = vmatpush1.bf16.xpose.msra.mxu0 %v634
        %638 = vmatprep.subr.bf16.mxu0 0
        %639 = vmatpush1.bf16.xpose.msra.mxu0 0
        %640 = vmatprep.subr.bf16.mxu0 0
        %641 = vmatpush1.bf16.xpose.msra.mxu0 0
        %642 = vmatprep.subr.bf16.mxu0 0
        %643 = vmatpush1.bf16.xpose.msra.mxu0 0
        %644 = vmatprep.subr.bf16.mxu0 0
        %645 = vmatpush1.bf16.xpose.msra.mxu0 0
        %646 = vmatprep.subr.bf16.mxu0 0
        %647 = vmatpush1.bf16.xpose.msra.mxu0 0
        %648 = vmatprep.subr.bf16.mxu0 0
        %649 = vmatpush1.bf16.xpose.msra.mxu0 0
        %650 = vmatprep.subr.bf16.mxu0 0
        %651 = vmatpush1.bf16.xpose.msra.mxu0 0
        %652 = vmatprep.subr.bf16.mxu0 0
        %653 = vmatpush1.bf16.xpose.msra.mxu0 0
        %654 = vmatprep.subr.bf16.mxu0 0
        %655 = vmatpush1.bf16.xpose.msra.mxu0 0
        %656 = vmatprep.subr.bf16.mxu0 0
        %657 = vmatpush1.bf16.xpose.msra.mxu0 0
        %658 = vmatprep.subr.bf16.mxu0 0
        %659 = vmatpush1.bf16.xpose.msra.mxu0 0
        %660 = vmatprep.subr.bf16.mxu0 0
        %661 = vmatpush1.bf16.xpose.msra.mxu0 0
        %662 = vmatprep.subr.bf16.mxu0 0
        %663 = vmatpush1.bf16.xpose.msra.mxu0 0
        %664 = vmatprep.subr.bf16.mxu0 0
        %665 = vmatpush1.bf16.xpose.msra.mxu0 0
        %666 = vmatprep.subr.bf16.mxu0 0
        %667 = vmatpush1.bf16.xpose.msra.mxu0 0
        %668 = vmatprep.mubr.bf16.mxu0 0
        %669 = vmatmul.mubr.bf16.gmra.mrb[0].mxu0 %v631
        %v670 = vpop.f32.mrb[0].mxu0
        %v671 = vadd.f32 0.0, %v670
        %v672 = vpop.f32.mrb[0].mxu0
        %v673 = vpop.f32.mrb[0].mxu0
        %v674 = vpop.f32.mrb[0].mxu0
        %675 = vdwg.mxu0
        %v676 = vmul.f32 %v671, 0.25
        %vm677 = vcmask 64512
        %v678 = vsel %vm677, %v676, -inf
        %679 = vmax.xlane.f32.xlu0 %v678
        %v680 = vpop.xlane.xlu0 %679
        %v681 = vsub.f32 %v676, %v680
        %v682 = vmul.f32 %v681, 1.442695
        %v683 = vpow.pop %v682
        %v684 = vsel %vm677, %v683, 0.0
        %685 = vadd.xlane.f32.xlu0 %v684
        %v686 = vpop.xlane.xlu0 %685
        %v687 = vrcp.pop %v686
        %v688 = vmul.f32 %v683, %v687
        %v689 = vpack.c.bf16 %v688, %v688
        %v699 = vunpack.c.l.s4 1983009808
        %v700 = vunpack.c.0.s8 %v699
        %v701 = vlaneseq
        %v702 = vshrl.u32 %v701, 7
        %v703 = vsub.s32 %v700, %v702
        %v704 = vrot.slane %v440, %v703
        %v706 = vunpack.c.l.s4 1983009808
        %v707 = vunpack.c.0.s8 %v706
        %v708 = vlaneseq
        %v709 = vshrl.u32 %v708, 7
        %v710 = vsub.s32 %v707, %v709
        %v711 = vrot.slane %v441, %v710
        %v713 = vunpack.c.l.s4 1983009808
        %v714 = vunpack.c.0.s8 %v713
        %v715 = vlaneseq
        %v716 = vshrl.u32 %v715, 7
        %v717 = vsub.s32 %v714, %v716
        %v718 = vrot.slane %v442, %v717
        %v720 = vunpack.c.l.s4 1983009808
        %v721 = vunpack.c.0.s8 %v720
        %v722 = vlaneseq
        %v723 = vshrl.u32 %v722, 7
        %v724 = vsub.s32 %v721, %v723
        %v725 = vrot.slane %v443, %v724
        %v727 = vunpack.c.l.s4 1983009808
        %v728 = vunpack.c.0.s8 %v727
        %v729 = vlaneseq
        %v730 = vshrl.u32 %v729, 7
        %v731 = vsub.s32 %v728, %v730
        %v732 = vrot.slane %v444, %v731
        %v734 = vunpack.c.l.s4 1983009808
        %v735 = vunpack.c.0.s8 %v734
        %v736 = vlaneseq
        %v737 = vshrl.u32 %v736, 7
        %v738 = vsub.s32 %v735, %v737
        %v739 = vrot.slane %v445, %v738
        %v741 = vunpack.c.l.s4 1983009808
        %v742 = vunpack.c.0.s8 %v741
        %v743 = vlaneseq
        %v744 = vshrl.u32 %v743, 7
        %v745 = vsub.s32 %v742, %v744
        %v746 = vrot.slane %v446, %v745
        %v748 = vunpack.c.l.s4 1983009808
        %v749 = vunpack.c.0.s8 %v748
        %v750 = vlaneseq
        %v751 = vshrl.u32 %v750, 7
        %v752 = vsub.s32 %v749, %v751
        %v753 = vrot.slane %v447, %v752
        %v754 = vunpack.c.l.b16 %v704
        %v755 = vunpack.c.l.b16 %v711
        %v756 = vunpack.c.l.b16 %v718
        %v757 = vunpack.c.l.b16 %v725
        %v758 = vunpack.c.l.b16 %v732
        %v759 = vunpack.c.l.b16 %v739
        %v760 = vunpack.c.l.b16 %v746
        %v761 = vunpack.c.l.b16 %v753
        %v762 = vrot.slane %v755, 7
        %v763 = vsel %vm521, %v762, %v754
        %v764 = vrot.slane %v756, 6
        %v765 = vsel %vm524, %v764, %v763
        %v766 = vrot.slane %v757, 5
        %v767 = vsel %vm527, %v766, %v765
        %v768 = vrot.slane %v758, 4
        %v769 = vsel %vm530, %v768, %v767
        %v770 = vrot.slane %v759, 3
        %v771 = vsel %vm533, %v770, %v769
        %v772 = vrot.slane %v760, 2
        %v773 = vsel %vm536, %v772, %v771
        %v774 = vrot.slane %v761, 1
        %v775 = vsel %vm539, %v774, %v773
        %v776 = vpack.c.b16 %v775, %v775
        %v778 = vsel %vm677, %v689, 0
        %vm780 = vcmask 1043456
        %v782 = vsel %vm780, %v776, 0
        %784 = vmatprep.subr.bf16.mxu0 0
        %785 = vmatpush1.bf16.msra.mxu0 %v782
        %786 = vmatprep.subr.bf16.mxu0 0
        %787 = vmatpush1.bf16.msra.mxu0 0
        %788 = vmatprep.subr.bf16.mxu0 0
        %789 = vmatpush1.bf16.msra.mxu0 0
        %790 = vmatprep.subr.bf16.mxu0 0
        %791 = vmatpush1.bf16.msra.mxu0 0
        %792 = vmatprep.subr.bf16.mxu0 0
        %793 = vmatpush1.bf16.msra.mxu0 0
        %794 = vmatprep.subr.bf16.mxu0 0
        %795 = vmatpush1.bf16.msra.mxu0 0
        %796 = vmatprep.subr.bf16.mxu0 0
        %797 = vmatpush1.bf16.msra.mxu0 0
        %798 = vmatprep.subr.bf16.mxu0 0
        %799 = vmatpush1.bf16.msra.mxu0 0
        %800 = vmatprep.subr.bf16.mxu0 0
        %801 = vmatpush1.bf16.msra.mxu0 0
        %802 = vmatprep.subr.bf16.mxu0 0
        %803 = vmatpush1.bf16.msra.mxu0 0
        %804 = vmatprep.subr.bf16.mxu0 0
        %805 = vmatpush1.bf16.msra.mxu0 0
        %806 = vmatprep.subr.bf16.mxu0 0
        %807 = vmatpush1.bf16.msra.mxu0 0
        %808 = vmatprep.subr.bf16.mxu0 0
        %809 = vmatpush1.bf16.msra.mxu0 0
        %810 = vmatprep.subr.bf16.mxu0 0
        %811 = vmatpush1.bf16.msra.mxu0 0
        %812 = vmatprep.subr.bf16.mxu0 0
        %813 = vmatpush1.bf16.msra.mxu0 0
        %814 = vmatprep.subr.bf16.mxu0 0
        %815 = vmatpush1.bf16.msra.mxu0 0
        %816 = vmatprep.mubr.bf16.mxu0 0
        %817 = vmatmul.mubr.bf16.gmra.mrb[0].mxu0 %v778
        %v818 = vpop.f32.mrb[0].mxu0
        %v819 = vadd.f32 0.0, %v818
        %v820 = vpop.f32.mrb[0].mxu0
        %v821 = vpop.f32.mrb[0].mxu0
        %v822 = vpop.f32.mrb[0].mxu0
        %823 = vdwg.mxu0
        %v824 = vpack.c.bf16 %v819, %v819
        %v827 = vunpack.c.l.s4 1966171168
        %v828 = vunpack.c.0.s8 %v827
        %v829 = vlaneseq
        %v830 = vshrl.u32 %v829, 7
        %v831 = vsub.s32 %v828, %v830
        %v832 = vrot.slane %v824, %v831
        %v833 = vcombine.high %v832, %v832
        %v835 = vunpack.c.l.s4 1966171168
        %v836 = vunpack.c.0.s8 %v835
        %v837 = vlaneseq
        %v838 = vshrl.u32 %v837, 7
        %v839 = vsub.s32 %v836, %v838
        %v840 = vrot.slane %v832, %v839
        %v842 = vunpack.c.l.s4 1966171168
        %v843 = vunpack.c.0.s8 %v842
        %v844 = vlaneseq
        %v845 = vshrl.u32 %v844, 7
        %v846 = vsub.s32 %v843, %v845
        %v847 = vrot.slane %v833, %v846
        %v848 = vcombine.high %v840, %v840
        %v849 = vcombine.high %v847, %v847
        %v850 = vunpack.i.l.s16 %v840
        %v851 = vunpack.i.h.s16 %v840
        %v852 = vunpack.i.l.s16 %v847
        %v853 = vunpack.i.h.s16 %v847
        %v854 = vunpack.i.l.s16 %v848
        %v855 = vunpack.i.h.s16 %v848
        %v856 = vunpack.i.l.s16 %v849
        %v857 = vunpack.i.h.s16 %v849
        %v858 = vpack.i.b16 %v850, %v850
        %v859 = vpack.i.b16 %v851, %v851
        %v860 = vpack.i.b16 %v852, %v852
        %v861 = vpack.i.b16 %v853, %v853
        %v862 = vpack.i.b16 %v854, %v854
        %v863 = vpack.i.b16 %v855, %v855
        %v864 = vpack.i.b16 %v856, %v856
        %v865 = vpack.i.b16 %v857, %v857
        %v867 = vunpack.c.l.s4 857870592
        %v868 = vunpack.c.0.s8 %v867
        %v869 = vlaneseq
        %v870 = vshrl.u32 %v869, 7
        %v871 = vsub.s32 %v868, %v870
        %v872 = vrot.slane %v858, %v871
        %v874 = vunpack.c.l.s4 857870592
        %v875 = vunpack.c.0.s8 %v874
        %v876 = vlaneseq
        %v877 = vshrl.u32 %v876, 7
        %v878 = vsub.s32 %v875, %v877
        %v879 = vrot.slane %v859, %v878
        %v881 = vunpack.c.l.s4 857870592
        %v882 = vunpack.c.0.s8 %v881
        %v883 = vlaneseq
        %v884 = vshrl.u32 %v883, 7
        %v885 = vsub.s32 %v882, %v884
        %v886 = vrot.slane %v860, %v885
        %v888 = vunpack.c.l.s4 857870592
        %v889 = vunpack.c.0.s8 %v888
        %v890 = vlaneseq
        %v891 = vshrl.u32 %v890, 7
        %v892 = vsub.s32 %v889, %v891
        %v893 = vrot.slane %v861, %v892
        %v895 = vunpack.c.l.s4 857870592
        %v896 = vunpack.c.0.s8 %v895
        %v897 = vlaneseq
        %v898 = vshrl.u32 %v897, 7
        %v899 = vsub.s32 %v896, %v898
        %v900 = vrot.slane %v862, %v899
        %v902 = vunpack.c.l.s4 857870592
        %v903 = vunpack.c.0.s8 %v902
        %v904 = vlaneseq
        %v905 = vshrl.u32 %v904, 7
        %v906 = vsub.s32 %v903, %v905
        %v907 = vrot.slane %v863, %v906
        %v909 = vunpack.c.l.s4 857870592
        %v910 = vunpack.c.0.s8 %v909
        %v911 = vlaneseq
        %v912 = vshrl.u32 %v911, 7
        %v913 = vsub.s32 %v910, %v912
        %v914 = vrot.slane %v864, %v913
        %v916 = vunpack.c.l.s4 857870592
        %v917 = vunpack.c.0.s8 %v916
        %v918 = vlaneseq
        %v919 = vshrl.u32 %v918, 7
        %v920 = vsub.s32 %v917, %v919
        %v921 = vrot.slane %v865, %v920
        %vm930 = vcmask 122880
        %vm931 = vsmask.f32 256
        %vm932 = vmand %vm930, %vm931
        %v933 = vld [vmem:[%s422] sm:$0x1]
        %v934 = vsel %vm932, %v872, %v933
        %935 = vst [vmem:[%s422] sm:$0x1] %v934
        %v936 = vld [vmem:[%s422 + $0x2] sm:$0x1]
        %v937 = vsel %vm932, %v879, %v936
        %938 = vst [vmem:[%s422 + $0x2] sm:$0x1] %v937
        %v939 = vld [vmem:[%s422 + $0x4] sm:$0x1]
        %v940 = vsel %vm932, %v886, %v939
        %941 = vst [vmem:[%s422 + $0x4] sm:$0x1] %v940
        %v942 = vld [vmem:[%s422 + $0x6] sm:$0x1]
        %v943 = vsel %vm932, %v893, %v942
        %944 = vst [vmem:[%s422 + $0x6] sm:$0x1] %v943
        %v945 = vld [vmem:[%s422 + $0x8] sm:$0x1]
        %v946 = vsel %vm932, %v900, %v945
        %947 = vst [vmem:[%s422 + $0x8] sm:$0x1] %v946
        %v948 = vld [vmem:[%s422 + $0xa] sm:$0x1]
        %v949 = vsel %vm932, %v907, %v948
        %950 = vst [vmem:[%s422 + $0xa] sm:$0x1] %v949
        %v951 = vld [vmem:[%s422 + $0xc] sm:$0x1]
        %v952 = vsel %vm932, %v914, %v951
        %953 = vst [vmem:[%s422 + $0xc] sm:$0x1] %v952
        %v954 = vld [vmem:[%s422 + $0xe] sm:$0x1]
        %v955 = vsel %vm932, %v921, %v954
        %956 = vst [vmem:[%s422 + $0xe] sm:$0x1] %v955
        %v957 = vld [vmem:[%s375] sm:$0x1]
        %v958 = vld [vmem:[%s375 + $0x2] sm:$0x1]
        %v959 = vld [vmem:[%s375 + $0x4] sm:$0x1]
        %v960 = vld [vmem:[%s375 + $0x6] sm:$0x1]
        %v961 = vld [vmem:[%s375 + $0x8] sm:$0x1]
        %v962 = vld [vmem:[%s375 + $0xa] sm:$0x1]
        %v963 = vld [vmem:[%s375 + $0xc] sm:$0x1]
        %v964 = vld [vmem:[%s375 + $0xe] sm:$0x1]
        %v965 = vld [vmem:[%s382] sm:$0x1]
        %v966 = vld [vmem:[%s382 + $0x2] sm:$0x1]
        %v967 = vld [vmem:[%s382 + $0x4] sm:$0x1]
        %v968 = vld [vmem:[%s382 + $0x6] sm:$0x1]
        %v969 = vld [vmem:[%s382 + $0x8] sm:$0x1]
        %v970 = vld [vmem:[%s382 + $0xa] sm:$0x1]
        %v971 = vld [vmem:[%s382 + $0xc] sm:$0x1]
        %v972 = vld [vmem:[%s382 + $0xe] sm:$0x1]
        %v973 = vld [vmem:[%s389] sm:$0x1]
        %v974 = vld [vmem:[%s389 + $0x2] sm:$0x1]
        %v975 = vld [vmem:[%s389 + $0x4] sm:$0x1]
        %v976 = vld [vmem:[%s389 + $0x6] sm:$0x1]
        %v977 = vld [vmem:[%s389 + $0x8] sm:$0x1]
        %v978 = vld [vmem:[%s389 + $0xa] sm:$0x1]
        %v979 = vld [vmem:[%s389 + $0xc] sm:$0x1]
        %v980 = vld [vmem:[%s389 + $0xe] sm:$0x1]
        %v990 = vunpack.c.l.s4 1983009808
        %v991 = vunpack.c.0.s8 %v990
        %v992 = vlaneseq
        %v993 = vshrl.u32 %v992, 7
        %v994 = vsub.s32 %v991, %v993
        %v995 = vrot.slane %v957, %v994
        %v997 = vunpack.c.l.s4 1983009808
        %v998 = vunpack.c.0.s8 %v997
        %v999 = vlaneseq
        %v1000 = vshrl.u32 %v999, 7
        %v1001 = vsub.s32 %v998, %v1000
        %v1002 = vrot.slane %v958, %v1001
        %v1004 = vunpack.c.l.s4 1983009808
        %v1005 = vunpack.c.0.s8 %v1004
        %v1006 = vlaneseq
        %v1007 = vshrl.u32 %v1006, 7
        %v1008 = vsub.s32 %v1005, %v1007
        %v1009 = vrot.slane %v959, %v1008
        %v1011 = vunpack.c.l.s4 1983009808
        %v1012 = vunpack.c.0.s8 %v1011
        %v1013 = vlaneseq
        %v1014 = vshrl.u32 %v1013, 7
        %v1015 = vsub.s32 %v1012, %v1014
        %v1016 = vrot.slane %v960, %v1015
        %v1018 = vunpack.c.l.s4 1983009808
        %v1019 = vunpack.c.0.s8 %v1018
        %v1020 = vlaneseq
        %v1021 = vshrl.u32 %v1020, 7
        %v1022 = vsub.s32 %v1019, %v1021
        %v1023 = vrot.slane %v961, %v1022
        %v1025 = vunpack.c.l.s4 1983009808
        %v1026 = vunpack.c.0.s8 %v1025
        %v1027 = vlaneseq
        %v1028 = vshrl.u32 %v1027, 7
        %v1029 = vsub.s32 %v1026, %v1028
        %v1030 = vrot.slane %v962, %v1029
        %v1032 = vunpack.c.l.s4 1983009808
        %v1033 = vunpack.c.0.s8 %v1032
        %v1034 = vlaneseq
        %v1035 = vshrl.u32 %v1034, 7
        %v1036 = vsub.s32 %v1033, %v1035
        %v1037 = vrot.slane %v963, %v1036
        %v1039 = vunpack.c.l.s4 1983009808
        %v1040 = vunpack.c.0.s8 %v1039
        %v1041 = vlaneseq
        %v1042 = vshrl.u32 %v1041, 7
        %v1043 = vsub.s32 %v1040, %v1042
        %v1044 = vrot.slane %v964, %v1043
        %v1045 = vunpack.c.l.b16 %v995
        %v1046 = vunpack.c.l.b16 %v1002
        %v1047 = vunpack.c.l.b16 %v1009
        %v1048 = vunpack.c.l.b16 %v1016
        %v1049 = vunpack.c.l.b16 %v1023
        %v1050 = vunpack.c.l.b16 %v1030
        %v1051 = vunpack.c.l.b16 %v1037
        %v1052 = vunpack.c.l.b16 %v1044
        %v1053 = vrot.slane %v1045, 1
        %v1054 = vsel %vm521, %v1046, %v1053
        %v1055 = vrot.slane %v1047, 7
        %v1056 = vsel %vm524, %v1055, %v1054
        %v1057 = vrot.slane %v1048, 6
        %v1058 = vsel %vm527, %v1057, %v1056
        %v1059 = vrot.slane %v1049, 5
        %v1060 = vsel %vm530, %v1059, %v1058
        %v1061 = vrot.slane %v1050, 4
        %v1062 = vsel %vm533, %v1061, %v1060
        %v1063 = vrot.slane %v1051, 3
        %v1064 = vsel %vm536, %v1063, %v1062
        %v1065 = vrot.slane %v1052, 2
        %v1066 = vsel %vm539, %v1065, %v1064
        %v1067 = vpack.c.b16 %v1066, %v1066
        %v1077 = vunpack.c.l.s4 1983009808
        %v1078 = vunpack.c.0.s8 %v1077
        %v1079 = vlaneseq
        %v1080 = vshrl.u32 %v1079, 7
        %v1081 = vsub.s32 %v1078, %v1080
        %v1082 = vrot.slane %v965, %v1081
        %v1084 = vunpack.c.l.s4 1983009808
        %v1085 = vunpack.c.0.s8 %v1084
        %v1086 = vlaneseq
        %v1087 = vshrl.u32 %v1086, 7
        %v1088 = vsub.s32 %v1085, %v1087
        %v1089 = vrot.slane %v966, %v1088
        %v1091 = vunpack.c.l.s4 1983009808
        %v1092 = vunpack.c.0.s8 %v1091
        %v1093 = vlaneseq
        %v1094 = vshrl.u32 %v1093, 7
        %v1095 = vsub.s32 %v1092, %v1094
        %v1096 = vrot.slane %v967, %v1095
        %v1098 = vunpack.c.l.s4 1983009808
        %v1099 = vunpack.c.0.s8 %v1098
        %v1100 = vlaneseq
        %v1101 = vshrl.u32 %v1100, 7
        %v1102 = vsub.s32 %v1099, %v1101
        %v1103 = vrot.slane %v968, %v1102
        %v1105 = vunpack.c.l.s4 1983009808
        %v1106 = vunpack.c.0.s8 %v1105
        %v1107 = vlaneseq
        %v1108 = vshrl.u32 %v1107, 7
        %v1109 = vsub.s32 %v1106, %v1108
        %v1110 = vrot.slane %v969, %v1109
        %v1112 = vunpack.c.l.s4 1983009808
        %v1113 = vunpack.c.0.s8 %v1112
        %v1114 = vlaneseq
        %v1115 = vshrl.u32 %v1114, 7
        %v1116 = vsub.s32 %v1113, %v1115
        %v1117 = vrot.slane %v970, %v1116
        %v1119 = vunpack.c.l.s4 1983009808
        %v1120 = vunpack.c.0.s8 %v1119
        %v1121 = vlaneseq
        %v1122 = vshrl.u32 %v1121, 7
        %v1123 = vsub.s32 %v1120, %v1122
        %v1124 = vrot.slane %v971, %v1123
        %v1126 = vunpack.c.l.s4 1983009808
        %v1127 = vunpack.c.0.s8 %v1126
        %v1128 = vlaneseq
        %v1129 = vshrl.u32 %v1128, 7
        %v1130 = vsub.s32 %v1127, %v1129
        %v1131 = vrot.slane %v972, %v1130
        %v1132 = vunpack.c.l.b16 %v1082
        %v1133 = vunpack.c.l.b16 %v1089
        %v1134 = vunpack.c.l.b16 %v1096
        %v1135 = vunpack.c.l.b16 %v1103
        %v1136 = vunpack.c.l.b16 %v1110
        %v1137 = vunpack.c.l.b16 %v1117
        %v1138 = vunpack.c.l.b16 %v1124
        %v1139 = vunpack.c.l.b16 %v1131
        %v1140 = vrot.slane %v1132, 1
        %v1141 = vsel %vm521, %v1133, %v1140
        %v1142 = vrot.slane %v1134, 7
        %v1143 = vsel %vm524, %v1142, %v1141
        %v1144 = vrot.slane %v1135, 6
        %v1145 = vsel %vm527, %v1144, %v1143
        %v1146 = vrot.slane %v1136, 5
        %v1147 = vsel %vm530, %v1146, %v1145
        %v1148 = vrot.slane %v1137, 4
        %v1149 = vsel %vm533, %v1148, %v1147
        %v1150 = vrot.slane %v1138, 3
        %v1151 = vsel %vm536, %v1150, %v1149
        %v1152 = vrot.slane %v1139, 2
        %v1153 = vsel %vm539, %v1152, %v1151
        %v1154 = vpack.c.b16 %v1153, %v1153
        %v1156 = vsel %vm629, %v1067, 0
        %v1159 = vsel %vm629, %v1154, 0
        %1161 = vmatprep.subr.bf16.mxu0 0
        %1162 = vmatpush1.bf16.xpose.msra.mxu0 %v1159
        %1163 = vmatprep.subr.bf16.mxu0 0
        %1164 = vmatpush1.bf16.xpose.msra.mxu0 0
        %1165 = vmatprep.subr.bf16.mxu0 0
        %1166 = vmatpush1.bf16.xpose.msra.mxu0 0
        %1167 = vmatprep.subr.bf16.mxu0 0
        %1168 = vmatpush1.bf16.xpose.msra.mxu0 0
        %1169 = vmatprep.subr.bf16.mxu0 0
        %1170 = vmatpush1.bf16.xpose.msra.mxu0 0
        %1171 = vmatprep.subr.bf16.mxu0 0
        %1172 = vmatpush1.bf16.xpose.msra.mxu0 0
        %1173 = vmatprep.subr.bf16.mxu0 0
        %1174 = vmatpush1.bf16.xpose.msra.mxu0 0
        %1175 = vmatprep.subr.bf16.mxu0 0
        %1176 = vmatpush1.bf16.xpose.msra.mxu0 0
        %1177 = vmatprep.subr.bf16.mxu0 0
        %1178 = vmatpush1.bf16.xpose.msra.mxu0 0
        %1179 = vmatprep.subr.bf16.mxu0 0
        %1180 = vmatpush1.bf16.xpose.msra.mxu0 0
        %1181 = vmatprep.subr.bf16.mxu0 0
        %1182 = vmatpush1.bf16.xpose.msra.mxu0 0
        %1183 = vmatprep.subr.bf16.mxu0 0
        %1184 = vmatpush1.bf16.xpose.msra.mxu0 0
        %1185 = vmatprep.subr.bf16.mxu0 0
        %1186 = vmatpush1.bf16.xpose.msra.mxu0 0
        %1187 = vmatprep.subr.bf16.mxu0 0
        %1188 = vmatpush1.bf16.xpose.msra.mxu0 0
        %1189 = vmatprep.subr.bf16.mxu0 0
        %1190 = vmatpush1.bf16.xpose.msra.mxu0 0
        %1191 = vmatprep.subr.bf16.mxu0 0
        %1192 = vmatpush1.bf16.xpose.msra.mxu0 0
        %1193 = vmatprep.mubr.bf16.mxu0 0
        %1194 = vmatmul.mubr.bf16.gmra.mrb[0].mxu0 %v1156
        %v1195 = vpop.f32.mrb[0].mxu0
        %v1196 = vadd.f32 0.0, %v1195
        %v1197 = vpop.f32.mrb[0].mxu0
        %v1198 = vpop.f32.mrb[0].mxu0
        %v1199 = vpop.f32.mrb[0].mxu0
        %1200 = vdwg.mxu0
        %v1201 = vmul.f32 %v1196, 0.25
        %v1202 = vsel %vm677, %v1201, -inf
        %1203 = vmax.xlane.f32.xlu0 %v1202
        %v1204 = vpop.xlane.xlu0 %1203
        %v1205 = vsub.f32 %v1201, %v1204
        %v1206 = vmul.f32 %v1205, 1.442695
        %v1207 = vpow.pop %v1206
        %v1208 = vsel %vm677, %v1207, 0.0
        %1209 = vadd.xlane.f32.xlu0 %v1208
        %v1210 = vpop.xlane.xlu0 %1209
        %v1211 = vrcp.pop %v1210
        %v1212 = vmul.f32 %v1207, %v1211
        %v1213 = vpack.c.bf16 %v1212, %v1212
        %v1223 = vunpack.c.l.s4 1983009808
        %v1224 = vunpack.c.0.s8 %v1223
        %v1225 = vlaneseq
        %v1226 = vshrl.u32 %v1225, 7
        %v1227 = vsub.s32 %v1224, %v1226
        %v1228 = vrot.slane %v973, %v1227
        %v1230 = vunpack.c.l.s4 1983009808
        %v1231 = vunpack.c.0.s8 %v1230
        %v1232 = vlaneseq
        %v1233 = vshrl.u32 %v1232, 7
        %v1234 = vsub.s32 %v1231, %v1233
        %v1235 = vrot.slane %v974, %v1234
        %v1237 = vunpack.c.l.s4 1983009808
        %v1238 = vunpack.c.0.s8 %v1237
        %v1239 = vlaneseq
        %v1240 = vshrl.u32 %v1239, 7
        %v1241 = vsub.s32 %v1238, %v1240
        %v1242 = vrot.slane %v975, %v1241
        %v1244 = vunpack.c.l.s4 1983009808
        %v1245 = vunpack.c.0.s8 %v1244
        %v1246 = vlaneseq
        %v1247 = vshrl.u32 %v1246, 7
        %v1248 = vsub.s32 %v1245, %v1247
        %v1249 = vrot.slane %v976, %v1248
        %v1251 = vunpack.c.l.s4 1983009808
        %v1252 = vunpack.c.0.s8 %v1251
        %v1253 = vlaneseq
        %v1254 = vshrl.u32 %v1253, 7
        %v1255 = vsub.s32 %v1252, %v1254
        %v1256 = vrot.slane %v977, %v1255
        %v1258 = vunpack.c.l.s4 1983009808
        %v1259 = vunpack.c.0.s8 %v1258
        %v1260 = vlaneseq
        %v1261 = vshrl.u32 %v1260, 7
        %v1262 = vsub.s32 %v1259, %v1261
        %v1263 = vrot.slane %v978, %v1262
        %v1265 = vunpack.c.l.s4 1983009808
        %v1266 = vunpack.c.0.s8 %v1265
        %v1267 = vlaneseq
        %v1268 = vshrl.u32 %v1267, 7
        %v1269 = vsub.s32 %v1266, %v1268
        %v1270 = vrot.slane %v979, %v1269
        %v1272 = vunpack.c.l.s4 1983009808
        %v1273 = vunpack.c.0.s8 %v1272
        %v1274 = vlaneseq
        %v1275 = vshrl.u32 %v1274, 7
        %v1276 = vsub.s32 %v1273, %v1275
        %v1277 = vrot.slane %v980, %v1276
        %v1278 = vunpack.c.l.b16 %v1228
        %v1279 = vunpack.c.l.b16 %v1235
        %v1280 = vunpack.c.l.b16 %v1242
        %v1281 = vunpack.c.l.b16 %v1249
        %v1282 = vunpack.c.l.b16 %v1256
        %v1283 = vunpack.c.l.b16 %v1263
        %v1284 = vunpack.c.l.b16 %v1270
        %v1285 = vunpack.c.l.b16 %v1277
        %v1286 = vrot.slane %v1278, 1
        %v1287 = vsel %vm521, %v1279, %v1286
        %v1288 = vrot.slane %v1280, 7
        %v1289 = vsel %vm524, %v1288, %v1287
        %v1290 = vrot.slane %v1281, 6
        %v1291 = vsel %vm527, %v1290, %v1289
        %v1292 = vrot.slane %v1282, 5
        %v1293 = vsel %vm530, %v1292, %v1291
        %v1294 = vrot.slane %v1283, 4
        %v1295 = vsel %vm533, %v1294, %v1293
        %v1296 = vrot.slane %v1284, 3
        %v1297 = vsel %vm536, %v1296, %v1295
        %v1298 = vrot.slane %v1285, 2
        %v1299 = vsel %vm539, %v1298, %v1297
        %v1300 = vpack.c.b16 %v1299, %v1299
        %v1302 = vsel %vm677, %v1213, 0
        %v1305 = vsel %vm780, %v1300, 0
        %1307 = vmatprep.subr.bf16.mxu0 0
        %1308 = vmatpush1.bf16.msra.mxu0 %v1305
        %1309 = vmatprep.subr.bf16.mxu0 0
        %1310 = vmatpush1.bf16.msra.mxu0 0
        %1311 = vmatprep.subr.bf16.mxu0 0
        %1312 = vmatpush1.bf16.msra.mxu0 0
        %1313 = vmatprep.subr.bf16.mxu0 0
        %1314 = vmatpush1.bf16.msra.mxu0 0
        %1315 = vmatprep.subr.bf16.mxu0 0
        %1316 = vmatpush1.bf16.msra.mxu0 0
        %1317 = vmatprep.subr.bf16.mxu0 0
        %1318 = vmatpush1.bf16.msra.mxu0 0
        %1319 = vmatprep.subr.bf16.mxu0 0
        %1320 = vmatpush1.bf16.msra.mxu0 0
        %1321 = vmatprep.subr.bf16.mxu0 0
        %1322 = vmatpush1.bf16.msra.mxu0 0
        %1323 = vmatprep.subr.bf16.mxu0 0
        %1324 = vmatpush1.bf16.msra.mxu0 0
        %1325 = vmatprep.subr.bf16.mxu0 0
        %1326 = vmatpush1.bf16.msra.mxu0 0
        %1327 = vmatprep.subr.bf16.mxu0 0
        %1328 = vmatpush1.bf16.msra.mxu0 0
        %1329 = vmatprep.subr.bf16.mxu0 0
        %1330 = vmatpush1.bf16.msra.mxu0 0
        %1331 = vmatprep.subr.bf16.mxu0 0
        %1332 = vmatpush1.bf16.msra.mxu0 0
        %1333 = vmatprep.subr.bf16.mxu0 0
        %1334 = vmatpush1.bf16.msra.mxu0 0
        %1335 = vmatprep.subr.bf16.mxu0 0
        %1336 = vmatpush1.bf16.msra.mxu0 0
        %1337 = vmatprep.subr.bf16.mxu0 0
        %1338 = vmatpush1.bf16.msra.mxu0 0
        %1339 = vmatprep.mubr.bf16.mxu0 0
        %1340 = vmatmul.mubr.bf16.gmra.mrb[0].mxu0 %v1302
        %v1341 = vpop.f32.mrb[0].mxu0
        %v1342 = vadd.f32 0.0, %v1341
        %v1343 = vpop.f32.mrb[0].mxu0
        %v1344 = vpop.f32.mrb[0].mxu0
        %v1345 = vpop.f32.mrb[0].mxu0
        %1346 = vdwg.mxu0
        %v1347 = vpack.c.bf16 %v1342, %v1342
        %v1350 = vunpack.c.l.s4 1966171168
        %v1351 = vunpack.c.0.s8 %v1350
        %v1352 = vlaneseq
        %v1353 = vshrl.u32 %v1352, 7
        %v1354 = vsub.s32 %v1351, %v1353
        %v1355 = vrot.slane %v1347, %v1354
        %v1356 = vcombine.high %v1355, %v1355
        %v1358 = vunpack.c.l.s4 1966171168
        %v1359 = vunpack.c.0.s8 %v1358
        %v1360 = vlaneseq
        %v1361 = vshrl.u32 %v1360, 7
        %v1362 = vsub.s32 %v1359, %v1361
        %v1363 = vrot.slane %v1355, %v1362
        %v1365 = vunpack.c.l.s4 1966171168
        %v1366 = vunpack.c.0.s8 %v1365
        %v1367 = vlaneseq
        %v1368 = vshrl.u32 %v1367, 7
        %v1369 = vsub.s32 %v1366, %v1368
        %v1370 = vrot.slane %v1356, %v1369
        %v1371 = vcombine.high %v1363, %v1363
        %v1372 = vcombine.high %v1370, %v1370
        %v1373 = vunpack.i.l.s16 %v1363
        %v1374 = vunpack.i.h.s16 %v1363
        %v1375 = vunpack.i.l.s16 %v1370
        %v1376 = vunpack.i.h.s16 %v1370
        %v1377 = vunpack.i.l.s16 %v1371
        %v1378 = vunpack.i.h.s16 %v1371
        %v1379 = vunpack.i.l.s16 %v1372
        %v1380 = vunpack.i.h.s16 %v1372
        %v1381 = vpack.i.b16 %v1373, %v1373
        %v1382 = vpack.i.b16 %v1374, %v1374
        %v1383 = vpack.i.b16 %v1375, %v1375
        %v1384 = vpack.i.b16 %v1376, %v1376
        %v1385 = vpack.i.b16 %v1377, %v1377
        %v1386 = vpack.i.b16 %v1378, %v1378
        %v1387 = vpack.i.b16 %v1379, %v1379
        %v1388 = vpack.i.b16 %v1380, %v1380
        %v1390 = vunpack.c.l.s4 857870592
        %v1391 = vunpack.c.0.s8 %v1390
        %v1392 = vlaneseq
        %v1393 = vshrl.u32 %v1392, 7
        %v1394 = vsub.s32 %v1391, %v1393
        %v1395 = vrot.slane %v1381, %v1394
        %v1397 = vunpack.c.l.s4 857870592
        %v1398 = vunpack.c.0.s8 %v1397
        %v1399 = vlaneseq
        %v1400 = vshrl.u32 %v1399, 7
        %v1401 = vsub.s32 %v1398, %v1400
        %v1402 = vrot.slane %v1382, %v1401
        %v1404 = vunpack.c.l.s4 857870592
        %v1405 = vunpack.c.0.s8 %v1404
        %v1406 = vlaneseq
        %v1407 = vshrl.u32 %v1406, 7
        %v1408 = vsub.s32 %v1405, %v1407
        %v1409 = vrot.slane %v1383, %v1408
        %v1411 = vunpack.c.l.s4 857870592
        %v1412 = vunpack.c.0.s8 %v1411
        %v1413 = vlaneseq
        %v1414 = vshrl.u32 %v1413, 7
        %v1415 = vsub.s32 %v1412, %v1414
        %v1416 = vrot.slane %v1384, %v1415
        %v1418 = vunpack.c.l.s4 857870592
        %v1419 = vunpack.c.0.s8 %v1418
        %v1420 = vlaneseq
        %v1421 = vshrl.u32 %v1420, 7
        %v1422 = vsub.s32 %v1419, %v1421
        %v1423 = vrot.slane %v1385, %v1422
        %v1425 = vunpack.c.l.s4 857870592
        %v1426 = vunpack.c.0.s8 %v1425
        %v1427 = vlaneseq
        %v1428 = vshrl.u32 %v1427, 7
        %v1429 = vsub.s32 %v1426, %v1428
        %v1430 = vrot.slane %v1386, %v1429
        %v1432 = vunpack.c.l.s4 857870592
        %v1433 = vunpack.c.0.s8 %v1432
        %v1434 = vlaneseq
        %v1435 = vshrl.u32 %v1434, 7
        %v1436 = vsub.s32 %v1433, %v1435
        %v1437 = vrot.slane %v1387, %v1436
        %v1439 = vunpack.c.l.s4 857870592
        %v1440 = vunpack.c.0.s8 %v1439
        %v1441 = vlaneseq
        %v1442 = vshrl.u32 %v1441, 7
        %v1443 = vsub.s32 %v1440, %v1442
        %v1444 = vrot.slane %v1388, %v1443
        %vm1453 = vsmask.f32 7938
        %vm1454 = vmand %vm930, %vm1453
        %v1455 = vld [vmem:[%s422] sm:$0x1]
        %v1456 = vsel %vm1454, %v1395, %v1455
        %1457 = vst [vmem:[%s422] sm:$0x1] %v1456
        %v1458 = vld [vmem:[%s422 + $0x2] sm:$0x1]
        %v1459 = vsel %vm1454, %v1402, %v1458
        %1460 = vst [vmem:[%s422 + $0x2] sm:$0x1] %v1459
        %v1461 = vld [vmem:[%s422 + $0x4] sm:$0x1]
        %v1462 = vsel %vm1454, %v1409, %v1461
        %1463 = vst [vmem:[%s422 + $0x4] sm:$0x1] %v1462
        %v1464 = vld [vmem:[%s422 + $0x6] sm:$0x1]
        %v1465 = vsel %vm1454, %v1416, %v1464
        %1466 = vst [vmem:[%s422 + $0x6] sm:$0x1] %v1465
        %v1467 = vld [vmem:[%s422 + $0x8] sm:$0x1]
        %v1468 = vsel %vm1454, %v1423, %v1467
        %1469 = vst [vmem:[%s422 + $0x8] sm:$0x1] %v1468
        %v1470 = vld [vmem:[%s422 + $0xa] sm:$0x1]
        %v1471 = vsel %vm1454, %v1430, %v1470
        %1472 = vst [vmem:[%s422 + $0xa] sm:$0x1] %v1471
        %v1473 = vld [vmem:[%s422 + $0xc] sm:$0x1]
        %v1474 = vsel %vm1454, %v1437, %v1473
        %1475 = vst [vmem:[%s422 + $0xc] sm:$0x1] %v1474
        %v1476 = vld [vmem:[%s422 + $0xe] sm:$0x1]
        %v1477 = vsel %vm1454, %v1444, %v1476
        %1478 = vst [vmem:[%s422 + $0xe] sm:$0x1] %v1477
        %v1479 = vld [vmem:[%s375] sm:$0x2]
        %v1480 = vld [vmem:[%s375 + $0x2] sm:$0x2]
        %v1481 = vld [vmem:[%s375 + $0x4] sm:$0x2]
        %v1482 = vld [vmem:[%s375 + $0x6] sm:$0x2]
        %v1483 = vld [vmem:[%s375 + $0x8] sm:$0x2]
        %v1484 = vld [vmem:[%s375 + $0xa] sm:$0x2]
        %v1485 = vld [vmem:[%s375 + $0xc] sm:$0x2]
        %v1486 = vld [vmem:[%s375 + $0xe] sm:$0x2]
        %v1487 = vld [vmem:[%s382] sm:$0x2]
        %v1488 = vld [vmem:[%s382 + $0x2] sm:$0x2]
        %v1489 = vld [vmem:[%s382 + $0x4] sm:$0x2]
        %v1490 = vld [vmem:[%s382 + $0x6] sm:$0x2]
        %v1491 = vld [vmem:[%s382 + $0x8] sm:$0x2]
        %v1492 = vld [vmem:[%s382 + $0xa] sm:$0x2]
        %v1493 = vld [vmem:[%s382 + $0xc] sm:$0x2]
        %v1494 = vld [vmem:[%s382 + $0xe] sm:$0x2]
        %v1495 = vld [vmem:[%s389] sm:$0x2]
        %v1496 = vld [vmem:[%s389 + $0x2] sm:$0x2]
        %v1497 = vld [vmem:[%s389 + $0x4] sm:$0x2]
        %v1498 = vld [vmem:[%s389 + $0x6] sm:$0x2]
        %v1499 = vld [vmem:[%s389 + $0x8] sm:$0x2]
        %v1500 = vld [vmem:[%s389 + $0xa] sm:$0x2]
        %v1501 = vld [vmem:[%s389 + $0xc] sm:$0x2]
        %v1502 = vld [vmem:[%s389 + $0xe] sm:$0x2]
        %v1512 = vunpack.c.l.s4 1983009808
        %v1513 = vunpack.c.0.s8 %v1512
        %v1514 = vlaneseq
        %v1515 = vshrl.u32 %v1514, 7
        %v1516 = vsub.s32 %v1513, %v1515
        %v1517 = vrot.slane %v1479, %v1516
        %v1519 = vunpack.c.l.s4 1983009808
        %v1520 = vunpack.c.0.s8 %v1519
        %v1521 = vlaneseq
        %v1522 = vshrl.u32 %v1521, 7
        %v1523 = vsub.s32 %v1520, %v1522
        %v1524 = vrot.slane %v1480, %v1523
        %v1526 = vunpack.c.l.s4 1983009808
        %v1527 = vunpack.c.0.s8 %v1526
        %v1528 = vlaneseq
        %v1529 = vshrl.u32 %v1528, 7
        %v1530 = vsub.s32 %v1527, %v1529
        %v1531 = vrot.slane %v1481, %v1530
        %v1533 = vunpack.c.l.s4 1983009808
        %v1534 = vunpack.c.0.s8 %v1533
        %v1535 = vlaneseq
        %v1536 = vshrl.u32 %v1535, 7
        %v1537 = vsub.s32 %v1534, %v1536
        %v1538 = vrot.slane %v1482, %v1537
        %v1540 = vunpack.c.l.s4 1983009808
        %v1541 = vunpack.c.0.s8 %v1540
        %v1542 = vlaneseq
        %v1543 = vshrl.u32 %v1542, 7
        %v1544 = vsub.s32 %v1541, %v1543
        %v1545 = vrot.slane %v1483, %v1544
        %v1547 = vunpack.c.l.s4 1983009808
        %v1548 = vunpack.c.0.s8 %v1547
        %v1549 = vlaneseq
        %v1550 = vshrl.u32 %v1549, 7
        %v1551 = vsub.s32 %v1548, %v1550
        %v1552 = vrot.slane %v1484, %v1551
        %v1554 = vunpack.c.l.s4 1983009808
        %v1555 = vunpack.c.0.s8 %v1554
        %v1556 = vlaneseq
        %v1557 = vshrl.u32 %v1556, 7
        %v1558 = vsub.s32 %v1555, %v1557
        %v1559 = vrot.slane %v1485, %v1558
        %v1561 = vunpack.c.l.s4 1983009808
        %v1562 = vunpack.c.0.s8 %v1561
        %v1563 = vlaneseq
        %v1564 = vshrl.u32 %v1563, 7
        %v1565 = vsub.s32 %v1562, %v1564
        %v1566 = vrot.slane %v1486, %v1565
        %v1567 = vunpack.c.l.b16 %v1517
        %v1568 = vunpack.c.l.b16 %v1524
        %v1569 = vunpack.c.l.b16 %v1531
        %v1570 = vunpack.c.l.b16 %v1538
        %v1571 = vunpack.c.l.b16 %v1545
        %v1572 = vunpack.c.l.b16 %v1552
        %v1573 = vunpack.c.l.b16 %v1559
        %v1574 = vunpack.c.l.b16 %v1566
        %v1575 = vrot.slane %v1567, 2
        %v1576 = vrot.slane %v1568, 1
        %v1577 = vsel %vm521, %v1576, %v1575
        %v1578 = vsel %vm524, %v1569, %v1577
        %v1579 = vrot.slane %v1570, 7
        %v1580 = vsel %vm527, %v1579, %v1578
        %v1581 = vrot.slane %v1571, 6
        %v1582 = vsel %vm530, %v1581, %v1580
        %v1583 = vrot.slane %v1572, 5
        %v1584 = vsel %vm533, %v1583, %v1582
        %v1585 = vrot.slane %v1573, 4
        %v1586 = vsel %vm536, %v1585, %v1584
        %v1587 = vrot.slane %v1574, 3
        %v1588 = vsel %vm539, %v1587, %v1586
        %v1589 = vpack.c.b16 %v1588, %v1588
        %v1599 = vunpack.c.l.s4 1983009808
        %v1600 = vunpack.c.0.s8 %v1599
        %v1601 = vlaneseq
        %v1602 = vshrl.u32 %v1601, 7
        %v1603 = vsub.s32 %v1600, %v1602
        %v1604 = vrot.slane %v1487, %v1603
        %v1606 = vunpack.c.l.s4 1983009808
        %v1607 = vunpack.c.0.s8 %v1606
        %v1608 = vlaneseq
        %v1609 = vshrl.u32 %v1608, 7
        %v1610 = vsub.s32 %v1607, %v1609
        %v1611 = vrot.slane %v1488, %v1610
        %v1613 = vunpack.c.l.s4 1983009808
        %v1614 = vunpack.c.0.s8 %v1613
        %v1615 = vlaneseq
        %v1616 = vshrl.u32 %v1615, 7
        %v1617 = vsub.s32 %v1614, %v1616
        %v1618 = vrot.slane %v1489, %v1617
        %v1620 = vunpack.c.l.s4 1983009808
        %v1621 = vunpack.c.0.s8 %v1620
        %v1622 = vlaneseq
        %v1623 = vshrl.u32 %v1622, 7
        %v1624 = vsub.s32 %v1621, %v1623
        %v1625 = vrot.slane %v1490, %v1624
        %v1627 = vunpack.c.l.s4 1983009808
        %v1628 = vunpack.c.0.s8 %v1627
        %v1629 = vlaneseq
        %v1630 = vshrl.u32 %v1629, 7
        %v1631 = vsub.s32 %v1628, %v1630
        %v1632 = vrot.slane %v1491, %v1631
        %v1634 = vunpack.c.l.s4 1983009808
        %v1635 = vunpack.c.0.s8 %v1634
        %v1636 = vlaneseq
        %v1637 = vshrl.u32 %v1636, 7
        %v1638 = vsub.s32 %v1635, %v1637
        %v1639 = vrot.slane %v1492, %v1638
        %v1641 = vunpack.c.l.s4 1983009808
        %v1642 = vunpack.c.0.s8 %v1641
        %v1643 = vlaneseq
        %v1644 = vshrl.u32 %v1643, 7
        %v1645 = vsub.s32 %v1642, %v1644
        %v1646 = vrot.slane %v1493, %v1645
        %v1648 = vunpack.c.l.s4 1983009808
        %v1649 = vunpack.c.0.s8 %v1648
        %v1650 = vlaneseq
        %v1651 = vshrl.u32 %v1650, 7
        %v1652 = vsub.s32 %v1649, %v1651
        %v1653 = vrot.slane %v1494, %v1652
        %v1654 = vunpack.c.l.b16 %v1604
        %v1655 = vunpack.c.l.b16 %v1611
        %v1656 = vunpack.c.l.b16 %v1618
        %v1657 = vunpack.c.l.b16 %v1625
        %v1658 = vunpack.c.l.b16 %v1632
        %v1659 = vunpack.c.l.b16 %v1639
        %v1660 = vunpack.c.l.b16 %v1646
        %v1661 = vunpack.c.l.b16 %v1653
        %v1662 = vrot.slane %v1654, 2
        %v1663 = vrot.slane %v1655, 1
        %v1664 = vsel %vm521, %v1663, %v1662
        %v1665 = vsel %vm524, %v1656, %v1664
        %v1666 = vrot.slane %v1657, 7
        %v1667 = vsel %vm527, %v1666, %v1665
        %v1668 = vrot.slane %v1658, 6
        %v1669 = vsel %vm530, %v1668, %v1667
        %v1670 = vrot.slane %v1659, 5
        %v1671 = vsel %vm533, %v1670, %v1669
        %v1672 = vrot.slane %v1660, 4
        %v1673 = vsel %vm536, %v1672, %v1671
        %v1674 = vrot.slane %v1661, 3
        %v1675 = vsel %vm539, %v1674, %v1673
        %v1676 = vpack.c.b16 %v1675, %v1675
        %v1678 = vsel %vm629, %v1589, 0
        %v1681 = vsel %vm629, %v1676, 0
        %1683 = vmatprep.subr.bf16.mxu0 0
        %1684 = vmatpush1.bf16.xpose.msra.mxu0 %v1681
        %1685 = vmatprep.subr.bf16.mxu0 0
        %1686 = vmatpush1.bf16.xpose.msra.mxu0 0
        %1687 = vmatprep.subr.bf16.mxu0 0
        %1688 = vmatpush1.bf16.xpose.msra.mxu0 0
        %1689 = vmatprep.subr.bf16.mxu0 0
        %1690 = vmatpush1.bf16.xpose.msra.mxu0 0
        %1691 = vmatprep.subr.bf16.mxu0 0
        %1692 = vmatpush1.bf16.xpose.msra.mxu0 0
        %1693 = vmatprep.subr.bf16.mxu0 0
        %1694 = vmatpush1.bf16.xpose.msra.mxu0 0
        %1695 = vmatprep.subr.bf16.mxu0 0
        %1696 = vmatpush1.bf16.xpose.msra.mxu0 0
        %1697 = vmatprep.subr.bf16.mxu0 0
        %1698 = vmatpush1.bf16.xpose.msra.mxu0 0
        %1699 = vmatprep.subr.bf16.mxu0 0
        %1700 = vmatpush1.bf16.xpose.msra.mxu0 0
        %1701 = vmatprep.subr.bf16.mxu0 0
        %1702 = vmatpush1.bf16.xpose.msra.mxu0 0
        %1703 = vmatprep.subr.bf16.mxu0 0
        %1704 = vmatpush1.bf16.xpose.msra.mxu0 0
        %1705 = vmatprep.subr.bf16.mxu0 0
        %1706 = vmatpush1.bf16.xpose.msra.mxu0 0
        %1707 = vmatprep.subr.bf16.mxu0 0
        %1708 = vmatpush1.bf16.xpose.msra.mxu0 0
        %1709 = vmatprep.subr.bf16.mxu0 0
        %1710 = vmatpush1.bf16.xpose.msra.mxu0 0
        %1711 = vmatprep.subr.bf16.mxu0 0
        %1712 = vmatpush1.bf16.xpose.msra.mxu0 0
        %1713 = vmatprep.subr.bf16.mxu0 0
        %1714 = vmatpush1.bf16.xpose.msra.mxu0 0
        %1715 = vmatprep.mubr.bf16.mxu0 0
        %1716 = vmatmul.mubr.bf16.gmra.mrb[0].mxu0 %v1678
        %v1717 = vpop.f32.mrb[0].mxu0
        %v1718 = vadd.f32 0.0, %v1717
        %v1719 = vpop.f32.mrb[0].mxu0
        %v1720 = vpop.f32.mrb[0].mxu0
        %v1721 = vpop.f32.mrb[0].mxu0
        %1722 = vdwg.mxu0
        %v1723 = vmul.f32 %v1718, 0.25
        %v1724 = vsel %vm677, %v1723, -inf
        %1725 = vmax.xlane.f32.xlu0 %v1724
        %v1726 = vpop.xlane.xlu0 %1725
        %v1727 = vsub.f32 %v1723, %v1726
        %v1728 = vmul.f32 %v1727, 1.442695
        %v1729 = vpow.pop %v1728
        %v1730 = vsel %vm677, %v1729, 0.0
        %1731 = vadd.xlane.f32.xlu0 %v1730
        %v1732 = vpop.xlane.xlu0 %1731
        %v1733 = vrcp.pop %v1732
        %v1734 = vmul.f32 %v1729, %v1733
        %v1735 = vpack.c.bf16 %v1734, %v1734
        %v1745 = vunpack.c.l.s4 1983009808
        %v1746 = vunpack.c.0.s8 %v1745
        %v1747 = vlaneseq
        %v1748 = vshrl.u32 %v1747, 7
        %v1749 = vsub.s32 %v1746, %v1748
        %v1750 = vrot.slane %v1495, %v1749
        %v1752 = vunpack.c.l.s4 1983009808
        %v1753 = vunpack.c.0.s8 %v1752
        %v1754 = vlaneseq
        %v1755 = vshrl.u32 %v1754, 7
        %v1756 = vsub.s32 %v1753, %v1755
        %v1757 = vrot.slane %v1496, %v1756
        %v1759 = vunpack.c.l.s4 1983009808
        %v1760 = vunpack.c.0.s8 %v1759
        %v1761 = vlaneseq
        %v1762 = vshrl.u32 %v1761, 7
        %v1763 = vsub.s32 %v1760, %v1762
        %v1764 = vrot.slane %v1497, %v1763
        %v1766 = vunpack.c.l.s4 1983009808
        %v1767 = vunpack.c.0.s8 %v1766
        %v1768 = vlaneseq
        %v1769 = vshrl.u32 %v1768, 7
        %v1770 = vsub.s32 %v1767, %v1769
        %v1771 = vrot.slane %v1498, %v1770
        %v1773 = vunpack.c.l.s4 1983009808
        %v1774 = vunpack.c.0.s8 %v1773
        %v1775 = vlaneseq
        %v1776 = vshrl.u32 %v1775, 7
        %v1777 = vsub.s32 %v1774, %v1776
        %v1778 = vrot.slane %v1499, %v1777
        %v1780 = vunpack.c.l.s4 1983009808
        %v1781 = vunpack.c.0.s8 %v1780
        %v1782 = vlaneseq
        %v1783 = vshrl.u32 %v1782, 7
        %v1784 = vsub.s32 %v1781, %v1783
        %v1785 = vrot.slane %v1500, %v1784
        %v1787 = vunpack.c.l.s4 1983009808
        %v1788 = vunpack.c.0.s8 %v1787
        %v1789 = vlaneseq
        %v1790 = vshrl.u32 %v1789, 7
        %v1791 = vsub.s32 %v1788, %v1790
        %v1792 = vrot.slane %v1501, %v1791
        %v1794 = vunpack.c.l.s4 1983009808
        %v1795 = vunpack.c.0.s8 %v1794
        %v1796 = vlaneseq
        %v1797 = vshrl.u32 %v1796, 7
        %v1798 = vsub.s32 %v1795, %v1797
        %v1799 = vrot.slane %v1502, %v1798
        %v1800 = vunpack.c.l.b16 %v1750
        %v1801 = vunpack.c.l.b16 %v1757
        %v1802 = vunpack.c.l.b16 %v1764
        %v1803 = vunpack.c.l.b16 %v1771
        %v1804 = vunpack.c.l.b16 %v1778
        %v1805 = vunpack.c.l.b16 %v1785
        %v1806 = vunpack.c.l.b16 %v1792
        %v1807 = vunpack.c.l.b16 %v1799
        %v1808 = vrot.slane %v1800, 2
        %v1809 = vrot.slane %v1801, 1
        %v1810 = vsel %vm521, %v1809, %v1808
        %v1811 = vsel %vm524, %v1802, %v1810
        %v1812 = vrot.slane %v1803, 7
        %v1813 = vsel %vm527, %v1812, %v1811
        %v1814 = vrot.slane %v1804, 6
        %v1815 = vsel %vm530, %v1814, %v1813
        %v1816 = vrot.slane %v1805, 5
        %v1817 = vsel %vm533, %v1816, %v1815
        %v1818 = vrot.slane %v1806, 4
        %v1819 = vsel %vm536, %v1818, %v1817
        %v1820 = vrot.slane %v1807, 3
        %v1821 = vsel %vm539, %v1820, %v1819
        %v1822 = vpack.c.b16 %v1821, %v1821
        %v1824 = vsel %vm677, %v1735, 0
        %v1827 = vsel %vm780, %v1822, 0
        %1829 = vmatprep.subr.bf16.mxu0 0
        %1830 = vmatpush1.bf16.msra.mxu0 %v1827
        %1831 = vmatprep.subr.bf16.mxu0 0
        %1832 = vmatpush1.bf16.msra.mxu0 0
        %1833 = vmatprep.subr.bf16.mxu0 0
        %1834 = vmatpush1.bf16.msra.mxu0 0
        %1835 = vmatprep.subr.bf16.mxu0 0
        %1836 = vmatpush1.bf16.msra.mxu0 0
        %1837 = vmatprep.subr.bf16.mxu0 0
        %1838 = vmatpush1.bf16.msra.mxu0 0
        %1839 = vmatprep.subr.bf16.mxu0 0
        %1840 = vmatpush1.bf16.msra.mxu0 0
        %1841 = vmatprep.subr.bf16.mxu0 0
        %1842 = vmatpush1.bf16.msra.mxu0 0
        %1843 = vmatprep.subr.bf16.mxu0 0
        %1844 = vmatpush1.bf16.msra.mxu0 0
        %1845 = vmatprep.subr.bf16.mxu0 0
        %1846 = vmatpush1.bf16.msra.mxu0 0
        %1847 = vmatprep.subr.bf16.mxu0 0
        %1848 = vmatpush1.bf16.msra.mxu0 0
        %1849 = vmatprep.subr.bf16.mxu0 0
        %1850 = vmatpush1.bf16.msra.mxu0 0
        %1851 = vmatprep.subr.bf16.mxu0 0
        %1852 = vmatpush1.bf16.msra.mxu0 0
        %1853 = vmatprep.subr.bf16.mxu0 0
        %1854 = vmatpush1.bf16.msra.mxu0 0
        %1855 = vmatprep.subr.bf16.mxu0 0
        %1856 = vmatpush1.bf16.msra.mxu0 0
        %1857 = vmatprep.subr.bf16.mxu0 0
        %1858 = vmatpush1.bf16.msra.mxu0 0
        %1859 = vmatprep.subr.bf16.mxu0 0
        %1860 = vmatpush1.bf16.msra.mxu0 0
        %1861 = vmatprep.mubr.bf16.mxu0 0
        %1862 = vmatmul.mubr.bf16.gmra.mrb[0].mxu0 %v1824
        %v1863 = vpop.f32.mrb[0].mxu0
        %v1864 = vadd.f32 0.0, %v1863
        %v1865 = vpop.f32.mrb[0].mxu0
        %v1866 = vpop.f32.mrb[0].mxu0
        %v1867 = vpop.f32.mrb[0].mxu0
        %1868 = vdwg.mxu0
        %v1869 = vpack.c.bf16 %v1864, %v1864
        %v1872 = vunpack.c.l.s4 1966171168
        %v1873 = vunpack.c.0.s8 %v1872
        %v1874 = vlaneseq
        %v1875 = vshrl.u32 %v1874, 7
        %v1876 = vsub.s32 %v1873, %v1875
        %v1877 = vrot.slane %v1869, %v1876
        %v1878 = vcombine.high %v1877, %v1877
        %v1880 = vunpack.c.l.s4 1966171168
        %v1881 = vunpack.c.0.s8 %v1880
        %v1882 = vlaneseq
        %v1883 = vshrl.u32 %v1882, 7
        %v1884 = vsub.s32 %v1881, %v1883
        %v1885 = vrot.slane %v1877, %v1884
        %v1887 = vunpack.c.l.s4 1966171168
        %v1888 = vunpack.c.0.s8 %v1887
        %v1889 = vlaneseq
        %v1890 = vshrl.u32 %v1889, 7
        %v1891 = vsub.s32 %v1888, %v1890
        %v1892 = vrot.slane %v1878, %v1891
        %v1893 = vcombine.high %v1885, %v1885
        %v1894 = vcombine.high %v1892, %v1892
        %v1895 = vunpack.i.l.s16 %v1885
        %v1896 = vunpack.i.h.s16 %v1885
        %v1897 = vunpack.i.l.s16 %v1892
        %v1898 = vunpack.i.h.s16 %v1892
        %v1899 = vunpack.i.l.s16 %v1893
        %v1900 = vunpack.i.h.s16 %v1893
        %v1901 = vunpack.i.l.s16 %v1894
        %v1902 = vunpack.i.h.s16 %v1894
        %v1903 = vpack.i.b16 %v1895, %v1895
        %v1904 = vpack.i.b16 %v1896, %v1896
        %v1905 = vpack.i.b16 %v1897, %v1897
        %v1906 = vpack.i.b16 %v1898, %v1898
        %v1907 = vpack.i.b16 %v1899, %v1899
        %v1908 = vpack.i.b16 %v1900, %v1900
        %v1909 = vpack.i.b16 %v1901, %v1901
        %v1910 = vpack.i.b16 %v1902, %v1902
        %v1912 = vunpack.c.l.s4 857870592
        %v1913 = vunpack.c.0.s8 %v1912
        %v1914 = vlaneseq
        %v1915 = vshrl.u32 %v1914, 7
        %v1916 = vsub.s32 %v1913, %v1915
        %v1917 = vrot.slane %v1903, %v1916
        %v1919 = vunpack.c.l.s4 857870592
        %v1920 = vunpack.c.0.s8 %v1919
        %v1921 = vlaneseq
        %v1922 = vshrl.u32 %v1921, 7
        %v1923 = vsub.s32 %v1920, %v1922
        %v1924 = vrot.slane %v1904, %v1923
        %v1926 = vunpack.c.l.s4 857870592
        %v1927 = vunpack.c.0.s8 %v1926
        %v1928 = vlaneseq
        %v1929 = vshrl.u32 %v1928, 7
        %v1930 = vsub.s32 %v1927, %v1929
        %v1931 = vrot.slane %v1905, %v1930
        %v1933 = vunpack.c.l.s4 857870592
        %v1934 = vunpack.c.0.s8 %v1933
        %v1935 = vlaneseq
        %v1936 = vshrl.u32 %v1935, 7
        %v1937 = vsub.s32 %v1934, %v1936
        %v1938 = vrot.slane %v1906, %v1937
        %v1940 = vunpack.c.l.s4 857870592
        %v1941 = vunpack.c.0.s8 %v1940
        %v1942 = vlaneseq
        %v1943 = vshrl.u32 %v1942, 7
        %v1944 = vsub.s32 %v1941, %v1943
        %v1945 = vrot.slane %v1907, %v1944
        %v1947 = vunpack.c.l.s4 857870592
        %v1948 = vunpack.c.0.s8 %v1947
        %v1949 = vlaneseq
        %v1950 = vshrl.u32 %v1949, 7
        %v1951 = vsub.s32 %v1948, %v1950
        %v1952 = vrot.slane %v1908, %v1951
        %v1954 = vunpack.c.l.s4 857870592
        %v1955 = vunpack.c.0.s8 %v1954
        %v1956 = vlaneseq
        %v1957 = vshrl.u32 %v1956, 7
        %v1958 = vsub.s32 %v1955, %v1957
        %v1959 = vrot.slane %v1909, %v1958
        %v1961 = vunpack.c.l.s4 857870592
        %v1962 = vunpack.c.0.s8 %v1961
        %v1963 = vlaneseq
        %v1964 = vshrl.u32 %v1963, 7
        %v1965 = vsub.s32 %v1962, %v1964
        %v1966 = vrot.slane %v1910, %v1965
        %vm1975 = vcmask 123905
        %vm1976 = vsmask.f32 1280
        %vm1977 = vmand %vm1975, %vm1976
        %v1978 = vld [vmem:[%s422] sm:$0x2]
        %v1979 = vsel %vm1977, %v1917, %v1978
        %1980 = vst [vmem:[%s422] sm:$0x2] %v1979
        %v1981 = vld [vmem:[%s422 + $0x2] sm:$0x2]
        %v1982 = vsel %vm1977, %v1924, %v1981
        %1983 = vst [vmem:[%s422 + $0x2] sm:$0x2] %v1982
        %v1984 = vld [vmem:[%s422 + $0x4] sm:$0x2]
        %v1985 = vsel %vm1977, %v1931, %v1984
        %1986 = vst [vmem:[%s422 + $0x4] sm:$0x2] %v1985
        %v1987 = vld [vmem:[%s422 + $0x6] sm:$0x2]
        %v1988 = vsel %vm1977, %v1938, %v1987
        %1989 = vst [vmem:[%s422 + $0x6] sm:$0x2] %v1988
        %v1990 = vld [vmem:[%s422 + $0x8] sm:$0x2]
        %v1991 = vsel %vm1977, %v1945, %v1990
        %1992 = vst [vmem:[%s422 + $0x8] sm:$0x2] %v1991
        %v1993 = vld [vmem:[%s422 + $0xa] sm:$0x2]
        %v1994 = vsel %vm1977, %v1952, %v1993
        %1995 = vst [vmem:[%s422 + $0xa] sm:$0x2] %v1994
        %v1996 = vld [vmem:[%s422 + $0xc] sm:$0x2]
        %v1997 = vsel %vm1977, %v1959, %v1996
        %1998 = vst [vmem:[%s422 + $0xc] sm:$0x2] %v1997
        %v1999 = vld [vmem:[%s422 + $0xe] sm:$0x2]
        %v2000 = vsel %vm1977, %v1966, %v1999
        %2001 = vst [vmem:[%s422 + $0xe] sm:$0x2] %v2000
        %v2002 = vld [vmem:[%s375] sm:$0x2]
        %v2003 = vld [vmem:[%s375 + $0x2] sm:$0x2]
        %v2004 = vld [vmem:[%s375 + $0x4] sm:$0x2]
        %v2005 = vld [vmem:[%s375 + $0x6] sm:$0x2]
        %v2006 = vld [vmem:[%s375 + $0x8] sm:$0x2]
        %v2007 = vld [vmem:[%s375 + $0xa] sm:$0x2]
        %v2008 = vld [vmem:[%s375 + $0xc] sm:$0x2]
        %v2009 = vld [vmem:[%s375 + $0xe] sm:$0x2]
        %v2010 = vld [vmem:[%s382] sm:$0x2]
        %v2011 = vld [vmem:[%s382 + $0x2] sm:$0x2]
        %v2012 = vld [vmem:[%s382 + $0x4] sm:$0x2]
        %v2013 = vld [vmem:[%s382 + $0x6] sm:$0x2]
        %v2014 = vld [vmem:[%s382 + $0x8] sm:$0x2]
        %v2015 = vld [vmem:[%s382 + $0xa] sm:$0x2]
        %v2016 = vld [vmem:[%s382 + $0xc] sm:$0x2]
        %v2017 = vld [vmem:[%s382 + $0xe] sm:$0x2]
        %v2018 = vld [vmem:[%s389] sm:$0x2]
        %v2019 = vld [vmem:[%s389 + $0x2] sm:$0x2]
        %v2020 = vld [vmem:[%s389 + $0x4] sm:$0x2]
        %v2021 = vld [vmem:[%s389 + $0x6] sm:$0x2]
        %v2022 = vld [vmem:[%s389 + $0x8] sm:$0x2]
        %v2023 = vld [vmem:[%s389 + $0xa] sm:$0x2]
        %v2024 = vld [vmem:[%s389 + $0xc] sm:$0x2]
        %v2025 = vld [vmem:[%s389 + $0xe] sm:$0x2]
        %v2035 = vunpack.c.l.s4 1983009808
        %v2036 = vunpack.c.0.s8 %v2035
        %v2037 = vlaneseq
        %v2038 = vshrl.u32 %v2037, 7
        %v2039 = vsub.s32 %v2036, %v2038
        %v2040 = vrot.slane %v2002, %v2039
        %v2042 = vunpack.c.l.s4 1983009808
        %v2043 = vunpack.c.0.s8 %v2042
        %v2044 = vlaneseq
        %v2045 = vshrl.u32 %v2044, 7
        %v2046 = vsub.s32 %v2043, %v2045
        %v2047 = vrot.slane %v2003, %v2046
        %v2049 = vunpack.c.l.s4 1983009808
        %v2050 = vunpack.c.0.s8 %v2049
        %v2051 = vlaneseq
        %v2052 = vshrl.u32 %v2051, 7
        %v2053 = vsub.s32 %v2050, %v2052
        %v2054 = vrot.slane %v2004, %v2053
        %v2056 = vunpack.c.l.s4 1983009808
        %v2057 = vunpack.c.0.s8 %v2056
        %v2058 = vlaneseq
        %v2059 = vshrl.u32 %v2058, 7
        %v2060 = vsub.s32 %v2057, %v2059
        %v2061 = vrot.slane %v2005, %v2060
        %v2063 = vunpack.c.l.s4 1983009808
        %v2064 = vunpack.c.0.s8 %v2063
        %v2065 = vlaneseq
        %v2066 = vshrl.u32 %v2065, 7
        %v2067 = vsub.s32 %v2064, %v2066
        %v2068 = vrot.slane %v2006, %v2067
        %v2070 = vunpack.c.l.s4 1983009808
        %v2071 = vunpack.c.0.s8 %v2070
        %v2072 = vlaneseq
        %v2073 = vshrl.u32 %v2072, 7
        %v2074 = vsub.s32 %v2071, %v2073
        %v2075 = vrot.slane %v2007, %v2074
        %v2077 = vunpack.c.l.s4 1983009808
        %v2078 = vunpack.c.0.s8 %v2077
        %v2079 = vlaneseq
        %v2080 = vshrl.u32 %v2079, 7
        %v2081 = vsub.s32 %v2078, %v2080
        %v2082 = vrot.slane %v2008, %v2081
        %v2084 = vunpack.c.l.s4 1983009808
        %v2085 = vunpack.c.0.s8 %v2084
        %v2086 = vlaneseq
        %v2087 = vshrl.u32 %v2086, 7
        %v2088 = vsub.s32 %v2085, %v2087
        %v2089 = vrot.slane %v2009, %v2088
        %v2090 = vunpack.c.l.b16 %v2040
        %v2091 = vunpack.c.l.b16 %v2047
        %v2092 = vunpack.c.l.b16 %v2054
        %v2093 = vunpack.c.l.b16 %v2061
        %v2094 = vunpack.c.l.b16 %v2068
        %v2095 = vunpack.c.l.b16 %v2075
        %v2096 = vunpack.c.l.b16 %v2082
        %v2097 = vunpack.c.l.b16 %v2089
        %v2098 = vrot.slane %v2090, 3
        %v2099 = vrot.slane %v2091, 2
        %v2100 = vsel %vm521, %v2099, %v2098
        %v2101 = vrot.slane %v2092, 1
        %v2102 = vsel %vm524, %v2101, %v2100
        %v2103 = vsel %vm527, %v2093, %v2102
        %v2104 = vrot.slane %v2094, 7
        %v2105 = vsel %vm530, %v2104, %v2103
        %v2106 = vrot.slane %v2095, 6
        %v2107 = vsel %vm533, %v2106, %v2105
        %v2108 = vrot.slane %v2096, 5
        %v2109 = vsel %vm536, %v2108, %v2107
        %v2110 = vrot.slane %v2097, 4
        %v2111 = vsel %vm539, %v2110, %v2109
        %v2112 = vpack.c.b16 %v2111, %v2111
        %v2122 = vunpack.c.l.s4 1983009808
        %v2123 = vunpack.c.0.s8 %v2122
        %v2124 = vlaneseq
        %v2125 = vshrl.u32 %v2124, 7
        %v2126 = vsub.s32 %v2123, %v2125
        %v2127 = vrot.slane %v2010, %v2126
        %v2129 = vunpack.c.l.s4 1983009808
        %v2130 = vunpack.c.0.s8 %v2129
        %v2131 = vlaneseq
        %v2132 = vshrl.u32 %v2131, 7
        %v2133 = vsub.s32 %v2130, %v2132
        %v2134 = vrot.slane %v2011, %v2133
        %v2136 = vunpack.c.l.s4 1983009808
        %v2137 = vunpack.c.0.s8 %v2136
        %v2138 = vlaneseq
        %v2139 = vshrl.u32 %v2138, 7
        %v2140 = vsub.s32 %v2137, %v2139
        %v2141 = vrot.slane %v2012, %v2140
        %v2143 = vunpack.c.l.s4 1983009808
        %v2144 = vunpack.c.0.s8 %v2143
        %v2145 = vlaneseq
        %v2146 = vshrl.u32 %v2145, 7
        %v2147 = vsub.s32 %v2144, %v2146
        %v2148 = vrot.slane %v2013, %v2147
        %v2150 = vunpack.c.l.s4 1983009808
        %v2151 = vunpack.c.0.s8 %v2150
        %v2152 = vlaneseq
        %v2153 = vshrl.u32 %v2152, 7
        %v2154 = vsub.s32 %v2151, %v2153
        %v2155 = vrot.slane %v2014, %v2154
        %v2157 = vunpack.c.l.s4 1983009808
        %v2158 = vunpack.c.0.s8 %v2157
        %v2159 = vlaneseq
        %v2160 = vshrl.u32 %v2159, 7
        %v2161 = vsub.s32 %v2158, %v2160
        %v2162 = vrot.slane %v2015, %v2161
        %v2164 = vunpack.c.l.s4 1983009808
        %v2165 = vunpack.c.0.s8 %v2164
        %v2166 = vlaneseq
        %v2167 = vshrl.u32 %v2166, 7
        %v2168 = vsub.s32 %v2165, %v2167
        %v2169 = vrot.slane %v2016, %v2168
        %v2171 = vunpack.c.l.s4 1983009808
        %v2172 = vunpack.c.0.s8 %v2171
        %v2173 = vlaneseq
        %v2174 = vshrl.u32 %v2173, 7
        %v2175 = vsub.s32 %v2172, %v2174
        %v2176 = vrot.slane %v2017, %v2175
        %v2177 = vunpack.c.l.b16 %v2127
        %v2178 = vunpack.c.l.b16 %v2134
        %v2179 = vunpack.c.l.b16 %v2141
        %v2180 = vunpack.c.l.b16 %v2148
        %v2181 = vunpack.c.l.b16 %v2155
        %v2182 = vunpack.c.l.b16 %v2162
        %v2183 = vunpack.c.l.b16 %v2169
        %v2184 = vunpack.c.l.b16 %v2176
        %v2185 = vrot.slane %v2177, 3
        %v2186 = vrot.slane %v2178, 2
        %v2187 = vsel %vm521, %v2186, %v2185
        %v2188 = vrot.slane %v2179, 1
        %v2189 = vsel %vm524, %v2188, %v2187
        %v2190 = vsel %vm527, %v2180, %v2189
        %v2191 = vrot.slane %v2181, 7
        %v2192 = vsel %vm530, %v2191, %v2190
        %v2193 = vrot.slane %v2182, 6
        %v2194 = vsel %vm533, %v2193, %v2192
        %v2195 = vrot.slane %v2183, 5
        %v2196 = vsel %vm536, %v2195, %v2194
        %v2197 = vrot.slane %v2184, 4
        %v2198 = vsel %vm539, %v2197, %v2196
        %v2199 = vpack.c.b16 %v2198, %v2198
        %v2201 = vsel %vm629, %v2112, 0
        %v2204 = vsel %vm629, %v2199, 0
        %2206 = vmatprep.subr.bf16.mxu0 0
        %2207 = vmatpush1.bf16.xpose.msra.mxu0 %v2204
        %2208 = vmatprep.subr.bf16.mxu0 0
        %2209 = vmatpush1.bf16.xpose.msra.mxu0 0
        %2210 = vmatprep.subr.bf16.mxu0 0
        %2211 = vmatpush1.bf16.xpose.msra.mxu0 0
        %2212 = vmatprep.subr.bf16.mxu0 0
        %2213 = vmatpush1.bf16.xpose.msra.mxu0 0
        %2214 = vmatprep.subr.bf16.mxu0 0
        %2215 = vmatpush1.bf16.xpose.msra.mxu0 0
        %2216 = vmatprep.subr.bf16.mxu0 0
        %2217 = vmatpush1.bf16.xpose.msra.mxu0 0
        %2218 = vmatprep.subr.bf16.mxu0 0
        %2219 = vmatpush1.bf16.xpose.msra.mxu0 0
        %2220 = vmatprep.subr.bf16.mxu0 0
        %2221 = vmatpush1.bf16.xpose.msra.mxu0 0
        %2222 = vmatprep.subr.bf16.mxu0 0
        %2223 = vmatpush1.bf16.xpose.msra.mxu0 0
        %2224 = vmatprep.subr.bf16.mxu0 0
        %2225 = vmatpush1.bf16.xpose.msra.mxu0 0
        %2226 = vmatprep.subr.bf16.mxu0 0
        %2227 = vmatpush1.bf16.xpose.msra.mxu0 0
        %2228 = vmatprep.subr.bf16.mxu0 0
        %2229 = vmatpush1.bf16.xpose.msra.mxu0 0
        %2230 = vmatprep.subr.bf16.mxu0 0
        %2231 = vmatpush1.bf16.xpose.msra.mxu0 0
        %2232 = vmatprep.subr.bf16.mxu0 0
        %2233 = vmatpush1.bf16.xpose.msra.mxu0 0
        %2234 = vmatprep.subr.bf16.mxu0 0
        %2235 = vmatpush1.bf16.xpose.msra.mxu0 0
        %2236 = vmatprep.subr.bf16.mxu0 0
        %2237 = vmatpush1.bf16.xpose.msra.mxu0 0
        %2238 = vmatprep.mubr.bf16.mxu0 0
        %2239 = vmatmul.mubr.bf16.gmra.mrb[0].mxu0 %v2201
        %v2240 = vpop.f32.mrb[0].mxu0
        %v2241 = vadd.f32 0.0, %v2240
        %v2242 = vpop.f32.mrb[0].mxu0
        %v2243 = vpop.f32.mrb[0].mxu0
        %v2244 = vpop.f32.mrb[0].mxu0
        %2245 = vdwg.mxu0
        %v2246 = vmul.f32 %v2241, 0.25
        %v2247 = vsel %vm677, %v2246, -inf
        %2248 = vmax.xlane.f32.xlu0 %v2247
        %v2249 = vpop.xlane.xlu0 %2248
        %v2250 = vsub.f32 %v2246, %v2249
        %v2251 = vmul.f32 %v2250, 1.442695
        %v2252 = vpow.pop %v2251
        %v2253 = vsel %vm677, %v2252, 0.0
        %2254 = vadd.xlane.f32.xlu0 %v2253
        %v2255 = vpop.xlane.xlu0 %2254
        %v2256 = vrcp.pop %v2255
        %v2257 = vmul.f32 %v2252, %v2256
        %v2258 = vpack.c.bf16 %v2257, %v2257
        %v2268 = vunpack.c.l.s4 1983009808
        %v2269 = vunpack.c.0.s8 %v2268
        %v2270 = vlaneseq
        %v2271 = vshrl.u32 %v2270, 7
        %v2272 = vsub.s32 %v2269, %v2271
        %v2273 = vrot.slane %v2018, %v2272
        %v2275 = vunpack.c.l.s4 1983009808
        %v2276 = vunpack.c.0.s8 %v2275
        %v2277 = vlaneseq
        %v2278 = vshrl.u32 %v2277, 7
        %v2279 = vsub.s32 %v2276, %v2278
        %v2280 = vrot.slane %v2019, %v2279
        %v2282 = vunpack.c.l.s4 1983009808
        %v2283 = vunpack.c.0.s8 %v2282
        %v2284 = vlaneseq
        %v2285 = vshrl.u32 %v2284, 7
        %v2286 = vsub.s32 %v2283, %v2285
        %v2287 = vrot.slane %v2020, %v2286
        %v2289 = vunpack.c.l.s4 1983009808
        %v2290 = vunpack.c.0.s8 %v2289
        %v2291 = vlaneseq
        %v2292 = vshrl.u32 %v2291, 7
        %v2293 = vsub.s32 %v2290, %v2292
        %v2294 = vrot.slane %v2021, %v2293
        %v2296 = vunpack.c.l.s4 1983009808
        %v2297 = vunpack.c.0.s8 %v2296
        %v2298 = vlaneseq
        %v2299 = vshrl.u32 %v2298, 7
        %v2300 = vsub.s32 %v2297, %v2299
        %v2301 = vrot.slane %v2022, %v2300
        %v2303 = vunpack.c.l.s4 1983009808
        %v2304 = vunpack.c.0.s8 %v2303
        %v2305 = vlaneseq
        %v2306 = vshrl.u32 %v2305, 7
        %v2307 = vsub.s32 %v2304, %v2306
        %v2308 = vrot.slane %v2023, %v2307
        %v2310 = vunpack.c.l.s4 1983009808
        %v2311 = vunpack.c.0.s8 %v2310
        %v2312 = vlaneseq
        %v2313 = vshrl.u32 %v2312, 7
        %v2314 = vsub.s32 %v2311, %v2313
        %v2315 = vrot.slane %v2024, %v2314
        %v2317 = vunpack.c.l.s4 1983009808
        %v2318 = vunpack.c.0.s8 %v2317
        %v2319 = vlaneseq
        %v2320 = vshrl.u32 %v2319, 7
        %v2321 = vsub.s32 %v2318, %v2320
        %v2322 = vrot.slane %v2025, %v2321
        %v2323 = vunpack.c.l.b16 %v2273
        %v2324 = vunpack.c.l.b16 %v2280
        %v2325 = vunpack.c.l.b16 %v2287
        %v2326 = vunpack.c.l.b16 %v2294
        %v2327 = vunpack.c.l.b16 %v2301
        %v2328 = vunpack.c.l.b16 %v2308
        %v2329 = vunpack.c.l.b16 %v2315
        %v2330 = vunpack.c.l.b16 %v2322
        %v2331 = vrot.slane %v2323, 3
        %v2332 = vrot.slane %v2324, 2
        %v2333 = vsel %vm521, %v2332, %v2331
        %v2334 = vrot.slane %v2325, 1
        %v2335 = vsel %vm524, %v2334, %v2333
        %v2336 = vsel %vm527, %v2326, %v2335
        %v2337 = vrot.slane %v2327, 7
        %v2338 = vsel %vm530, %v2337, %v2336
        %v2339 = vrot.slane %v2328, 6
        %v2340 = vsel %vm533, %v2339, %v2338
        %v2341 = vrot.slane %v2329, 5
        %v2342 = vsel %vm536, %v2341, %v2340
        %v2343 = vrot.slane %v2330, 4
        %v2344 = vsel %vm539, %v2343, %v2342
        %v2345 = vpack.c.b16 %v2344, %v2344
        %v2347 = vsel %vm677, %v2258, 0
        %v2350 = vsel %vm780, %v2345, 0
        %2352 = vmatprep.subr.bf16.mxu0 0
        %2353 = vmatpush1.bf16.msra.mxu0 %v2350
        %2354 = vmatprep.subr.bf16.mxu0 0
        %2355 = vmatpush1.bf16.msra.mxu0 0
        %2356 = vmatprep.subr.bf16.mxu0 0
        %2357 = vmatpush1.bf16.msra.mxu0 0
        %2358 = vmatprep.subr.bf16.mxu0 0
        %2359 = vmatpush1.bf16.msra.mxu0 0
        %2360 = vmatprep.subr.bf16.mxu0 0
        %2361 = vmatpush1.bf16.msra.mxu0 0
        %2362 = vmatprep.subr.bf16.mxu0 0
        %2363 = vmatpush1.bf16.msra.mxu0 0
        %2364 = vmatprep.subr.bf16.mxu0 0
        %2365 = vmatpush1.bf16.msra.mxu0 0
        %2366 = vmatprep.subr.bf16.mxu0 0
        %2367 = vmatpush1.bf16.msra.mxu0 0
        %2368 = vmatprep.subr.bf16.mxu0 0
        %2369 = vmatpush1.bf16.msra.mxu0 0
        %2370 = vmatprep.subr.bf16.mxu0 0
        %2371 = vmatpush1.bf16.msra.mxu0 0
        %2372 = vmatprep.subr.bf16.mxu0 0
        %2373 = vmatpush1.bf16.msra.mxu0 0
        %2374 = vmatprep.subr.bf16.mxu0 0
        %2375 = vmatpush1.bf16.msra.mxu0 0
        %2376 = vmatprep.subr.bf16.mxu0 0
        %2377 = vmatpush1.bf16.msra.mxu0 0
        %2378 = vmatprep.subr.bf16.mxu0 0
        %2379 = vmatpush1.bf16.msra.mxu0 0
        %2380 = vmatprep.subr.bf16.mxu0 0
        %2381 = vmatpush1.bf16.msra.mxu0 0
        %2382 = vmatprep.subr.bf16.mxu0 0
        %2383 = vmatpush1.bf16.msra.mxu0 0
        %2384 = vmatprep.mubr.bf16.mxu0 0
        %2385 = vmatmul.mubr.bf16.gmra.mrb[0].mxu0 %v2347
        %v2386 = vpop.f32.mrb[0].mxu0
        %v2387 = vadd.f32 0.0, %v2386
        %v2388 = vpop.f32.mrb[0].mxu0
        %v2389 = vpop.f32.mrb[0].mxu0
        %v2390 = vpop.f32.mrb[0].mxu0
        %2391 = vdwg.mxu0
        %v2392 = vpack.c.bf16 %v2387, %v2387
        %v2395 = vunpack.c.l.s4 1966171168
        %v2396 = vunpack.c.0.s8 %v2395
        %v2397 = vlaneseq
        %v2398 = vshrl.u32 %v2397, 7
        %v2399 = vsub.s32 %v2396, %v2398
        %v2400 = vrot.slane %v2392, %v2399
        %v2401 = vcombine.high %v2400, %v2400
        %v2403 = vunpack.c.l.s4 1966171168
        %v2404 = vunpack.c.0.s8 %v2403
        %v2405 = vlaneseq
        %v2406 = vshrl.u32 %v2405, 7
        %v2407 = vsub.s32 %v2404, %v2406
        %v2408 = vrot.slane %v2400, %v2407
        %v2410 = vunpack.c.l.s4 1966171168
        %v2411 = vunpack.c.0.s8 %v2410
        %v2412 = vlaneseq
        %v2413 = vshrl.u32 %v2412, 7
        %v2414 = vsub.s32 %v2411, %v2413
        %v2415 = vrot.slane %v2401, %v2414
        %v2416 = vcombine.high %v2408, %v2408
        %v2417 = vcombine.high %v2415, %v2415
        %v2418 = vunpack.i.l.s16 %v2408
        %v2419 = vunpack.i.h.s16 %v2408
        %v2420 = vunpack.i.l.s16 %v2415
        %v2421 = vunpack.i.h.s16 %v2415
        %v2422 = vunpack.i.l.s16 %v2416
        %v2423 = vunpack.i.h.s16 %v2416
        %v2424 = vunpack.i.l.s16 %v2417
        %v2425 = vunpack.i.h.s16 %v2417
        %v2426 = vpack.i.b16 %v2418, %v2418
        %v2427 = vpack.i.b16 %v2419, %v2419
        %v2428 = vpack.i.b16 %v2420, %v2420
        %v2429 = vpack.i.b16 %v2421, %v2421
        %v2430 = vpack.i.b16 %v2422, %v2422
        %v2431 = vpack.i.b16 %v2423, %v2423
        %v2432 = vpack.i.b16 %v2424, %v2424
        %v2433 = vpack.i.b16 %v2425, %v2425
        %v2435 = vunpack.c.l.s4 857870592
        %v2436 = vunpack.c.0.s8 %v2435
        %v2437 = vlaneseq
        %v2438 = vshrl.u32 %v2437, 7
        %v2439 = vsub.s32 %v2436, %v2438
        %v2440 = vrot.slane %v2426, %v2439
        %v2442 = vunpack.c.l.s4 857870592
        %v2443 = vunpack.c.0.s8 %v2442
        %v2444 = vlaneseq
        %v2445 = vshrl.u32 %v2444, 7
        %v2446 = vsub.s32 %v2443, %v2445
        %v2447 = vrot.slane %v2427, %v2446
        %v2449 = vunpack.c.l.s4 857870592
        %v2450 = vunpack.c.0.s8 %v2449
        %v2451 = vlaneseq
        %v2452 = vshrl.u32 %v2451, 7
        %v2453 = vsub.s32 %v2450, %v2452
        %v2454 = vrot.slane %v2428, %v2453
        %v2456 = vunpack.c.l.s4 857870592
        %v2457 = vunpack.c.0.s8 %v2456
        %v2458 = vlaneseq
        %v2459 = vshrl.u32 %v2458, 7
        %v2460 = vsub.s32 %v2457, %v2459
        %v2461 = vrot.slane %v2429, %v2460
        %v2463 = vunpack.c.l.s4 857870592
        %v2464 = vunpack.c.0.s8 %v2463
        %v2465 = vlaneseq
        %v2466 = vshrl.u32 %v2465, 7
        %v2467 = vsub.s32 %v2464, %v2466
        %v2468 = vrot.slane %v2430, %v2467
        %v2470 = vunpack.c.l.s4 857870592
        %v2471 = vunpack.c.0.s8 %v2470
        %v2472 = vlaneseq
        %v2473 = vshrl.u32 %v2472, 7
        %v2474 = vsub.s32 %v2471, %v2473
        %v2475 = vrot.slane %v2431, %v2474
        %v2477 = vunpack.c.l.s4 857870592
        %v2478 = vunpack.c.0.s8 %v2477
        %v2479 = vlaneseq
        %v2480 = vshrl.u32 %v2479, 7
        %v2481 = vsub.s32 %v2478, %v2480
        %v2482 = vrot.slane %v2432, %v2481
        %v2484 = vunpack.c.l.s4 857870592
        %v2485 = vunpack.c.0.s8 %v2484
        %v2486 = vlaneseq
        %v2487 = vshrl.u32 %v2486, 7
        %v2488 = vsub.s32 %v2485, %v2487
        %v2489 = vrot.slane %v2433, %v2488
        %vm2498 = vsmask.f32 7942
        %vm2499 = vmand %vm1975, %vm2498
        %v2500 = vld [vmem:[%s422] sm:$0x2]
        %v2501 = vsel %vm2499, %v2440, %v2500
        %2502 = vst [vmem:[%s422] sm:$0x2] %v2501
        %v2503 = vld [vmem:[%s422 + $0x2] sm:$0x2]
        %v2504 = vsel %vm2499, %v2447, %v2503
        %2505 = vst [vmem:[%s422 + $0x2] sm:$0x2] %v2504
        %v2506 = vld [vmem:[%s422 + $0x4] sm:$0x2]
        %v2507 = vsel %vm2499, %v2454, %v2506
        %2508 = vst [vmem:[%s422 + $0x4] sm:$0x2] %v2507
        %v2509 = vld [vmem:[%s422 + $0x6] sm:$0x2]
        %v2510 = vsel %vm2499, %v2461, %v2509
        %2511 = vst [vmem:[%s422 + $0x6] sm:$0x2] %v2510
        %v2512 = vld [vmem:[%s422 + $0x8] sm:$0x2]
        %v2513 = vsel %vm2499, %v2468, %v2512
        %2514 = vst [vmem:[%s422 + $0x8] sm:$0x2] %v2513
        %v2515 = vld [vmem:[%s422 + $0xa] sm:$0x2]
        %v2516 = vsel %vm2499, %v2475, %v2515
        %2517 = vst [vmem:[%s422 + $0xa] sm:$0x2] %v2516
        %v2518 = vld [vmem:[%s422 + $0xc] sm:$0x2]
        %v2519 = vsel %vm2499, %v2482, %v2518
        %2520 = vst [vmem:[%s422 + $0xc] sm:$0x2] %v2519
        %v2521 = vld [vmem:[%s422 + $0xe] sm:$0x2]
        %v2522 = vsel %vm2499, %v2489, %v2521
        %2523 = vst [vmem:[%s422 + $0xe] sm:$0x2] %v2522
        %p2524 = scmp.lt.s32.totalorder %s14, 1
        %s2525 = scalar_select %p2524, %s14, 1
        %s2526 = smul.addr %s2525, 8
        %s2527 = smul.addr %s2526, 2
        %s2528 = scalar_lea.vmem %s3, %s2527
        // Predicated region
        $region156: #{ast_forward.14} parent=142 // pred_check
          %p2529 = pneg %p110
        $region157: #{ast_forward.14} parent=142 // pred_check_branch
          %2531 = sbr.rel (%p2529) target = $region159
        $region158: #{ast_forward.14} parent=142 // pred_region
          _
        $region159: #{ast_forward.14} parent=142 // pred_fallthru
          _
      $region143: #{ast_forward.14} parent=5 // pred_fallthru
        _
      %p2532 = scmp.le.s32.totalorder 2, %s9
      // Predicated region
      $region160: #{ast_forward.14} parent=5 // pred_check
        %p2533 = pneg %p2532
      $region161: #{ast_forward.14} parent=5 // pred_check_branch
        %2535 = sbr.rel (%p2533) target = $region163
      $region162: #{ast_forward.14} parent=5 // pred_region
        %s2536 = ssub.s32 %s9, 2
        // Predicated region
        $region164: #{ast_forward.14} parent=162 // pred_check
          %p2537 = pneg %p116
        $region165: #{ast_forward.14} parent=162 // pred_check_branch
          %2539 = sbr.rel (%p2537) target = $region167
        $region166: #{ast_forward.14} parent=162 // pred_region
          %p2540 = scmp.lt.s32.totalorder %s15, 1
          %s2541 = scalar_select %p2540, %s15, 1
          %s2542 = smul.addr %s2541, 8
          %s2543 = smul.addr %s2542, 2
          %s2544 = scalar_lea.vmem %s3, %s2543
        $region167: #{ast_forward.14} parent=162 // pred_fallthru
          _
      $region163: #{ast_forward.14} parent=5 // pred_fallthru
        _
    $region6: #{ast_forward.14} parent=1 // loop_footer
      %s13 = sadd.s32 1, %s9
    $region7: #{ast_forward.14} parent=1 // loop_footer_branch
      %8 = sbr.rel target = $region3
    $region8: #{ast_forward.14} parent=1 // loop_exit
      _

// kernel: ast_forward.16
$region0: #{ast_forward.16}
  #allocation0 [shape = 'u32[]', space=smem, size = 0x4, offset = 0x4, fixed_abs, tag = 'smem constant byte address 0x4 - core index']
  #allocation1 [shape = 'u32[144,128]{1,0:T(1,128)}', space=vmem, size = 0x12000, scoped, tag = 'internal scratch']
  %s0 = inlined_call_operand.vmem [shape: f32[16,64], index: 0, kind: input, shape index: {}]
  %s1 = inlined_call_operand.vmem [shape: f32[1,64], index: 1, kind: input, shape index: {}]
  %s2 = inlined_call_operand.vmem [shape: f32[1,64], index: 2, kind: input, shape index: {}]
  %s3 = inlined_call_operand.vmem [shape: bf16[64,256], index: 3, kind: input, shape index: {}]
  %s4 = inlined_call_operand.vmem [shape: f32[1,256], index: 4, kind: input, shape index: {}]
  %s5 = inlined_call_operand.vmem [shape: bf16[16,256], index: 5, kind: output, shape index: {}]
  %s6 = sld [smem:[#allocation0]]
  $region30: #{ast_forward.16} parent=0
    _
  %s8 = ssub.s32 1, %s6
  %s9 = scalar_select 0, %s8, %s6
  // Predicated region
  $region2: #{ast_forward.16} parent=0 // pred_check
    _
  $region3: #{ast_forward.16} parent=0 // pred_check_branch
    %11 = sbr.rel (0) target = $region5
  $region4: #{ast_forward.16} parent=0 // pred_region
    _
  $region5: #{ast_forward.16} parent=0 // pred_fallthru
    _
  // Predicated region
  $region6: #{ast_forward.16} parent=0 // pred_check
    _
  $region7: #{ast_forward.16} parent=0 // pred_check_branch
    %13 = sbr.rel (0) target = $region9
  $region8: #{ast_forward.16} parent=0 // pred_region
    _
  $region9: #{ast_forward.16} parent=0 // pred_fallthru
    _
  // Predicated region
  $region10: #{ast_forward.16} parent=0 // pred_check
    _
  $region11: #{ast_forward.16} parent=0 // pred_check_branch
    %15 = sbr.rel (0) target = $region13
  $region12: #{ast_forward.16} parent=0 // pred_region
    _
  $region13: #{ast_forward.16} parent=0 // pred_fallthru
    _
  // Predicated region
  $region14: #{ast_forward.16} parent=0 // pred_check
    _
  $region15: #{ast_forward.16} parent=0 // pred_check_branch
    %17 = sbr.rel (0) target = $region17
  $region16: #{ast_forward.16} parent=0 // pred_region
    _
  $region17: #{ast_forward.16} parent=0 // pred_fallthru
    _
  // Predicated region
  $region18: #{ast_forward.16} parent=0 // pred_check
    _
  $region19: #{ast_forward.16} parent=0 // pred_check_branch
    %19 = sbr.rel (0) target = $region21
  $region20: #{ast_forward.16} parent=0 // pred_region
    _
  $region21: #{ast_forward.16} parent=0 // pred_fallthru
    _
  %v21 = vld [vmem:[%s0] sm:$0xff]
  %v22 = vld [vmem:[%s0 + $0x8] sm:$0xff]
  %vm23 = vcmask 523264
  %v24 = vsel %vm23, %v21, 0.0
  %25 = vadd.xlane.f32.xlu0 %v24
  %v26 = vpop.xlane.xlu0 %25
  %v27 = vsel %vm23, %v22, 0.0
  %28 = vadd.xlane.f32.xlu0 %v27
  %v29 = vpop.xlane.xlu0 %28
  %v30 = vrcp.pop 64.0
  %v31 = vmul.f32 %v26, %v30
  %v32 = vmul.f32 %v29, %v30
  %v33 = vsub.f32 %v21, %v31
  %v34 = vsub.f32 %v22, %v32
  %v35 = vmul.f32 %v33, %v33
  %v36 = vmul.f32 %v34, %v34
  %v37 = vsel %vm23, %v35, 0.0
  %38 = vadd.xlane.f32.xlu0 %v37
  %v39 = vpop.xlane.xlu0 %38
  %v40 = vsel %vm23, %v36, 0.0
  %41 = vadd.xlane.f32.xlu0 %v40
  %v42 = vpop.xlane.xlu0 %41
  %v43 = vmul.f32 %v39, %v30
  %v44 = vmul.f32 %v42, %v30
  %v45 = vadd.f32 %v43, 1e-06
  %v46 = vadd.f32 %v44, 1e-06
  %v47 = vrsqrt.pop %v45
  %v48 = vrsqrt.pop %v46
  %v49 = vmul.f32 %v33, %v47
  %v50 = vmul.f32 %v34, %v48
  %v51 = vld [vmem:[%s1] sm:$0x1]
  %v53 = vlaneseq
  %v54 = vshrl.u32 %v53, 7
  %v55 = vsub.s32 0, %v54
  %v56 = vrot.slane %v51, %v55
  %v58 = vmul.f32 %v49, %v56
  %v59 = vmul.f32 %v50, %v56
  %v60 = vld [vmem:[%s2] sm:$0x1]
  %v62 = vlaneseq
  %v63 = vshrl.u32 %v62, 7
  %v64 = vsub.s32 0, %v63
  %v65 = vrot.slane %v60, %v64
  %v67 = vadd.f32 %v58, %v65
  %v68 = vadd.f32 %v59, %v65
  %v69 = vpack.c.bf16 %v68, %v67
  %v70 = vld [vmem:[%s3] sm:$0xff]
  %v71 = vld [vmem:[%s3 + $0x8] sm:$0xff]
  %v72 = vld [vmem:[%s3 + $0x10] sm:$0xff]
  %v73 = vld [vmem:[%s3 + $0x18] sm:$0xff]
  %v74 = vld [vmem:[%s3 + $0x20] sm:$0xff]
  %v75 = vld [vmem:[%s3 + $0x28] sm:$0xff]
  %v76 = vld [vmem:[%s3 + $0x30] sm:$0xff]
  %v77 = vld [vmem:[%s3 + $0x38] sm:$0xff]
  %v78 = vld [vmem:[%s4] sm:$0x3]
  %v80 = vlaneseq
  %v81 = vshrl.u32 %v80, 7
  %v82 = vsub.s32 0, %v81
  %v83 = vrot.slane %v78, %v82
  %v84 = vlaneseq
  %v85 = vshrl.u32 %v84, 7
  %v86 = vsub.s32 1, %v85
  %v87 = vrot.slane %v78, %v86
  %v98 = vunpack.c.l.b16 %v70
  %v99 = vunpack.c.h.b16 %v70
  %v100 = vunpack.c.l.b16 %v71
  %v101 = vunpack.c.h.b16 %v71
  %v102 = vunpack.c.l.b16 %v72
  %v103 = vunpack.c.h.b16 %v72
  %v104 = vunpack.c.l.b16 %v73
  %v105 = vunpack.c.h.b16 %v73
  %v106 = vunpack.c.l.b16 %v74
  %v107 = vunpack.c.h.b16 %v74
  %v108 = vunpack.c.l.b16 %v75
  %v109 = vunpack.c.h.b16 %v75
  %v110 = vunpack.c.l.b16 %v76
  %v111 = vunpack.c.h.b16 %v76
  %v112 = vunpack.c.l.b16 %v77
  %v113 = vunpack.c.h.b16 %v77
  %v114 = vpack.c.b16 %v100, %v98
  %v115 = vpack.c.b16 %v101, %v99
  %v116 = vpack.c.b16 %v104, %v102
  %v117 = vpack.c.b16 %v105, %v103
  %v118 = vpack.c.b16 %v108, %v106
  %v119 = vpack.c.b16 %v109, %v107
  %v120 = vpack.c.b16 %v112, %v110
  %v121 = vpack.c.b16 %v113, %v111
  %v131 = vsel %vm23, %v69, 0
  %133 = vmatprep.subr.bf16.mxu0 %v115
  %134 = vmatpush1.bf16.msra.mxu0 %v114
  %135 = vmatprep.subr.bf16.mxu0 %v117
  %136 = vmatpush1.bf16.msra.mxu0 %v116
  %137 = vmatprep.subr.bf16.mxu0 %v119
  %138 = vmatpush1.bf16.msra.mxu0 %v118
  %139 = vmatprep.subr.bf16.mxu0 %v121
  %140 = vmatpush1.bf16.msra.mxu0 %v120
  %141 = vmatprep.subr.bf16.mxu0 0
  %142 = vmatpush1.bf16.msra.mxu0 0
  %143 = vmatprep.subr.bf16.mxu0 0
  %144 = vmatpush1.bf16.msra.mxu0 0
  %145 = vmatprep.subr.bf16.mxu0 0
  %146 = vmatpush1.bf16.msra.mxu0 0
  %147 = vmatprep.subr.bf16.mxu0 0
  %148 = vmatpush1.bf16.msra.mxu0 0
  %149 = vmatprep.subr.bf16.mxu0 0
  %150 = vmatpush1.bf16.msra.mxu0 0
  %151 = vmatprep.subr.bf16.mxu0 0
  %152 = vmatpush1.bf16.msra.mxu0 0
  %153 = vmatprep.subr.bf16.mxu0 0
  %154 = vmatpush1.bf16.msra.mxu0 0
  %155 = vmatprep.subr.bf16.mxu0 0
  %156 = vmatpush1.bf16.msra.mxu0 0
  %157 = vmatprep.subr.bf16.mxu0 0
  %158 = vmatpush1.bf16.msra.mxu0 0
  %159 = vmatprep.subr.bf16.mxu0 0
  %160 = vmatpush1.bf16.msra.mxu0 0
  %161 = vmatprep.subr.bf16.mxu0 0
  %162 = vmatpush1.bf16.msra.mxu0 0
  %163 = vmatprep.subr.bf16.mxu0 0
  %164 = vmatpush1.bf16.msra.mxu0 0
  %165 = vmatprep.mubr.bf16.mxu0 0
  %166 = vmatmul.mubr.bf16.gmra.mrb[0].mxu0 %v131
  %v167 = vpop.f32.mrb[0].mxu0
  %v168 = vadd.f32 %v83, %v167
  %v169 = vpop.f32.mrb[0].mxu0
  %v170 = vadd.f32 %v87, %v169
  %v171 = vpop.f32.mrb[0].mxu0
  %v172 = vadd.f32 %v83, %v171
  %v173 = vpop.f32.mrb[0].mxu0
  %v174 = vadd.f32 %v87, %v173
  %175 = vdwg.mxu0
  %v176 = vmul.f32 %v168, %v168
  %v177 = vmul.f32 %v170, %v170
  %v178 = vmul.f32 %v172, %v172
  %v179 = vmul.f32 %v174, %v174
  %v180 = vmul.f32 %v168, %v176
  %v181 = vmul.f32 %v170, %v177
  %v182 = vmul.f32 %v172, %v178
  %v183 = vmul.f32 %v174, %v179
  %v184 = vmul.f32 %v180, 0.044715
  %v185 = vmul.f32 %v181, 0.044715
  %v186 = vmul.f32 %v182, 0.044715
  %v187 = vmul.f32 %v183, 0.044715
  %v188 = vadd.f32 %v168, %v184
  %v189 = vadd.f32 %v170, %v185
  %v190 = vadd.f32 %v172, %v186
  %v191 = vadd.f32 %v174, %v187
  %v192 = vmul.f32 %v188, 0.7978846
  %v193 = vmul.f32 %v189, 0.7978846
  %v194 = vmul.f32 %v190, 0.7978846
  %v195 = vmul.f32 %v191, 0.7978846
  %v196 = vtanh.pop %v192
  %v197 = vtanh.pop %v193
  %v198 = vtanh.pop %v194
  %v199 = vtanh.pop %v195
  %v200 = vadd.f32 %v196, 1.0
  %v201 = vadd.f32 %v197, 1.0
  %v202 = vadd.f32 %v198, 1.0
  %v203 = vadd.f32 %v199, 1.0
  %v204 = vmul.f32 %v200, 0.5
  %v205 = vmul.f32 %v201, 0.5
  %v206 = vmul.f32 %v202, 0.5
  %v207 = vmul.f32 %v203, 0.5
  %v208 = vmul.f32 %v168, %v204
  %v209 = vmul.f32 %v170, %v205
  %v210 = vmul.f32 %v172, %v206
  %v211 = vmul.f32 %v174, %v207
  %v212 = vpack.c.bf16 %v210, %v208
  %v213 = vpack.c.bf16 %v211, %v209
  %v216 = vunpack.c.l.b16 %v212
  %v217 = vunpack.c.l.b16 %v213
  %v218 = vunpack.c.h.b16 %v212
  %v219 = vunpack.c.h.b16 %v213
  %v220 = vpack.c.b16 %v217, %v216
  %v221 = vpack.c.b16 %v219, %v218
  %224 = vst [vmem:[%s5] sm:$0xff] %v220
  %225 = vst [vmem:[%s5 + $0x8] sm:$0xff] %v221
  // Predicated region
  $region22: #{ast_forward.16} parent=0 // pred_check
    _
  $region23: #{ast_forward.16} parent=0 // pred_check_branch
    %227 = sbr.rel (0) target = $region25
  $region24: #{ast_forward.16} parent=0 // pred_region
    _
  $region25: #{ast_forward.16} parent=0 // pred_fallthru
    _
  // Predicated region
  $region26: #{ast_forward.16} parent=0 // pred_check
    _
  $region27: #{ast_forward.16} parent=0 // pred_check_branch
    %229 = sbr.rel (0) target = $region29
  $region28: #{ast_forward.16} parent=0 // pred_region
    _
  $region29: #{ast_forward.16} parent=0 // pred_fallthru
    _

</llo_original>
